<compile_context>
chip_gen: v7x
topology: tpu7x:2x2x1
jax: 0.10.0
libtpu: 0.0.40
codegen_flags: <defaults>
</compile_context>

<pallas_src>
import functools

import jax
import jax.numpy as jnp
from jax.experimental import pallas as pl
from jax.experimental.pallas import tpu as pltpu

_LANE = 128


def _round_up(x, m):
    return (x + m - 1) // m * m


def _pad2(a, rows, cols):
    return jnp.pad(a, ((0, rows - a.shape[0]), (0, cols - a.shape[1])))


@functools.lru_cache(maxsize=None)
def _vmem_limit_bytes():
    # Generation-dependent scoped-VMEM budget: ~85% of physical VMEM, capped
    # at 112 MiB (v5e/v6e have 128 MiB per core, v7x has 64 MiB per core).
    try:
        cap = int(pltpu.get_tpu_info().vmem_capacity_bytes)
    except Exception:  # pragma: no cover - conservative fallback
        cap = 64 * 1024 * 1024
    return int(min(cap * 0.85, 112 * 1024 * 1024))


def _choose_tiles(n):
    """(tm, tk) for the streamed update kernel; tm | tk, multiples of 128.

    Large tk amortizes the per-grid-step pipeline overhead on the streamed A;
    tm <= 1024 keeps the 'parallel' row axis >= 2 blocks on the graph sizes
    that actually take this path, so v7x's two TensorCores both get work.
    """
    npad = _round_up(n, _LANE)
    if npad <= 1024:
        return npad, npad
    if npad <= 4096:
        return 512, 1024
    return 1024, 2048


def _fused_fits(n, fp, hp, cp, vmem_limit):
    np_ = _round_up(n, _LANE)
    a = np_ * np_ * 2                      # bf16 A
    io = np_ * (fp + cp) * 4               # x in + logits out
    state = 2 * np_ * hp * 4               # X / Y VMEM scratch
    tmp = 4 * np_ * hp * 4                 # xw / conv / res temporaries
    w = (fp * hp + 3 * hp * hp + hp * cp + 6 * hp + cp) * 4
    return 2 * (a + io + w) + state + tmp <= int(0.6 * vmem_limit)


def _normalized_padded_adj(adj, np_):
    """D~^{-1/2}(A+I)D~^{-1/2}, padded to (np_, np_), bf16 — single fused expr
    so XLA materializes only the final bf16 padded A (no f32 N^2 temporaries
    beyond one fusion pass over adj)."""
    n = adj.shape[0]
    deg = jnp.sum(adj, axis=0) + 1.0       # column sums of A + I
    d = jnp.where(deg > 0, jax.lax.rsqrt(deg), 0.0)
    a_norm = (adj + jnp.eye(n, dtype=adj.dtype)) * d[:, None] * d[None, :]
    return jnp.pad(a_norm, ((0, np_ - n), (0, np_ - n))).astype(jnp.bfloat16)


# ----------------------------- kernels --------------------------------------


def _encoder_kernel(n, tm, x_ref, we_ref, be_ref, y_ref):
    y = jnp.maximum(
        jnp.dot(x_ref[...], we_ref[...], preferred_element_type=jnp.float32)
        + be_ref[...], 0.0)
    rows = pl.program_id(0) * tm + jax.lax.broadcasted_iota(jnp.int32, y.shape, 0)
    # Zero padded rows so they can never feed NaN/inf back through A @ XW.
    y_ref[...] = jnp.where(rows < n, y, 0.0)


def _lin_kernel(x_ref, wc_ref, xw_ref):
    # XW = conv.lin(X); emitted bf16 for the (dominant) A @ XW aggregation.
    xw_ref[...] = jnp.dot(x_ref[...], wc_ref[...],
                          preferred_element_type=jnp.float32).astype(xw_ref.dtype)


def _update_kernel(n, tm, tk, dt, alpha, gamma,
                   a_ref, xw_ref, x_ref, y_ref, bc_ref, wr_ref, br_ref,
                   xo_ref, yo_ref, acc_ref):
    i = pl.program_id(0)
    k = pl.program_id(1)

    @pl.when(k == 0)
    def _init():
        acc_ref[...] = jnp.zeros_like(acc_ref)

    # A (bf16, (tm, tk) tile) @ XW (bf16, whole array VMEM-resident) with f32
    # accumulation on the MXU.
    koff = pl.multiple_of(k * tk, tk)
    acc_ref[...] += jnp.dot(a_ref[...], xw_ref[pl.ds(koff, tk), :],
                            preferred_element_type=jnp.float32)

    @pl.when(k == pl.num_programs(1) - 1)
    def _finalize():
        x = x_ref[...]
        y = y_ref[...]
        ioff = pl.multiple_of(i * tm, tm)
        # Residual fused here (no R HBM round-trip): -(XW_i @ W_res + b_res).
        xw_i = xw_ref[pl.ds(ioff, tm), :].astype(jnp.float32)
        res = -(jnp.dot(xw_i, wr_ref[...], preferred_element_type=jnp.float32)
                + br_ref[...])
        conv = acc_ref[...] + bc_ref[...]           # GCNConv bias after aggregation
        inner = jnp.maximum(conv + res, 0.0)        # act_fn(conv + residual)
        y_new = y + dt * (inner - alpha * y - gamma * x)
        x_new = x + dt * y_new
        rows = ioff + jax.lax.broadcasted_iota(jnp.int32, x_new.shape, 0)
        keep = rows < n                              # padded-row guard
        yo_ref[...] = jnp.where(keep, y_new, 0.0)
        xo_ref[...] = jnp.where(keep, x_new, 0.0)


def _decoder_kernel(x_ref, wd_ref, bd_ref, o_ref):
    o_ref[...] = (jnp.dot(x_ref[...], wd_ref[...],
                          preferred_element_type=jnp.float32) + bd_ref[...])


def _fused_kernel(n, nlayers, dt, alpha, gamma,
                  x_ref, a_ref, we_ref, be_ref, wc_ref, bc_ref,
                  wr_ref, br_ref, wd_ref, bd_ref, o_ref, x_sc, y_sc):
    # Encoder.
    y0 = jnp.maximum(
        jnp.dot(x_ref[...], we_ref[...], preferred_element_type=jnp.float32)
        + be_ref[...], 0.0)
    rows = jax.lax.broadcasted_iota(jnp.int32, y0.shape, 0)
    keep = rows < n                                   # padded-row guard (hoisted)
    y0 = jnp.where(keep, y0, 0.0)
    x_sc[...] = y0
    y_sc[...] = y0

    # nlayers GraphCON updates with A / weights / state all VMEM-resident.
    @pl.loop(0, nlayers)
    def _layer(_step):
        X = x_sc[...]
        Y = y_sc[...]
        xw = jnp.dot(X, wc_ref[...], preferred_element_type=jnp.float32)
        conv = jnp.dot(a_ref[...], xw.astype(jnp.bfloat16),
                       preferred_element_type=jnp.float32) + bc_ref[...]
        res = -(jnp.dot(xw, wr_ref[...], preferred_element_type=jnp.float32)
                + br_ref[...])
        y_new = Y + dt * (jnp.maximum(conv + res, 0.0) - alpha * Y - gamma * X)
        x_new = X + dt * y_new
        y_sc[...] = jnp.where(keep, y_new, 0.0)
        x_sc[...] = jnp.where(keep, x_new, 0.0)

    # Decoder.
    o_ref[...] = (jnp.dot(x_sc[...], wd_ref[...],
                          preferred_element_type=jnp.float32) + bd_ref[...])


# ----------------------------- forward paths --------------------------------


def _forward_fused(x, adj, params, n, fp, hp, cp, nclass,
                   nlayers, dt, alpha, gamma, vmem_limit):
    np_ = _round_up(n, _LANE)
    a_p = _normalized_padded_adj(adj, np_)
    x_p = _pad2(x, np_, fp)
    we, be = _pad2(params["w_enc"], fp, hp), _pad2(params["b_enc"], 1, hp)
    wc, bc = _pad2(params["w_conv"], hp, hp), _pad2(params["b_conv"], 1, hp)
    wr, br = _pad2(params["w_res"], hp, hp), _pad2(params["b_res"], 1, hp)
    wd, bd = _pad2(params["w_dec"], hp, cp), _pad2(params["b_dec"], 1, cp)

    def full(r, c):
        return pl.BlockSpec((r, c), lambda i: (0, 0))

    out_p = pl.pallas_call(
        functools.partial(_fused_kernel, n, nlayers, dt, alpha, gamma),
        out_shape=jax.ShapeDtypeStruct((np_, cp), jnp.float32),
        grid_spec=pltpu.PrefetchScalarGridSpec(
            num_scalar_prefetch=0, grid=(1,),
            in_specs=[full(np_, fp), full(np_, np_), full(fp, hp), full(1, hp),
                      full(hp, hp), full(1, hp), full(hp, hp), full(1, hp),
                      full(hp, cp), full(1, cp)],
            out_specs=full(np_, cp),
            scratch_shapes=[pltpu.VMEM((np_, hp), jnp.float32),   # X
                            pltpu.VMEM((np_, hp), jnp.float32)]), # Y
        compiler_params=pltpu.CompilerParams(
            dimension_semantics=("arbitrary",),
            vmem_limit_bytes=vmem_limit),
        cost_estimate=pl.CostEstimate(
            flops=(2 * np_ * fp * hp + 2 * np_ * hp * cp
                   + nlayers * (2 * np_ * np_ * hp + 4 * np_ * hp * hp
                                + 12 * np_ * hp)),
            transcendentals=0,
            bytes_accessed=(np_ * np_ * 2 + np_ * (fp + cp) * 4
                            + (fp * hp + 3 * hp * hp + hp * cp) * 4)),
    )(x_p, a_p, we, be, wc, bc, wr, br, wd, bd)
    return out_p[:n, :nclass]


def _forward_streamed(x, adj, params, n, fp, hp, cp, nclass,
                      nlayers, dt, alpha, gamma, tiles, vmem_limit):
    tm, tk = tiles if tiles is not None else _choose_tiles(n)
    np_ = _round_up(n, max(tm, tk))
    assert np_ % tm == 0 and np_ % tk == 0, (np_, tm, tk)
    row_grid, k_grid = np_ // tm, np_ // tk

    a_p = _normalized_padded_adj(adj, np_)
    x_p = _pad2(x, np_, fp)
    we, be = _pad2(params["w_enc"], fp, hp), _pad2(params["b_enc"], 1, hp)
    wc, bc = _pad2(params["w_conv"], hp, hp), _pad2(params["b_conv"], 1, hp)
    wr, br = _pad2(params["w_res"], hp, hp), _pad2(params["b_res"], 1, hp)
    wd, bd = _pad2(params["w_dec"], hp, cp), _pad2(params["b_dec"], 1, cp)

    par_1d = pltpu.CompilerParams(dimension_semantics=("parallel",),
                                  vmem_limit_bytes=vmem_limit)

    # --- encoder: Y0 = mask(ReLU(x @ W_enc + b_enc)) -------------------------
    y0 = pl.pallas_call(
        functools.partial(_encoder_kernel, n, tm),
        out_shape=jax.ShapeDtypeStruct((np_, hp), jnp.float32),
        grid_spec=pltpu.PrefetchScalarGridSpec(
            num_scalar_prefetch=0, grid=(row_grid,),
            in_specs=[pl.BlockSpec((tm, fp), lambda i: (i, 0)),
                      pl.BlockSpec((fp, hp), lambda i: (0, 0)),
                      pl.BlockSpec((1, hp), lambda i: (0, 0))],
            out_specs=pl.BlockSpec((tm, hp), lambda i: (i, 0))),
        compiler_params=par_1d,
    )(x_p, we, be)

    # --- per-layer callables --------------------------------------------------
    lin = pl.pallas_call(
        _lin_kernel,
        out_shape=jax.ShapeDtypeStruct((np_, hp), jnp.bfloat16),
        grid_spec=pltpu.PrefetchScalarGridSpec(
            num_scalar_prefetch=0, grid=(row_grid,),
            in_specs=[pl.BlockSpec((tm, hp), lambda i: (i, 0)),
                      pl.BlockSpec((hp, hp), lambda i: (0, 0))],
            out_specs=pl.BlockSpec((tm, hp), lambda i: (i, 0))),
        compiler_params=par_1d,
        cost_estimate=pl.CostEstimate(
            flops=2 * np_ * hp * hp, transcendentals=0,
            bytes_accessed=np_ * hp * 4 + hp * hp * 4 + np_ * hp * 2),
    )

    graphcon_update = pl.pallas_call(
        functools.partial(_update_kernel, n, tm, tk, dt, alpha, gamma),
        out_shape=(jax.ShapeDtypeStruct((np_, hp), jnp.float32),   # X_new
                   jax.ShapeDtypeStruct((np_, hp), jnp.float32)),  # Y_new
        grid_spec=pltpu.PrefetchScalarGridSpec(
            num_scalar_prefetch=0, grid=(row_grid, k_grid),
            in_specs=[pl.BlockSpec((tm, tk), lambda i, k: (i, k)),   # A (bf16)
                      pl.BlockSpec((np_, hp), lambda i, k: (0, 0)),  # XW resident
                      pl.BlockSpec((tm, hp), lambda i, k: (i, 0)),   # X
                      pl.BlockSpec((tm, hp), lambda i, k: (i, 0)),   # Y
                      pl.BlockSpec((1, hp), lambda i, k: (0, 0)),    # b_conv
                      pl.BlockSpec((hp, hp), lambda i, k: (0, 0)),   # W_res
                      pl.BlockSpec((1, hp), lambda i, k: (0, 0))],   # b_res
            out_specs=(pl.BlockSpec((tm, hp), lambda i, k: (i, 0)),
                       pl.BlockSpec((tm, hp), lambda i, k: (i, 0))),
            scratch_shapes=[pltpu.VMEM((tm, hp), jnp.float32)]),
        compiler_params=pltpu.CompilerParams(
            dimension_semantics=("parallel", "arbitrary"),
            vmem_limit_bytes=vmem_limit),
        cost_estimate=pl.CostEstimate(
            flops=2 * np_ * np_ * hp + 2 * np_ * hp * hp + 12 * np_ * hp,
            transcendentals=0,
            bytes_accessed=(np_ * np_ * 2 + np_ * hp * 2      # A + single XW fetch
                            + 4 * np_ * hp * 4                # X/Y in + out
                            + hp * hp * 4 + 2 * hp * 4)),
        input_output_aliases={2: 0, 3: 1},  # X -> X_new, Y -> Y_new
    )

    def layer(_, carry):
        X, Y = carry
        xw = lin(X, wc)
        X, Y = graphcon_update(a_p, xw, X, Y, bc, wr, br)
        return (X, Y)

    X, _ = jax.lax.fori_loop(0, nlayers, layer, (y0, y0))

    # --- decoder --------------------------------------------------------------
    out_p = pl.pallas_call(
        _decoder_kernel,
        out_shape=jax.ShapeDtypeStruct((np_, cp), jnp.float32),
        grid_spec=pltpu.PrefetchScalarGridSpec(
            num_scalar_prefetch=0, grid=(row_grid,),
            in_specs=[pl.BlockSpec((tm, hp), lambda i: (i, 0)),
                      pl.BlockSpec((hp, cp), lambda i: (0, 0)),
                      pl.BlockSpec((1, cp), lambda i: (0, 0))],
            out_specs=pl.BlockSpec((tm, cp), lambda i: (i, 0))),
        compiler_params=par_1d,
    )(X, wd, bd)

    return out_p[:n, :nclass]


# ----------------------------- public wrapper --------------------------------


@functools.partial(jax.jit,
                   static_argnames=("nlayers", "dt", "alpha", "gamma",
                                    "mode", "tiles"))
def graphcon_gcn_forward(x, adj, params, *, nlayers, dt=1.0, alpha=1.0,
                         gamma=1.0, mode="auto", tiles=None):
    """x: [N, nfeat] f32, adj: dense [N, N] f32 (zero diag), params: dict.

    mode:  "auto" (fused when A fits the VMEM budget, else streamed),
           "fused", or "streamed".
    tiles: optional (tm, tk) override for the streamed update kernel.
    """
    n, nfeat = x.shape
    nhid = params["w_conv"].shape[0]
    nclass = params["w_dec"].shape[1]
    fp = _round_up(nfeat, _LANE)
    hp = _round_up(nhid, _LANE)
    cp = _round_up(nclass, _LANE)
    vmem_limit = _vmem_limit_bytes()

    use_fused = (mode == "fused") or (
        mode == "auto" and _fused_fits(n, fp, hp, cp, vmem_limit))
    if use_fused:
        return _forward_fused(x, adj, params, n, fp, hp, cp, nclass,
                              nlayers, dt, alpha, gamma, vmem_limit)
    return _forward_streamed(x, adj, params, n, fp, hp, cp, nclass,
                             nlayers, dt, alpha, gamma, tiles, vmem_limit)


# ----------------------------- reference ------------------------------------


def graphcon_gcn_forward_ref(x, adj, params, nlayers, dt=1.0, alpha=1.0, gamma=1.0):
    """Plain-JAX mirror of GraphCON_GCN.forward in eval mode (res_version=1)."""
    n = adj.shape[0]
    a_tilde = adj + jnp.eye(n, dtype=adj.dtype)
    deg = jnp.sum(a_tilde, axis=0)
    d = jnp.where(deg > 0, 1.0 / jnp.sqrt(deg), 0.0)
    a_norm = a_tilde * d[:, None] * d[None, :]

    Y = jax.nn.relu(x @ params["w_enc"] + params["b_enc"])
    X = Y
    for _ in range(nlayers):
        xw = X @ params["w_conv"]
        conv = a_norm @ xw + params["b_conv"]
        res = -(xw @ params["w_res"] + params["b_res"])
        Y = Y + dt * (jax.nn.relu(conv + res) - alpha * Y - gamma * X)
        X = X + dt * Y
    return X @ params["w_dec"] + params["b_dec"]


def init_params(key, nfeat, nhid, nclass):
    """Synthetic init; weights pre-transposed to [in, out], uniform(+-1/sqrt(nhid))."""
    stdv = 1.0 / (nhid ** 0.5)
    ks = jax.random.split(key, 8)
    u = lambda k, shape: jax.random.uniform(
        k, shape, dtype=jnp.float32, minval=-stdv, maxval=stdv)
    return {
        "w_enc": u(ks[0], (nfeat, nhid)), "b_enc": u(ks[1], (1, nhid)),
        "w_conv": u(ks[2], (nhid, nhid)), "b_conv": u(ks[3], (1, nhid)),
        "w_res": u(ks[4], (nhid, nhid)), "b_res": u(ks[5], (1, nhid)),
        "w_dec": u(ks[6], (nhid, nclass)), "b_dec": u(ks[7], (1, nclass)),
    }


if __name__ == "__main__":
    N, NFEAT, NHID, NCLASS, NLAYERS = 512, 96, 64, 7, 3
    DT, ALPHA, GAMMA = 1.0, 1.0, 1.0

    key = jax.random.PRNGKey(0)
    k_x, k_adj, k_p = jax.random.split(key, 3)

    x = jax.random.normal(k_x, (N, NFEAT), dtype=jnp.float32)

    # Random undirected graph (dense adjacency, zero diagonal).
    a = jax.random.bernoulli(k_adj, p=0.05, shape=(N, N)).astype(jnp.float32)
    adj = jnp.clip(a + a.T, 0.0, 1.0) * (1.0 - jnp.eye(N, dtype=jnp.float32))

    params = init_params(k_p, NFEAT, NHID, NCLASS)

    ref = jax.block_until_ready(
        graphcon_gcn_forward_ref(x, adj, params, NLAYERS, DT, ALPHA, GAMMA))
    ref_scale = float(jnp.max(jnp.abs(ref))) + 1e-6

    # 1) Auto (fused) path: whole recurrence in a single VMEM-resident kernel.
    out_fused = jax.block_until_ready(
        graphcon_gcn_forward(x, adj, params, nlayers=NLAYERS,
                             dt=DT, alpha=ALPHA, gamma=GAMMA))
    assert out_fused.shape == (N, NCLASS)
    err_f = float(jnp.max(jnp.abs(out_fused - ref))) / ref_scale
    assert err_f < 3e-2, f"fused path mismatch vs reference: scaled max err {err_f}"

    # 2) Streamed (tiled-A) path, forced with small tiles so the multi-block
    #    grid / accumulator / resident-XW / aliasing logic is exercised too.
    out_str = jax.block_until_ready(
        graphcon_gcn_forward(x, adj, params, nlayers=NLAYERS,
                             dt=DT, alpha=ALPHA, gamma=GAMMA,
                             mode="streamed", tiles=(256, 256)))
    assert out_str.shape == (N, NCLASS)
    err_s = float(jnp.max(jnp.abs(out_str - ref))) / ref_scale
    assert err_s < 3e-2, f"streamed path mismatch vs reference: scaled max err {err_s}"

    print("KERNEL_OK")
</pallas_src>

<mosaic_0001>
module attributes {stable_mosaic.version = 11 : i64} {
  func.func @_fused_kernel(%arg0: i32, %arg1: memref<512x128xf32, #tpu.memory_space<vmem>>, %arg2: memref<512x512xbf16, #tpu.memory_space<vmem>>, %arg3: memref<128x128xf32, #tpu.memory_space<vmem>>, %arg4: memref<1x128xf32, #tpu.memory_space<vmem>>, %arg5: memref<128x128xf32, #tpu.memory_space<vmem>>, %arg6: memref<1x128xf32, #tpu.memory_space<vmem>>, %arg7: memref<128x128xf32, #tpu.memory_space<vmem>>, %arg8: memref<1x128xf32, #tpu.memory_space<vmem>>, %arg9: memref<128x128xf32, #tpu.memory_space<vmem>>, %arg10: memref<1x128xf32, #tpu.memory_space<vmem>>, %arg11: memref<512x128xf32, #tpu.memory_space<vmem>>, %arg12: memref<512x128xf32, #tpu.memory_space<vmem>>, %arg13: memref<512x128xf32, #tpu.memory_space<vmem>>) attributes {dimension_semantics = [#tpu.dimension_semantics<arbitrary>], iteration_bounds = array<i64: 1>, scalar_prefetch = 0 : i64, scratch_operands = 2 : i64, tpu.core_type = #tpu.core_type<tc>, window_params = [{pipeline_mode = #tpu.pipeline_mode<synchronous>, transform_indices = @transform_0, window_bounds = array<i64: 512, 128>}, {pipeline_mode = #tpu.pipeline_mode<synchronous>, transform_indices = @transform_1, window_bounds = array<i64: 512, 512>}, {pipeline_mode = #tpu.pipeline_mode<synchronous>, transform_indices = @transform_2, window_bounds = array<i64: 128, 128>}, {pipeline_mode = #tpu.pipeline_mode<synchronous>, transform_indices = @transform_3, window_bounds = array<i64: 1, 128>}, {pipeline_mode = #tpu.pipeline_mode<synchronous>, transform_indices = @transform_4, window_bounds = array<i64: 128, 128>}, {pipeline_mode = #tpu.pipeline_mode<synchronous>, transform_indices = @transform_5, window_bounds = array<i64: 1, 128>}, {pipeline_mode = #tpu.pipeline_mode<synchronous>, transform_indices = @transform_6, window_bounds = array<i64: 128, 128>}, {pipeline_mode = #tpu.pipeline_mode<synchronous>, transform_indices = @transform_7, window_bounds = array<i64: 1, 128>}, {pipeline_mode = #tpu.pipeline_mode<synchronous>, transform_indices = @transform_8, window_bounds = array<i64: 128, 128>}, {pipeline_mode = #tpu.pipeline_mode<synchronous>, transform_indices = @transform_9, window_bounds = array<i64: 1, 128>}, {pipeline_mode = #tpu.pipeline_mode<synchronous>, transform_indices = @transform_10, window_bounds = array<i64: 512, 128>}]} {
    %c0 = arith.constant 0 : index
    %c0_0 = arith.constant 0 : index
    %0 = vector.load %arg1[%c0, %c0_0] : memref<512x128xf32, #tpu.memory_space<vmem>>, vector<512x128xf32>
    %c0_1 = arith.constant 0 : index
    %c0_2 = arith.constant 0 : index
    %1 = vector.load %arg3[%c0_1, %c0_2] : memref<128x128xf32, #tpu.memory_space<vmem>>, vector<128x128xf32>
    %cst = arith.constant dense<0.000000e+00> : vector<512x128xf32>
    %2 = tpu.matmul %0, %1, %cst {dimension_numbers = #tpu.dot_dimension_numbers<[1], [0], [0], [1], [0, 0, 1, 1], [], []>} : vector<512x128xf32>, vector<128x128xf32>, vector<512x128xf32> -> vector<512x128xf32>
    %c0_3 = arith.constant 0 : index
    %c0_4 = arith.constant 0 : index
    %3 = vector.load %arg4[%c0_3, %c0_4] : memref<1x128xf32, #tpu.memory_space<vmem>>, vector<1x128xf32>
    %4 = vector.broadcast %3 : vector<1x128xf32> to vector<512x128xf32>
    %5 = arith.addf %2, %4 : vector<512x128xf32>
    %cst_5 = arith.constant 0.000000e+00 : f32
    %6 = vector.broadcast %cst_5 : f32 to vector<512x128xf32>
    %7 = arith.maximumf %5, %6 : vector<512x128xf32>
    %8 = tpu.iota {dimensions = array<i32: 0>} : vector<512x128xi32>
    %c512_i32 = arith.constant 512 : i32
    %9 = vector.broadcast %c512_i32 : i32 to vector<512x128xi32>
    %10 = arith.cmpi slt, %8, %9 : vector<512x128xi32>
    %cst_6 = arith.constant 0.000000e+00 : f32
    %11 = vector.broadcast %cst_6 : f32 to vector<512x128xf32>
    %12 = arith.select %10, %7, %11 : vector<512x128xi1>, vector<512x128xf32>
    %c0_7 = arith.constant 0 : index
    %c0_8 = arith.constant 0 : index
    %13 = vector.load %arg12[%c0_7, %c0_8] : memref<512x128xf32, #tpu.memory_space<vmem>>, vector<512x128xf32>
    tpu.vector_store %arg12[%c0_7, %c0_8], %12 {strides = array<i32>} : memref<512x128xf32, #tpu.memory_space<vmem>>, vector<512x128xf32>,
    %c0_9 = arith.constant 0 : index
    %c0_10 = arith.constant 0 : index
    %14 = vector.load %arg13[%c0_9, %c0_10] : memref<512x128xf32, #tpu.memory_space<vmem>>, vector<512x128xf32>
    tpu.vector_store %arg13[%c0_9, %c0_10], %12 {strides = array<i32>} : memref<512x128xf32, #tpu.memory_space<vmem>>, vector<512x128xf32>,
    %c0_i32 = arith.constant 0 : i32
    %c3_i32 = arith.constant 3 : i32
    %15 = arith.addi %c0_i32, %c3_i32 : i32
    %c1_i32 = arith.constant 1 : i32
    scf.for %arg14 = %c0_i32 to %15 step %c1_i32  : i32 {
      %c0_20 = arith.constant 0 : index
      %c0_21 = arith.constant 0 : index
      %23 = vector.load %arg12[%c0_20, %c0_21] : memref<512x128xf32, #tpu.memory_space<vmem>>, vector<512x128xf32>
      %c0_22 = arith.constant 0 : index
      %c0_23 = arith.constant 0 : index
      %24 = vector.load %arg13[%c0_22, %c0_23] : memref<512x128xf32, #tpu.memory_space<vmem>>, vector<512x128xf32>
      %c0_24 = arith.constant 0 : index
      %c0_25 = arith.constant 0 : index
      %25 = vector.load %arg5[%c0_24, %c0_25] : memref<128x128xf32, #tpu.memory_space<vmem>>, vector<128x128xf32>
      %cst_26 = arith.constant dense<0.000000e+00> : vector<512x128xf32>
      %26 = tpu.matmul %23, %25, %cst_26 {dimension_numbers = #tpu.dot_dimension_numbers<[1], [0], [0], [1], [0, 0, 1, 1], [], []>} : vector<512x128xf32>, vector<128x128xf32>, vector<512x128xf32> -> vector<512x128xf32>
      %c0_27 = arith.constant 0 : index
      %c0_28 = arith.constant 0 : index
      %27 = vector.load %arg2[%c0_27, %c0_28] : memref<512x512xbf16, #tpu.memory_space<vmem>>, vector<512x512xbf16>
      %28 = arith.truncf %26 : vector<512x128xf32> to vector<512x128xbf16>
      %cst_29 = arith.constant dense<0.000000e+00> : vector<512x128xf32>
      %29 = tpu.matmul %27, %28, %cst_29 {dimension_numbers = #tpu.dot_dimension_numbers<[1], [0], [0], [1], [0, 0, 1, 1], [], []>} : vector<512x512xbf16>, vector<512x128xbf16>, vector<512x128xf32> -> vector<512x128xf32>
      %c0_30 = arith.constant 0 : index
      %c0_31 = arith.constant 0 : index
      %30 = vector.load %arg6[%c0_30, %c0_31] : memref<1x128xf32, #tpu.memory_space<vmem>>, vector<1x128xf32>
      %31 = vector.broadcast %30 : vector<1x128xf32> to vector<512x128xf32>
      %32 = arith.addf %29, %31 : vector<512x128xf32>
      %c0_32 = arith.constant 0 : index
      %c0_33 = arith.constant 0 : index
      %33 = vector.load %arg7[%c0_32, %c0_33] : memref<128x128xf32, #tpu.memory_space<vmem>>, vector<128x128xf32>
      %cst_34 = arith.constant dense<0.000000e+00> : vector<512x128xf32>
      %34 = tpu.matmul %26, %33, %cst_34 {dimension_numbers = #tpu.dot_dimension_numbers<[1], [0], [0], [1], [0, 0, 1, 1], [], []>} : vector<512x128xf32>, vector<128x128xf32>, vector<512x128xf32> -> vector<512x128xf32>
      %c0_35 = arith.constant 0 : index
      %c0_36 = arith.constant 0 : index
      %35 = vector.load %arg8[%c0_35, %c0_36] : memref<1x128xf32, #tpu.memory_space<vmem>>, vector<1x128xf32>
      %36 = vector.broadcast %35 : vector<1x128xf32> to vector<512x128xf32>
      %37 = arith.addf %34, %36 : vector<512x128xf32>
      %cst_37 = arith.constant 0.000000e+00 : f32
      %38 = vector.broadcast %cst_37 : f32 to vector<512x128xf32>
      %39 = arith.subf %38, %37 : vector<512x128xf32>
      %40 = arith.addf %32, %39 : vector<512x128xf32>
      %cst_38 = arith.constant 0.000000e+00 : f32
      %41 = vector.broadcast %cst_38 : f32 to vector<512x128xf32>
      %42 = arith.maximumf %40, %41 : vector<512x128xf32>
      %cst_39 = arith.constant 1.000000e+00 : f32
      %43 = vector.broadcast %cst_39 : f32 to vector<512x128xf32>
      %44 = arith.mulf %43, %24 : vector<512x128xf32>
      %45 = arith.subf %42, %44 : vector<512x128xf32>
      %cst_40 = arith.constant 1.000000e+00 : f32
      %46 = vector.broadcast %cst_40 : f32 to vector<512x128xf32>
      %47 = arith.mulf %46, %23 : vector<512x128xf32>
      %48 = arith.subf %45, %47 : vector<512x128xf32>
      %cst_41 = arith.constant 1.000000e+00 : f32
      %49 = vector.broadcast %cst_41 : f32 to vector<512x128xf32>
      %50 = arith.mulf %49, %48 : vector<512x128xf32>
      %51 = arith.addf %24, %50 : vector<512x128xf32>
      %cst_42 = arith.constant 1.000000e+00 : f32
      %52 = vector.broadcast %cst_42 : f32 to vector<512x128xf32>
      %53 = arith.mulf %52, %51 : vector<512x128xf32>
      %54 = arith.addf %23, %53 : vector<512x128xf32>
      %cst_43 = arith.constant 0.000000e+00 : f32
      %55 = vector.broadcast %cst_43 : f32 to vector<512x128xf32>
      %56 = arith.select %10, %51, %55 : vector<512x128xi1>, vector<512x128xf32>
      %c0_44 = arith.constant 0 : index
      %c0_45 = arith.constant 0 : index
      %57 = vector.load %arg13[%c0_44, %c0_45] : memref<512x128xf32, #tpu.memory_space<vmem>>, vector<512x128xf32>
      tpu.vector_store %arg13[%c0_44, %c0_45], %56 {strides = array<i32>} : memref<512x128xf32, #tpu.memory_space<vmem>>, vector<512x128xf32>,
      %cst_46 = arith.constant 0.000000e+00 : f32
      %58 = vector.broadcast %cst_46 : f32 to vector<512x128xf32>
      %59 = arith.select %10, %54, %58 : vector<512x128xi1>, vector<512x128xf32>
      %c0_47 = arith.constant 0 : index
      %c0_48 = arith.constant 0 : index
      %60 = vector.load %arg12[%c0_47, %c0_48] : memref<512x128xf32, #tpu.memory_space<vmem>>, vector<512x128xf32>
      tpu.vector_store %arg12[%c0_47, %c0_48], %59 {strides = array<i32>} : memref<512x128xf32, #tpu.memory_space<vmem>>, vector<512x128xf32>,
    }
    %c0_11 = arith.constant 0 : index
    %c0_12 = arith.constant 0 : index
    %16 = vector.load %arg12[%c0_11, %c0_12] : memref<512x128xf32, #tpu.memory_space<vmem>>, vector<512x128xf32>
    %c0_13 = arith.constant 0 : index
    %c0_14 = arith.constant 0 : index
    %17 = vector.load %arg9[%c0_13, %c0_14] : memref<128x128xf32, #tpu.memory_space<vmem>>, vector<128x128xf32>
    %cst_15 = arith.constant dense<0.000000e+00> : vector<512x128xf32>
    %18 = tpu.matmul %16, %17, %cst_15 {dimension_numbers = #tpu.dot_dimension_numbers<[1], [0], [0], [1], [0, 0, 1, 1], [], []>} : vector<512x128xf32>, vector<128x128xf32>, vector<512x128xf32> -> vector<512x128xf32>
    %c0_16 = arith.constant 0 : index
    %c0_17 = arith.constant 0 : index
    %19 = vector.load %arg10[%c0_16, %c0_17] : memref<1x128xf32, #tpu.memory_space<vmem>>, vector<1x128xf32>
    %20 = vector.broadcast %19 : vector<1x128xf32> to vector<512x128xf32>
    %21 = arith.addf %18, %20 : vector<512x128xf32>
    %c0_18 = arith.constant 0 : index
    %c0_19 = arith.constant 0 : index
    %22 = vector.load %arg11[%c0_18, %c0_19] : memref<512x128xf32, #tpu.memory_space<vmem>>, vector<512x128xf32>
    tpu.vector_store %arg11[%c0_18, %c0_19], %21 {strides = array<i32>} : memref<512x128xf32, #tpu.memory_space<vmem>>, vector<512x128xf32>,
    return
  }
  func.func @transform_0(%arg0: i32) -> (i32, i32) {
    %c0_i32 = arith.constant 0 : i32
    %c0_i32_0 = arith.constant 0 : i32
    %c0_i32_1 = arith.constant 0 : i32
    return %c0_i32, %c0_i32_0 : i32, i32
  }
  func.func @transform_1(%arg0: i32) -> (i32, i32) {
    %c0_i32 = arith.constant 0 : i32
    %c0_i32_0 = arith.constant 0 : i32
    %c0_i32_1 = arith.constant 0 : i32
    return %c0_i32, %c0_i32_0 : i32, i32
  }
  func.func @transform_2(%arg0: i32) -> (i32, i32) {
    %c0_i32 = arith.constant 0 : i32
    %c0_i32_0 = arith.constant 0 : i32
    %c0_i32_1 = arith.constant 0 : i32
    return %c0_i32, %c0_i32_0 : i32, i32
  }
  func.func @transform_3(%arg0: i32) -> (i32, i32) {
    %c0_i32 = arith.constant 0 : i32
    %c0_i32_0 = arith.constant 0 : i32
    %c0_i32_1 = arith.constant 0 : i32
    return %c0_i32, %c0_i32_0 : i32, i32
  }
  func.func @transform_4(%arg0: i32) -> (i32, i32) {
    %c0_i32 = arith.constant 0 : i32
    %c0_i32_0 = arith.constant 0 : i32
    %c0_i32_1 = arith.constant 0 : i32
    return %c0_i32, %c0_i32_0 : i32, i32
  }
  func.func @transform_5(%arg0: i32) -> (i32, i32) {
    %c0_i32 = arith.constant 0 : i32
    %c0_i32_0 = arith.constant 0 : i32
    %c0_i32_1 = arith.constant 0 : i32
    return %c0_i32, %c0_i32_0 : i32, i32
  }
  func.func @transform_6(%arg0: i32) -> (i32, i32) {
    %c0_i32 = arith.constant 0 : i32
    %c0_i32_0 = arith.constant 0 : i32
    %c0_i32_1 = arith.constant 0 : i32
    return %c0_i32, %c0_i32_0 : i32, i32
  }
  func.func @transform_7(%arg0: i32) -> (i32, i32) {
    %c0_i32 = arith.constant 0 : i32
    %c0_i32_0 = arith.constant 0 : i32
    %c0_i32_1 = arith.constant 0 : i32
    return %c0_i32, %c0_i32_0 : i32, i32
  }
  func.func @transform_8(%arg0: i32) -> (i32, i32) {
    %c0_i32 = arith.constant 0 : i32
    %c0_i32_0 = arith.constant 0 : i32
    %c0_i32_1 = arith.constant 0 : i32
    return %c0_i32, %c0_i32_0 : i32, i32
  }
  func.func @transform_9(%arg0: i32) -> (i32, i32) {
    %c0_i32 = arith.constant 0 : i32
    %c0_i32_0 = arith.constant 0 : i32
    %c0_i32_1 = arith.constant 0 : i32
    return %c0_i32, %c0_i32_0 : i32, i32
  }
  func.func @transform_10(%arg0: i32) -> (i32, i32) {
    %c0_i32 = arith.constant 0 : i32
    %c0_i32_0 = arith.constant 0 : i32
    %c0_i32_1 = arith.constant 0 : i32
    return %c0_i32, %c0_i32_0 : i32, i32
  }
}

</mosaic_0001>

<llo_original>
// kernel: graphcon_gcn_forward.1
$region0: #{graphcon_gcn_forward.1}
  #allocation0 [shape = 'u32[]', space=smem, size = 0x4, offset = 0x4, fixed_abs, tag = 'smem constant byte address 0x4 - core index']
  #allocation1 [shape = 'u32[144,128]{1,0:T(1,128)}', space=vmem, size = 0x12000, scoped, tag = 'internal scratch']
  #allocation2 [shape = 'f32[512,128]{1,0:T(8,128)}', space=vmem, size = 0x40000, scoped, tag = 'scratch operand']
  #allocation3 [shape = 'f32[512,128]{1,0:T(8,128)}', space=vmem, size = 0x40000, scoped, tag = 'scratch operand']
  %s0 = inlined_call_operand.vmem [shape: f32[512,128], index: 0, kind: input, shape index: {}]
  %s1 = inlined_call_operand.vmem [shape: bf16[512,512], index: 1, kind: input, shape index: {}]
  %s2 = inlined_call_operand.vmem [shape: f32[128,128], index: 2, kind: input, shape index: {}]
  %s3 = inlined_call_operand.vmem [shape: f32[1,128], index: 3, kind: input, shape index: {}]
  %s4 = inlined_call_operand.vmem [shape: f32[128,128], index: 4, kind: input, shape index: {}]
  %s5 = inlined_call_operand.vmem [shape: f32[1,128], index: 5, kind: input, shape index: {}]
  %s6 = inlined_call_operand.vmem [shape: f32[128,128], index: 6, kind: input, shape index: {}]
  %s7 = inlined_call_operand.vmem [shape: f32[1,128], index: 7, kind: input, shape index: {}]
  %s8 = inlined_call_operand.vmem [shape: f32[128,128], index: 8, kind: input, shape index: {}]
  %s9 = inlined_call_operand.vmem [shape: f32[1,128], index: 9, kind: input, shape index: {}]
  %s10 = inlined_call_operand.vmem [shape: f32[512,128], index: 10, kind: output, shape index: {}]
  %s11 = sld [smem:[#allocation0]]
  $region57: #{graphcon_gcn_forward.1} parent=0
    _
  %s13 = ssub.s32 1, %s11
  %s14 = scalar_select 0, %s13, %s11
  // Predicated region
  $region2: #{graphcon_gcn_forward.1} parent=0 // pred_check
    _
  $region3: #{graphcon_gcn_forward.1} parent=0 // pred_check_branch
    %16 = sbr.rel (0) target = $region5
  $region4: #{graphcon_gcn_forward.1} parent=0 // pred_region
    _
  $region5: #{graphcon_gcn_forward.1} parent=0 // pred_fallthru
    _
  // Predicated region
  $region6: #{graphcon_gcn_forward.1} parent=0 // pred_check
    _
  $region7: #{graphcon_gcn_forward.1} parent=0 // pred_check_branch
    %18 = sbr.rel (0) target = $region9
  $region8: #{graphcon_gcn_forward.1} parent=0 // pred_region
    _
  $region9: #{graphcon_gcn_forward.1} parent=0 // pred_fallthru
    _
  // Predicated region
  $region10: #{graphcon_gcn_forward.1} parent=0 // pred_check
    _
  $region11: #{graphcon_gcn_forward.1} parent=0 // pred_check_branch
    %20 = sbr.rel (0) target = $region13
  $region12: #{graphcon_gcn_forward.1} parent=0 // pred_region
    _
  $region13: #{graphcon_gcn_forward.1} parent=0 // pred_fallthru
    _
  // Predicated region
  $region14: #{graphcon_gcn_forward.1} parent=0 // pred_check
    _
  $region15: #{graphcon_gcn_forward.1} parent=0 // pred_check_branch
    %22 = sbr.rel (0) target = $region17
  $region16: #{graphcon_gcn_forward.1} parent=0 // pred_region
    _
  $region17: #{graphcon_gcn_forward.1} parent=0 // pred_fallthru
    _
  // Predicated region
  $region18: #{graphcon_gcn_forward.1} parent=0 // pred_check
    _
  $region19: #{graphcon_gcn_forward.1} parent=0 // pred_check_branch
    %24 = sbr.rel (0) target = $region21
  $region20: #{graphcon_gcn_forward.1} parent=0 // pred_region
    _
  $region21: #{graphcon_gcn_forward.1} parent=0 // pred_fallthru
    _
  // Predicated region
  $region22: #{graphcon_gcn_forward.1} parent=0 // pred_check
    _
  $region23: #{graphcon_gcn_forward.1} parent=0 // pred_check_branch
    %26 = sbr.rel (0) target = $region25
  $region24: #{graphcon_gcn_forward.1} parent=0 // pred_region
    _
  $region25: #{graphcon_gcn_forward.1} parent=0 // pred_fallthru
    _
  // Predicated region
  $region26: #{graphcon_gcn_forward.1} parent=0 // pred_check
    _
  $region27: #{graphcon_gcn_forward.1} parent=0 // pred_check_branch
    %28 = sbr.rel (0) target = $region29
  $region28: #{graphcon_gcn_forward.1} parent=0 // pred_region
    _
  $region29: #{graphcon_gcn_forward.1} parent=0 // pred_fallthru
    _
  // Predicated region
  $region30: #{graphcon_gcn_forward.1} parent=0 // pred_check
    _
  $region31: #{graphcon_gcn_forward.1} parent=0 // pred_check_branch
    %30 = sbr.rel (0) target = $region33
  $region32: #{graphcon_gcn_forward.1} parent=0 // pred_region
    _
  $region33: #{graphcon_gcn_forward.1} parent=0 // pred_fallthru
    _
  // Predicated region
  $region34: #{graphcon_gcn_forward.1} parent=0 // pred_check
    _
  $region35: #{graphcon_gcn_forward.1} parent=0 // pred_check_branch
    %32 = sbr.rel (0) target = $region37
  $region36: #{graphcon_gcn_forward.1} parent=0 // pred_region
    _
  $region37: #{graphcon_gcn_forward.1} parent=0 // pred_fallthru
    _
  // Predicated region
  $region38: #{graphcon_gcn_forward.1} parent=0 // pred_check
    _
  $region39: #{graphcon_gcn_forward.1} parent=0 // pred_check_branch
    %34 = sbr.rel (0) target = $region41
  $region40: #{graphcon_gcn_forward.1} parent=0 // pred_region
    _
  $region41: #{graphcon_gcn_forward.1} parent=0 // pred_fallthru
    _
  %v36 = vld [vmem:[%s0] sm:$0xff]
  %v37 = vld [vmem:[%s0 + $0x8] sm:$0xff]
  %v38 = vld [vmem:[%s0 + $0x10] sm:$0xff]
  %v39 = vld [vmem:[%s0 + $0x18] sm:$0xff]
  %v40 = vld [vmem:[%s0 + $0x20] sm:$0xff]
  %v41 = vld [vmem:[%s0 + $0x28] sm:$0xff]
  %v42 = vld [vmem:[%s0 + $0x30] sm:$0xff]
  %v43 = vld [vmem:[%s0 + $0x38] sm:$0xff]
  %v44 = vld [vmem:[%s0 + $0x40] sm:$0xff]
  %v45 = vld [vmem:[%s0 + $0x48] sm:$0xff]
  %v46 = vld [vmem:[%s0 + $0x50] sm:$0xff]
  %v47 = vld [vmem:[%s0 + $0x58] sm:$0xff]
  %v48 = vld [vmem:[%s0 + $0x60] sm:$0xff]
  %v49 = vld [vmem:[%s0 + $0x68] sm:$0xff]
  %v50 = vld [vmem:[%s0 + $0x70] sm:$0xff]
  %v51 = vld [vmem:[%s0 + $0x78] sm:$0xff]
  %v52 = vld [vmem:[%s0 + $0x80] sm:$0xff]
  %v53 = vld [vmem:[%s0 + $0x88] sm:$0xff]
  %v54 = vld [vmem:[%s0 + $0x90] sm:$0xff]
  %v55 = vld [vmem:[%s0 + $0x98] sm:$0xff]
  %v56 = vld [vmem:[%s0 + $0xa0] sm:$0xff]
  %v57 = vld [vmem:[%s0 + $0xa8] sm:$0xff]
  %v58 = vld [vmem:[%s0 + $0xb0] sm:$0xff]
  %v59 = vld [vmem:[%s0 + $0xb8] sm:$0xff]
  %v60 = vld [vmem:[%s0 + $0xc0] sm:$0xff]
  %v61 = vld [vmem:[%s0 + $0xc8] sm:$0xff]
  %v62 = vld [vmem:[%s0 + $0xd0] sm:$0xff]
  %v63 = vld [vmem:[%s0 + $0xd8] sm:$0xff]
  %v64 = vld [vmem:[%s0 + $0xe0] sm:$0xff]
  %v65 = vld [vmem:[%s0 + $0xe8] sm:$0xff]
  %v66 = vld [vmem:[%s0 + $0xf0] sm:$0xff]
  %v67 = vld [vmem:[%s0 + $0xf8] sm:$0xff]
  %v68 = vld [vmem:[%s0 + $0x100] sm:$0xff]
  %v69 = vld [vmem:[%s0 + $0x108] sm:$0xff]
  %v70 = vld [vmem:[%s0 + $0x110] sm:$0xff]
  %v71 = vld [vmem:[%s0 + $0x118] sm:$0xff]
  %v72 = vld [vmem:[%s0 + $0x120] sm:$0xff]
  %v73 = vld [vmem:[%s0 + $0x128] sm:$0xff]
  %v74 = vld [vmem:[%s0 + $0x130] sm:$0xff]
  %v75 = vld [vmem:[%s0 + $0x138] sm:$0xff]
  %v76 = vld [vmem:[%s0 + $0x140] sm:$0xff]
  %v77 = vld [vmem:[%s0 + $0x148] sm:$0xff]
  %v78 = vld [vmem:[%s0 + $0x150] sm:$0xff]
  %v79 = vld [vmem:[%s0 + $0x158] sm:$0xff]
  %v80 = vld [vmem:[%s0 + $0x160] sm:$0xff]
  %v81 = vld [vmem:[%s0 + $0x168] sm:$0xff]
  %v82 = vld [vmem:[%s0 + $0x170] sm:$0xff]
  %v83 = vld [vmem:[%s0 + $0x178] sm:$0xff]
  %v84 = vld [vmem:[%s0 + $0x180] sm:$0xff]
  %v85 = vld [vmem:[%s0 + $0x188] sm:$0xff]
  %v86 = vld [vmem:[%s0 + $0x190] sm:$0xff]
  %v87 = vld [vmem:[%s0 + $0x198] sm:$0xff]
  %v88 = vld [vmem:[%s0 + $0x1a0] sm:$0xff]
  %v89 = vld [vmem:[%s0 + $0x1a8] sm:$0xff]
  %v90 = vld [vmem:[%s0 + $0x1b0] sm:$0xff]
  %v91 = vld [vmem:[%s0 + $0x1b8] sm:$0xff]
  %v92 = vld [vmem:[%s0 + $0x1c0] sm:$0xff]
  %v93 = vld [vmem:[%s0 + $0x1c8] sm:$0xff]
  %v94 = vld [vmem:[%s0 + $0x1d0] sm:$0xff]
  %v95 = vld [vmem:[%s0 + $0x1d8] sm:$0xff]
  %v96 = vld [vmem:[%s0 + $0x1e0] sm:$0xff]
  %v97 = vld [vmem:[%s0 + $0x1e8] sm:$0xff]
  %v98 = vld [vmem:[%s0 + $0x1f0] sm:$0xff]
  %v99 = vld [vmem:[%s0 + $0x1f8] sm:$0xff]
  %v100 = vld [vmem:[%s2] sm:$0xff]
  %v101 = vld [vmem:[%s2 + $0x8] sm:$0xff]
  %v102 = vld [vmem:[%s2 + $0x10] sm:$0xff]
  %v103 = vld [vmem:[%s2 + $0x18] sm:$0xff]
  %v104 = vld [vmem:[%s2 + $0x20] sm:$0xff]
  %v105 = vld [vmem:[%s2 + $0x28] sm:$0xff]
  %v106 = vld [vmem:[%s2 + $0x30] sm:$0xff]
  %v107 = vld [vmem:[%s2 + $0x38] sm:$0xff]
  %v108 = vld [vmem:[%s2 + $0x40] sm:$0xff]
  %v109 = vld [vmem:[%s2 + $0x48] sm:$0xff]
  %v110 = vld [vmem:[%s2 + $0x50] sm:$0xff]
  %v111 = vld [vmem:[%s2 + $0x58] sm:$0xff]
  %v112 = vld [vmem:[%s2 + $0x60] sm:$0xff]
  %v113 = vld [vmem:[%s2 + $0x68] sm:$0xff]
  %v114 = vld [vmem:[%s2 + $0x70] sm:$0xff]
  %v115 = vld [vmem:[%s2 + $0x78] sm:$0xff]
  %v116 = vld [vmem:[%s3] sm:$0x1]
  %v118 = vlaneseq
  %v119 = vshrl.u32 %v118, 7
  %v120 = vsub.s32 0, %v119
  %v121 = vrot.slane %v116, %v120
  %123 = vmatprep.subr.mxu0 0.0
  %124 = vmatpush1.msra.mxu0 %v100
  %125 = vmatprep.subr.mxu0 0.0
  %126 = vmatpush1.msra.mxu0 %v101
  %127 = vmatprep.subr.mxu0 0.0
  %128 = vmatpush1.msra.mxu0 %v102
  %129 = vmatprep.subr.mxu0 0.0
  %130 = vmatpush1.msra.mxu0 %v103
  %131 = vmatprep.subr.mxu0 0.0
  %132 = vmatpush1.msra.mxu0 %v104
  %133 = vmatprep.subr.mxu0 0.0
  %134 = vmatpush1.msra.mxu0 %v105
  %135 = vmatprep.subr.mxu0 0.0
  %136 = vmatpush1.msra.mxu0 %v106
  %137 = vmatprep.subr.mxu0 0.0
  %138 = vmatpush1.msra.mxu0 %v107
  %139 = vmatprep.subr.mxu0 0.0
  %140 = vmatpush1.msra.mxu0 %v108
  %141 = vmatprep.subr.mxu0 0.0
  %142 = vmatpush1.msra.mxu0 %v109
  %143 = vmatprep.subr.mxu0 0.0
  %144 = vmatpush1.msra.mxu0 %v110
  %145 = vmatprep.subr.mxu0 0.0
  %146 = vmatpush1.msra.mxu0 %v111
  %147 = vmatprep.subr.mxu0 0.0
  %148 = vmatpush1.msra.mxu0 %v112
  %149 = vmatprep.subr.mxu0 0.0
  %150 = vmatpush1.msra.mxu0 %v113
  %151 = vmatprep.subr.mxu0 0.0
  %152 = vmatpush1.msra.mxu0 %v114
  %153 = vmatprep.subr.mxu0 0.0
  %154 = vmatpush1.msra.mxu0 %v115
  %155 = vmatprep.subr.mxu0 0.0
  %156 = vmatpush1.msra.mxu0 0.0
  %157 = vmatprep.subr.mxu0 0.0
  %158 = vmatpush1.msra.mxu0 0.0
  %159 = vmatprep.subr.mxu0 0.0
  %160 = vmatpush1.msra.mxu0 0.0
  %161 = vmatprep.subr.mxu0 0.0
  %162 = vmatpush1.msra.mxu0 0.0
  %163 = vmatprep.subr.mxu0 0.0
  %164 = vmatpush1.msra.mxu0 0.0
  %165 = vmatprep.subr.mxu0 0.0
  %166 = vmatpush1.msra.mxu0 0.0
  %167 = vmatprep.subr.mxu0 0.0
  %168 = vmatpush1.msra.mxu0 0.0
  %169 = vmatprep.subr.mxu0 0.0
  %170 = vmatpush1.msra.mxu0 0.0
  %171 = vmatprep.subr.mxu0 0.0
  %172 = vmatpush1.msra.mxu0 0.0
  %173 = vmatprep.subr.mxu0 0.0
  %174 = vmatpush1.msra.mxu0 0.0
  %175 = vmatprep.subr.mxu0 0.0
  %176 = vmatpush1.msra.mxu0 0.0
  %177 = vmatprep.subr.mxu0 0.0
  %178 = vmatpush1.msra.mxu0 0.0
  %179 = vmatprep.subr.mxu0 0.0
  %180 = vmatpush1.msra.mxu0 0.0
  %181 = vmatprep.subr.mxu0 0.0
  %182 = vmatpush1.msra.mxu0 0.0
  %183 = vmatprep.subr.mxu0 0.0
  %184 = vmatpush1.msra.mxu0 0.0
  %185 = vmatprep.subr.mxu0 0.0
  %186 = vmatpush1.msra.mxu0 0.0
  %187 = vmatprep.mubr.f32.mxu0 0.0
  %188 = vmatmul.mubr.f32.gmra.mrb[0].mxu0 %v36
  %v189 = vpop.f32.mrb[0].mxu0
  %v190 = vadd.f32 %v121, %v189
  %v191 = vpop.f32.mrb[0].mxu0
  %192 = vmatprep.mubr.f32.mxu0 0.0
  %193 = vmatmul.mubr.f32.gmra.mrb[0].mxu0 %v37
  %v194 = vpop.f32.mrb[0].mxu0
  %v195 = vadd.f32 %v121, %v194
  %v196 = vpop.f32.mrb[0].mxu0
  %197 = vmatprep.mubr.f32.mxu0 0.0
  %198 = vmatmul.mubr.f32.gmra.mrb[0].mxu0 %v38
  %v199 = vpop.f32.mrb[0].mxu0
  %v200 = vadd.f32 %v121, %v199
  %v201 = vpop.f32.mrb[0].mxu0
  %202 = vmatprep.mubr.f32.mxu0 0.0
  %203 = vmatmul.mubr.f32.gmra.mrb[0].mxu0 %v39
  %v204 = vpop.f32.mrb[0].mxu0
  %v205 = vadd.f32 %v121, %v204
  %v206 = vpop.f32.mrb[0].mxu0
  %207 = vmatprep.mubr.f32.mxu0 0.0
  %208 = vmatmul.mubr.f32.gmra.mrb[0].mxu0 %v40
  %v209 = vpop.f32.mrb[0].mxu0
  %v210 = vadd.f32 %v121, %v209
  %v211 = vpop.f32.mrb[0].mxu0
  %212 = vmatprep.mubr.f32.mxu0 0.0
  %213 = vmatmul.mubr.f32.gmra.mrb[0].mxu0 %v41
  %v214 = vpop.f32.mrb[0].mxu0
  %v215 = vadd.f32 %v121, %v214
  %v216 = vpop.f32.mrb[0].mxu0
  %217 = vmatprep.mubr.f32.mxu0 0.0
  %218 = vmatmul.mubr.f32.gmra.mrb[0].mxu0 %v42
  %v219 = vpop.f32.mrb[0].mxu0
  %v220 = vadd.f32 %v121, %v219
  %v221 = vpop.f32.mrb[0].mxu0
  %222 = vmatprep.mubr.f32.mxu0 0.0
  %223 = vmatmul.mubr.f32.gmra.mrb[0].mxu0 %v43
  %v224 = vpop.f32.mrb[0].mxu0
  %v225 = vadd.f32 %v121, %v224
  %v226 = vpop.f32.mrb[0].mxu0
  %227 = vmatprep.mubr.f32.mxu0 0.0
  %228 = vmatmul.mubr.f32.gmra.mrb[0].mxu0 %v44
  %v229 = vpop.f32.mrb[0].mxu0
  %v230 = vadd.f32 %v121, %v229
  %v231 = vpop.f32.mrb[0].mxu0
  %232 = vmatprep.mubr.f32.mxu0 0.0
  %233 = vmatmul.mubr.f32.gmra.mrb[0].mxu0 %v45
  %v234 = vpop.f32.mrb[0].mxu0
  %v235 = vadd.f32 %v121, %v234
  %v236 = vpop.f32.mrb[0].mxu0
  %237 = vmatprep.mubr.f32.mxu0 0.0
  %238 = vmatmul.mubr.f32.gmra.mrb[0].mxu0 %v46
  %v239 = vpop.f32.mrb[0].mxu0
  %v240 = vadd.f32 %v121, %v239
  %v241 = vpop.f32.mrb[0].mxu0
  %242 = vmatprep.mubr.f32.mxu0 0.0
  %243 = vmatmul.mubr.f32.gmra.mrb[0].mxu0 %v47
  %v244 = vpop.f32.mrb[0].mxu0
  %v245 = vadd.f32 %v121, %v244
  %v246 = vpop.f32.mrb[0].mxu0
  %247 = vmatprep.mubr.f32.mxu0 0.0
  %248 = vmatmul.mubr.f32.gmra.mrb[0].mxu0 %v48
  %v249 = vpop.f32.mrb[0].mxu0
  %v250 = vadd.f32 %v121, %v249
  %v251 = vpop.f32.mrb[0].mxu0
  %252 = vmatprep.mubr.f32.mxu0 0.0
  %253 = vmatmul.mubr.f32.gmra.mrb[0].mxu0 %v49
  %v254 = vpop.f32.mrb[0].mxu0
  %v255 = vadd.f32 %v121, %v254
  %v256 = vpop.f32.mrb[0].mxu0
  %257 = vmatprep.mubr.f32.mxu0 0.0
  %258 = vmatmul.mubr.f32.gmra.mrb[0].mxu0 %v50
  %v259 = vpop.f32.mrb[0].mxu0
  %v260 = vadd.f32 %v121, %v259
  %v261 = vpop.f32.mrb[0].mxu0
  %262 = vmatprep.mubr.f32.mxu0 0.0
  %263 = vmatmul.mubr.f32.gmra.mrb[0].mxu0 %v51
  %v264 = vpop.f32.mrb[0].mxu0
  %v265 = vadd.f32 %v121, %v264
  %v266 = vpop.f32.mrb[0].mxu0
  %267 = vmatprep.mubr.f32.mxu0 0.0
  %268 = vmatmul.mubr.f32.gmra.mrb[0].mxu0 %v52
  %v269 = vpop.f32.mrb[0].mxu0
  %v270 = vadd.f32 %v121, %v269
  %v271 = vpop.f32.mrb[0].mxu0
  %272 = vmatprep.mubr.f32.mxu0 0.0
  %273 = vmatmul.mubr.f32.gmra.mrb[0].mxu0 %v53
  %v274 = vpop.f32.mrb[0].mxu0
  %v275 = vadd.f32 %v121, %v274
  %v276 = vpop.f32.mrb[0].mxu0
  %277 = vmatprep.mubr.f32.mxu0 0.0
  %278 = vmatmul.mubr.f32.gmra.mrb[0].mxu0 %v54
  %v279 = vpop.f32.mrb[0].mxu0
  %v280 = vadd.f32 %v121, %v279
  %v281 = vpop.f32.mrb[0].mxu0
  %282 = vmatprep.mubr.f32.mxu0 0.0
  %283 = vmatmul.mubr.f32.gmra.mrb[0].mxu0 %v55
  %v284 = vpop.f32.mrb[0].mxu0
  %v285 = vadd.f32 %v121, %v284
  %v286 = vpop.f32.mrb[0].mxu0
  %287 = vmatprep.mubr.f32.mxu0 0.0
  %288 = vmatmul.mubr.f32.gmra.mrb[0].mxu0 %v56
  %v289 = vpop.f32.mrb[0].mxu0
  %v290 = vadd.f32 %v121, %v289
  %v291 = vpop.f32.mrb[0].mxu0
  %292 = vmatprep.mubr.f32.mxu0 0.0
  %293 = vmatmul.mubr.f32.gmra.mrb[0].mxu0 %v57
  %v294 = vpop.f32.mrb[0].mxu0
  %v295 = vadd.f32 %v121, %v294
  %v296 = vpop.f32.mrb[0].mxu0
  %297 = vmatprep.mubr.f32.mxu0 0.0
  %298 = vmatmul.mubr.f32.gmra.mrb[0].mxu0 %v58
  %v299 = vpop.f32.mrb[0].mxu0
  %v300 = vadd.f32 %v121, %v299
  %v301 = vpop.f32.mrb[0].mxu0
  %302 = vmatprep.mubr.f32.mxu0 0.0
  %303 = vmatmul.mubr.f32.gmra.mrb[0].mxu0 %v59
  %v304 = vpop.f32.mrb[0].mxu0
  %v305 = vadd.f32 %v121, %v304
  %v306 = vpop.f32.mrb[0].mxu0
  %307 = vmatprep.mubr.f32.mxu0 0.0
  %308 = vmatmul.mubr.f32.gmra.mrb[0].mxu0 %v60
  %v309 = vpop.f32.mrb[0].mxu0
  %v310 = vadd.f32 %v121, %v309
  %v311 = vpop.f32.mrb[0].mxu0
  %312 = vmatprep.mubr.f32.mxu0 0.0
  %313 = vmatmul.mubr.f32.gmra.mrb[0].mxu0 %v61
  %v314 = vpop.f32.mrb[0].mxu0
  %v315 = vadd.f32 %v121, %v314
  %v316 = vpop.f32.mrb[0].mxu0
  %317 = vmatprep.mubr.f32.mxu0 0.0
  %318 = vmatmul.mubr.f32.gmra.mrb[0].mxu0 %v62
  %v319 = vpop.f32.mrb[0].mxu0
  %v320 = vadd.f32 %v121, %v319
  %v321 = vpop.f32.mrb[0].mxu0
  %322 = vmatprep.mubr.f32.mxu0 0.0
  %323 = vmatmul.mubr.f32.gmra.mrb[0].mxu0 %v63
  %v324 = vpop.f32.mrb[0].mxu0
  %v325 = vadd.f32 %v121, %v324
  %v326 = vpop.f32.mrb[0].mxu0
  %327 = vmatprep.mubr.f32.mxu0 0.0
  %328 = vmatmul.mubr.f32.gmra.mrb[0].mxu0 %v64
  %v329 = vpop.f32.mrb[0].mxu0
  %v330 = vadd.f32 %v121, %v329
  %v331 = vpop.f32.mrb[0].mxu0
  %332 = vmatprep.mubr.f32.mxu0 0.0
  %333 = vmatmul.mubr.f32.gmra.mrb[0].mxu0 %v65
  %v334 = vpop.f32.mrb[0].mxu0
  %v335 = vadd.f32 %v121, %v334
  %v336 = vpop.f32.mrb[0].mxu0
  %337 = vmatprep.mubr.f32.mxu0 0.0
  %338 = vmatmul.mubr.f32.gmra.mrb[0].mxu0 %v66
  %v339 = vpop.f32.mrb[0].mxu0
  %v340 = vadd.f32 %v121, %v339
  %v341 = vpop.f32.mrb[0].mxu0
  %342 = vmatprep.mubr.f32.mxu0 0.0
  %343 = vmatmul.mubr.f32.gmra.mrb[0].mxu0 %v67
  %v344 = vpop.f32.mrb[0].mxu0
  %v345 = vadd.f32 %v121, %v344
  %v346 = vpop.f32.mrb[0].mxu0
  %347 = vmatprep.mubr.f32.mxu0 0.0
  %348 = vmatmul.mubr.f32.gmra.mrb[0].mxu0 %v68
  %v349 = vpop.f32.mrb[0].mxu0
  %v350 = vadd.f32 %v121, %v349
  %v351 = vpop.f32.mrb[0].mxu0
  %352 = vmatprep.mubr.f32.mxu0 0.0
  %353 = vmatmul.mubr.f32.gmra.mrb[0].mxu0 %v69
  %v354 = vpop.f32.mrb[0].mxu0
  %v355 = vadd.f32 %v121, %v354
  %v356 = vpop.f32.mrb[0].mxu0
  %357 = vmatprep.mubr.f32.mxu0 0.0
  %358 = vmatmul.mubr.f32.gmra.mrb[0].mxu0 %v70
  %v359 = vpop.f32.mrb[0].mxu0
  %v360 = vadd.f32 %v121, %v359
  %v361 = vpop.f32.mrb[0].mxu0
  %362 = vmatprep.mubr.f32.mxu0 0.0
  %363 = vmatmul.mubr.f32.gmra.mrb[0].mxu0 %v71
  %v364 = vpop.f32.mrb[0].mxu0
  %v365 = vadd.f32 %v121, %v364
  %v366 = vpop.f32.mrb[0].mxu0
  %367 = vmatprep.mubr.f32.mxu0 0.0
  %368 = vmatmul.mubr.f32.gmra.mrb[0].mxu0 %v72
  %v369 = vpop.f32.mrb[0].mxu0
  %v370 = vadd.f32 %v121, %v369
  %v371 = vpop.f32.mrb[0].mxu0
  %372 = vmatprep.mubr.f32.mxu0 0.0
  %373 = vmatmul.mubr.f32.gmra.mrb[0].mxu0 %v73
  %v374 = vpop.f32.mrb[0].mxu0
  %v375 = vadd.f32 %v121, %v374
  %v376 = vpop.f32.mrb[0].mxu0
  %377 = vmatprep.mubr.f32.mxu0 0.0
  %378 = vmatmul.mubr.f32.gmra.mrb[0].mxu0 %v74
  %v379 = vpop.f32.mrb[0].mxu0
  %v380 = vadd.f32 %v121, %v379
  %v381 = vpop.f32.mrb[0].mxu0
  %382 = vmatprep.mubr.f32.mxu0 0.0
  %383 = vmatmul.mubr.f32.gmra.mrb[0].mxu0 %v75
  %v384 = vpop.f32.mrb[0].mxu0
  %v385 = vadd.f32 %v121, %v384
  %v386 = vpop.f32.mrb[0].mxu0
  %387 = vmatprep.mubr.f32.mxu0 0.0
  %388 = vmatmul.mubr.f32.gmra.mrb[0].mxu0 %v76
  %v389 = vpop.f32.mrb[0].mxu0
  %v390 = vadd.f32 %v121, %v389
  %v391 = vpop.f32.mrb[0].mxu0
  %392 = vmatprep.mubr.f32.mxu0 0.0
  %393 = vmatmul.mubr.f32.gmra.mrb[0].mxu0 %v77
  %v394 = vpop.f32.mrb[0].mxu0
  %v395 = vadd.f32 %v121, %v394
  %v396 = vpop.f32.mrb[0].mxu0
  %397 = vmatprep.mubr.f32.mxu0 0.0
  %398 = vmatmul.mubr.f32.gmra.mrb[0].mxu0 %v78
  %v399 = vpop.f32.mrb[0].mxu0
  %v400 = vadd.f32 %v121, %v399
  %v401 = vpop.f32.mrb[0].mxu0
  %402 = vmatprep.mubr.f32.mxu0 0.0
  %403 = vmatmul.mubr.f32.gmra.mrb[0].mxu0 %v79
  %v404 = vpop.f32.mrb[0].mxu0
  %v405 = vadd.f32 %v121, %v404
  %v406 = vpop.f32.mrb[0].mxu0
  %407 = vmatprep.mubr.f32.mxu0 0.0
  %408 = vmatmul.mubr.f32.gmra.mrb[0].mxu0 %v80
  %v409 = vpop.f32.mrb[0].mxu0
  %v410 = vadd.f32 %v121, %v409
  %v411 = vpop.f32.mrb[0].mxu0
  %412 = vmatprep.mubr.f32.mxu0 0.0
  %413 = vmatmul.mubr.f32.gmra.mrb[0].mxu0 %v81
  %v414 = vpop.f32.mrb[0].mxu0
  %v415 = vadd.f32 %v121, %v414
  %v416 = vpop.f32.mrb[0].mxu0
  %417 = vmatprep.mubr.f32.mxu0 0.0
  %418 = vmatmul.mubr.f32.gmra.mrb[0].mxu0 %v82
  %v419 = vpop.f32.mrb[0].mxu0
  %v420 = vadd.f32 %v121, %v419
  %v421 = vpop.f32.mrb[0].mxu0
  %422 = vmatprep.mubr.f32.mxu0 0.0
  %423 = vmatmul.mubr.f32.gmra.mrb[0].mxu0 %v83
  %v424 = vpop.f32.mrb[0].mxu0
  %v425 = vadd.f32 %v121, %v424
  %v426 = vpop.f32.mrb[0].mxu0
  %427 = vmatprep.mubr.f32.mxu0 0.0
  %428 = vmatmul.mubr.f32.gmra.mrb[0].mxu0 %v84
  %v429 = vpop.f32.mrb[0].mxu0
  %v430 = vadd.f32 %v121, %v429
  %v431 = vpop.f32.mrb[0].mxu0
  %432 = vmatprep.mubr.f32.mxu0 0.0
  %433 = vmatmul.mubr.f32.gmra.mrb[0].mxu0 %v85
  %v434 = vpop.f32.mrb[0].mxu0
  %v435 = vadd.f32 %v121, %v434
  %v436 = vpop.f32.mrb[0].mxu0
  %437 = vmatprep.mubr.f32.mxu0 0.0
  %438 = vmatmul.mubr.f32.gmra.mrb[0].mxu0 %v86
  %v439 = vpop.f32.mrb[0].mxu0
  %v440 = vadd.f32 %v121, %v439
  %v441 = vpop.f32.mrb[0].mxu0
  %442 = vmatprep.mubr.f32.mxu0 0.0
  %443 = vmatmul.mubr.f32.gmra.mrb[0].mxu0 %v87
  %v444 = vpop.f32.mrb[0].mxu0
  %v445 = vadd.f32 %v121, %v444
  %v446 = vpop.f32.mrb[0].mxu0
  %447 = vmatprep.mubr.f32.mxu0 0.0
  %448 = vmatmul.mubr.f32.gmra.mrb[0].mxu0 %v88
  %v449 = vpop.f32.mrb[0].mxu0
  %v450 = vadd.f32 %v121, %v449
  %v451 = vpop.f32.mrb[0].mxu0
  %452 = vmatprep.mubr.f32.mxu0 0.0
  %453 = vmatmul.mubr.f32.gmra.mrb[0].mxu0 %v89
  %v454 = vpop.f32.mrb[0].mxu0
  %v455 = vadd.f32 %v121, %v454
  %v456 = vpop.f32.mrb[0].mxu0
  %457 = vmatprep.mubr.f32.mxu0 0.0
  %458 = vmatmul.mubr.f32.gmra.mrb[0].mxu0 %v90
  %v459 = vpop.f32.mrb[0].mxu0
  %v460 = vadd.f32 %v121, %v459
  %v461 = vpop.f32.mrb[0].mxu0
  %462 = vmatprep.mubr.f32.mxu0 0.0
  %463 = vmatmul.mubr.f32.gmra.mrb[0].mxu0 %v91
  %v464 = vpop.f32.mrb[0].mxu0
  %v465 = vadd.f32 %v121, %v464
  %v466 = vpop.f32.mrb[0].mxu0
  %467 = vmatprep.mubr.f32.mxu0 0.0
  %468 = vmatmul.mubr.f32.gmra.mrb[0].mxu0 %v92
  %v469 = vpop.f32.mrb[0].mxu0
  %v470 = vadd.f32 %v121, %v469
  %v471 = vpop.f32.mrb[0].mxu0
  %472 = vmatprep.mubr.f32.mxu0 0.0
  %473 = vmatmul.mubr.f32.gmra.mrb[0].mxu0 %v93
  %v474 = vpop.f32.mrb[0].mxu0
  %v475 = vadd.f32 %v121, %v474
  %v476 = vpop.f32.mrb[0].mxu0
  %477 = vmatprep.mubr.f32.mxu0 0.0
  %478 = vmatmul.mubr.f32.gmra.mrb[0].mxu0 %v94
  %v479 = vpop.f32.mrb[0].mxu0
  %v480 = vadd.f32 %v121, %v479
  %v481 = vpop.f32.mrb[0].mxu0
  %482 = vmatprep.mubr.f32.mxu0 0.0
  %483 = vmatmul.mubr.f32.gmra.mrb[0].mxu0 %v95
  %v484 = vpop.f32.mrb[0].mxu0
  %v485 = vadd.f32 %v121, %v484
  %v486 = vpop.f32.mrb[0].mxu0
  %487 = vmatprep.mubr.f32.mxu0 0.0
  %488 = vmatmul.mubr.f32.gmra.mrb[0].mxu0 %v96
  %v489 = vpop.f32.mrb[0].mxu0
  %v490 = vadd.f32 %v121, %v489
  %v491 = vpop.f32.mrb[0].mxu0
  %492 = vmatprep.mubr.f32.mxu0 0.0
  %493 = vmatmul.mubr.f32.gmra.mrb[0].mxu0 %v97
  %v494 = vpop.f32.mrb[0].mxu0
  %v495 = vadd.f32 %v121, %v494
  %v496 = vpop.f32.mrb[0].mxu0
  %497 = vmatprep.mubr.f32.mxu0 0.0
  %498 = vmatmul.mubr.f32.gmra.mrb[0].mxu0 %v98
  %v499 = vpop.f32.mrb[0].mxu0
  %v500 = vadd.f32 %v121, %v499
  %v501 = vpop.f32.mrb[0].mxu0
  %502 = vmatprep.mubr.f32.mxu0 0.0
  %503 = vmatmul.mubr.f32.gmra.mrb[0].mxu0 %v99
  %v504 = vpop.f32.mrb[0].mxu0
  %v505 = vadd.f32 %v121, %v504
  %v506 = vpop.f32.mrb[0].mxu0
  %507 = vdwg.mxu0
  %v508 = vmax.f32 %v190, 0.0
  %v509 = vmax.f32 %v195, 0.0
  %v510 = vmax.f32 %v200, 0.0
  %v511 = vmax.f32 %v205, 0.0
  %v512 = vmax.f32 %v210, 0.0
  %v513 = vmax.f32 %v215, 0.0
  %v514 = vmax.f32 %v220, 0.0
  %v515 = vmax.f32 %v225, 0.0
  %v516 = vmax.f32 %v230, 0.0
  %v517 = vmax.f32 %v235, 0.0
  %v518 = vmax.f32 %v240, 0.0
  %v519 = vmax.f32 %v245, 0.0
  %v520 = vmax.f32 %v250, 0.0
  %v521 = vmax.f32 %v255, 0.0
  %v522 = vmax.f32 %v260, 0.0
  %v523 = vmax.f32 %v265, 0.0
  %v524 = vmax.f32 %v270, 0.0
  %v525 = vmax.f32 %v275, 0.0
  %v526 = vmax.f32 %v280, 0.0
  %v527 = vmax.f32 %v285, 0.0
  %v528 = vmax.f32 %v290, 0.0
  %v529 = vmax.f32 %v295, 0.0
  %v530 = vmax.f32 %v300, 0.0
  %v531 = vmax.f32 %v305, 0.0
  %v532 = vmax.f32 %v310, 0.0
  %v533 = vmax.f32 %v315, 0.0
  %v534 = vmax.f32 %v320, 0.0
  %v535 = vmax.f32 %v325, 0.0
  %v536 = vmax.f32 %v330, 0.0
  %v537 = vmax.f32 %v335, 0.0
  %v538 = vmax.f32 %v340, 0.0
  %v539 = vmax.f32 %v345, 0.0
  %v540 = vmax.f32 %v350, 0.0
  %v541 = vmax.f32 %v355, 0.0
  %v542 = vmax.f32 %v360, 0.0
  %v543 = vmax.f32 %v365, 0.0
  %v544 = vmax.f32 %v370, 0.0
  %v545 = vmax.f32 %v375, 0.0
  %v546 = vmax.f32 %v380, 0.0
  %v547 = vmax.f32 %v385, 0.0
  %v548 = vmax.f32 %v390, 0.0
  %v549 = vmax.f32 %v395, 0.0
  %v550 = vmax.f32 %v400, 0.0
  %v551 = vmax.f32 %v405, 0.0
  %v552 = vmax.f32 %v410, 0.0
  %v553 = vmax.f32 %v415, 0.0
  %v554 = vmax.f32 %v420, 0.0
  %v555 = vmax.f32 %v425, 0.0
  %v556 = vmax.f32 %v430, 0.0
  %v557 = vmax.f32 %v435, 0.0
  %v558 = vmax.f32 %v440, 0.0
  %v559 = vmax.f32 %v445, 0.0
  %v560 = vmax.f32 %v450, 0.0
  %v561 = vmax.f32 %v455, 0.0
  %v562 = vmax.f32 %v460, 0.0
  %v563 = vmax.f32 %v465, 0.0
  %v564 = vmax.f32 %v470, 0.0
  %v565 = vmax.f32 %v475, 0.0
  %v566 = vmax.f32 %v480, 0.0
  %v567 = vmax.f32 %v485, 0.0
  %v568 = vmax.f32 %v490, 0.0
  %v569 = vmax.f32 %v495, 0.0
  %v570 = vmax.f32 %v500, 0.0
  %v571 = vmax.f32 %v505, 0.0
  %v572 = vlaneseq
  %v573 = vshrl.u32 %v572, 7
  %v574 = vadd.s32 %v573, 8
  %v575 = vadd.s32 %v573, 16
  %v576 = vadd.s32 %v573, 24
  %v577 = vadd.s32 %v573, 32
  %v578 = vadd.s32 %v573, 40
  %v579 = vadd.s32 %v573, 48
  %v580 = vadd.s32 %v573, 56
  %v581 = vadd.s32 %v573, 64
  %v582 = vadd.s32 %v573, 72
  %v583 = vadd.s32 %v573, 80
  %v584 = vadd.s32 %v573, 88
  %v585 = vadd.s32 %v573, 96
  %v586 = vadd.s32 %v573, 104
  %v587 = vadd.s32 %v573, 112
  %v588 = vadd.s32 %v573, 120
  %v589 = vadd.s32 %v573, 128
  %v590 = vadd.s32 %v573, 136
  %v591 = vadd.s32 %v573, 144
  %v592 = vadd.s32 %v573, 152
  %v593 = vadd.s32 %v573, 160
  %v594 = vadd.s32 %v573, 168
  %v595 = vadd.s32 %v573, 176
  %v596 = vadd.s32 %v573, 184
  %v597 = vadd.s32 %v573, 192
  %v598 = vadd.s32 %v573, 200
  %v599 = vadd.s32 %v573, 208
  %v600 = vadd.s32 %v573, 216
  %v601 = vadd.s32 %v573, 224
  %v602 = vadd.s32 %v573, 232
  %v603 = vadd.s32 %v573, 240
  %v604 = vadd.s32 %v573, 248
  %v605 = vadd.s32 %v573, 256
  %v606 = vadd.s32 %v573, 264
  %v607 = vadd.s32 %v573, 272
  %v608 = vadd.s32 %v573, 280
  %v609 = vadd.s32 %v573, 288
  %v610 = vadd.s32 %v573, 296
  %v611 = vadd.s32 %v573, 304
  %v612 = vadd.s32 %v573, 312
  %v613 = vadd.s32 %v573, 320
  %v614 = vadd.s32 %v573, 328
  %v615 = vadd.s32 %v573, 336
  %v616 = vadd.s32 %v573, 344
  %v617 = vadd.s32 %v573, 352
  %v618 = vadd.s32 %v573, 360
  %v619 = vadd.s32 %v573, 368
  %v620 = vadd.s32 %v573, 376
  %v621 = vadd.s32 %v573, 384
  %v622 = vadd.s32 %v573, 392
  %v623 = vadd.s32 %v573, 400
  %v624 = vadd.s32 %v573, 408
  %v625 = vadd.s32 %v573, 416
  %v626 = vadd.s32 %v573, 424
  %v627 = vadd.s32 %v573, 432
  %v628 = vadd.s32 %v573, 440
  %v629 = vadd.s32 %v573, 448
  %v630 = vadd.s32 %v573, 456
  %v631 = vadd.s32 %v573, 464
  %v632 = vadd.s32 %v573, 472
  %v633 = vadd.s32 %v573, 480
  %v634 = vadd.s32 %v573, 488
  %v635 = vadd.s32 %v573, 496
  %v636 = vadd.s32 %v573, 504
  %vm637 = vcmp.lt.s32.totalorder %v573, 512
  %vm638 = vcmp.lt.s32.totalorder %v574, 512
  %vm639 = vcmp.lt.s32.totalorder %v575, 512
  %vm640 = vcmp.lt.s32.totalorder %v576, 512
  %vm641 = vcmp.lt.s32.totalorder %v577, 512
  %vm642 = vcmp.lt.s32.totalorder %v578, 512
  %vm643 = vcmp.lt.s32.totalorder %v579, 512
  %vm644 = vcmp.lt.s32.totalorder %v580, 512
  %vm645 = vcmp.lt.s32.totalorder %v581, 512
  %vm646 = vcmp.lt.s32.totalorder %v582, 512
  %vm647 = vcmp.lt.s32.totalorder %v583, 512
  %vm648 = vcmp.lt.s32.totalorder %v584, 512
  %vm649 = vcmp.lt.s32.totalorder %v585, 512
  %vm650 = vcmp.lt.s32.totalorder %v586, 512
  %vm651 = vcmp.lt.s32.totalorder %v587, 512
  %vm652 = vcmp.lt.s32.totalorder %v588, 512
  %vm653 = vcmp.lt.s32.totalorder %v589, 512
  %vm654 = vcmp.lt.s32.totalorder %v590, 512
  %vm655 = vcmp.lt.s32.totalorder %v591, 512
  %vm656 = vcmp.lt.s32.totalorder %v592, 512
  %vm657 = vcmp.lt.s32.totalorder %v593, 512
  %vm658 = vcmp.lt.s32.totalorder %v594, 512
  %vm659 = vcmp.lt.s32.totalorder %v595, 512
  %vm660 = vcmp.lt.s32.totalorder %v596, 512
  %vm661 = vcmp.lt.s32.totalorder %v597, 512
  %vm662 = vcmp.lt.s32.totalorder %v598, 512
  %vm663 = vcmp.lt.s32.totalorder %v599, 512
  %vm664 = vcmp.lt.s32.totalorder %v600, 512
  %vm665 = vcmp.lt.s32.totalorder %v601, 512
  %vm666 = vcmp.lt.s32.totalorder %v602, 512
  %vm667 = vcmp.lt.s32.totalorder %v603, 512
  %vm668 = vcmp.lt.s32.totalorder %v604, 512
  %vm669 = vcmp.lt.s32.totalorder %v605, 512
  %vm670 = vcmp.lt.s32.totalorder %v606, 512
  %vm671 = vcmp.lt.s32.totalorder %v607, 512
  %vm672 = vcmp.lt.s32.totalorder %v608, 512
  %vm673 = vcmp.lt.s32.totalorder %v609, 512
  %vm674 = vcmp.lt.s32.totalorder %v610, 512
  %vm675 = vcmp.lt.s32.totalorder %v611, 512
  %vm676 = vcmp.lt.s32.totalorder %v612, 512
  %vm677 = vcmp.lt.s32.totalorder %v613, 512
  %vm678 = vcmp.lt.s32.totalorder %v614, 512
  %vm679 = vcmp.lt.s32.totalorder %v615, 512
  %vm680 = vcmp.lt.s32.totalorder %v616, 512
  %vm681 = vcmp.lt.s32.totalorder %v617, 512
  %vm682 = vcmp.lt.s32.totalorder %v618, 512
  %vm683 = vcmp.lt.s32.totalorder %v619, 512
  %vm684 = vcmp.lt.s32.totalorder %v620, 512
  %vm685 = vcmp.lt.s32.totalorder %v621, 512
  %vm686 = vcmp.lt.s32.totalorder %v622, 512
  %vm687 = vcmp.lt.s32.totalorder %v623, 512
  %vm688 = vcmp.lt.s32.totalorder %v624, 512
  %vm689 = vcmp.lt.s32.totalorder %v625, 512
  %vm690 = vcmp.lt.s32.totalorder %v626, 512
  %vm691 = vcmp.lt.s32.totalorder %v627, 512
  %vm692 = vcmp.lt.s32.totalorder %v628, 512
  %vm693 = vcmp.lt.s32.totalorder %v629, 512
  %vm694 = vcmp.lt.s32.totalorder %v630, 512
  %vm695 = vcmp.lt.s32.totalorder %v631, 512
  %vm696 = vcmp.lt.s32.totalorder %v632, 512
  %vm697 = vcmp.lt.s32.totalorder %v633, 512
  %vm698 = vcmp.lt.s32.totalorder %v634, 512
  %vm699 = vcmp.lt.s32.totalorder %v635, 512
  %vm700 = vcmp.lt.s32.totalorder %v636, 512
  %v701 = vsel %vm637, %v508, 0.0
  %v702 = vsel %vm638, %v509, 0.0
  %v703 = vsel %vm639, %v510, 0.0
  %v704 = vsel %vm640, %v511, 0.0
  %v705 = vsel %vm641, %v512, 0.0
  %v706 = vsel %vm642, %v513, 0.0
  %v707 = vsel %vm643, %v514, 0.0
  %v708 = vsel %vm644, %v515, 0.0
  %v709 = vsel %vm645, %v516, 0.0
  %v710 = vsel %vm646, %v517, 0.0
  %v711 = vsel %vm647, %v518, 0.0
  %v712 = vsel %vm648, %v519, 0.0
  %v713 = vsel %vm649, %v520, 0.0
  %v714 = vsel %vm650, %v521, 0.0
  %v715 = vsel %vm651, %v522, 0.0
  %v716 = vsel %vm652, %v523, 0.0
  %v717 = vsel %vm653, %v524, 0.0
  %v718 = vsel %vm654, %v525, 0.0
  %v719 = vsel %vm655, %v526, 0.0
  %v720 = vsel %vm656, %v527, 0.0
  %v721 = vsel %vm657, %v528, 0.0
  %v722 = vsel %vm658, %v529, 0.0
  %v723 = vsel %vm659, %v530, 0.0
  %v724 = vsel %vm660, %v531, 0.0
  %v725 = vsel %vm661, %v532, 0.0
  %v726 = vsel %vm662, %v533, 0.0
  %v727 = vsel %vm663, %v534, 0.0
  %v728 = vsel %vm664, %v535, 0.0
  %v729 = vsel %vm665, %v536, 0.0
  %v730 = vsel %vm666, %v537, 0.0
  %v731 = vsel %vm667, %v538, 0.0
  %v732 = vsel %vm668, %v539, 0.0
  %v733 = vsel %vm669, %v540, 0.0
  %v734 = vsel %vm670, %v541, 0.0
  %v735 = vsel %vm671, %v542, 0.0
  %v736 = vsel %vm672, %v543, 0.0
  %v737 = vsel %vm673, %v544, 0.0
  %v738 = vsel %vm674, %v545, 0.0
  %v739 = vsel %vm675, %v546, 0.0
  %v740 = vsel %vm676, %v547, 0.0
  %v741 = vsel %vm677, %v548, 0.0
  %v742 = vsel %vm678, %v549, 0.0
  %v743 = vsel %vm679, %v550, 0.0
  %v744 = vsel %vm680, %v551, 0.0
  %v745 = vsel %vm681, %v552, 0.0
  %v746 = vsel %vm682, %v553, 0.0
  %v747 = vsel %vm683, %v554, 0.0
  %v748 = vsel %vm684, %v555, 0.0
  %v749 = vsel %vm685, %v556, 0.0
  %v750 = vsel %vm686, %v557, 0.0
  %v751 = vsel %vm687, %v558, 0.0
  %v752 = vsel %vm688, %v559, 0.0
  %v753 = vsel %vm689, %v560, 0.0
  %v754 = vsel %vm690, %v561, 0.0
  %v755 = vsel %vm691, %v562, 0.0
  %v756 = vsel %vm692, %v563, 0.0
  %v757 = vsel %vm693, %v564, 0.0
  %v758 = vsel %vm694, %v565, 0.0
  %v759 = vsel %vm695, %v566, 0.0
  %v760 = vsel %vm696, %v567, 0.0
  %v761 = vsel %vm697, %v568, 0.0
  %v762 = vsel %vm698, %v569, 0.0
  %v763 = vsel %vm699, %v570, 0.0
  %v764 = vsel %vm700, %v571, 0.0
  %765 = vst [vmem:[#allocation2] sm:$0xff] %v701
  %766 = vst [vmem:[#allocation2 + $0x8] sm:$0xff] %v702
  %767 = vst [vmem:[#allocation2 + $0x10] sm:$0xff] %v703
  %768 = vst [vmem:[#allocation2 + $0x18] sm:$0xff] %v704
  %769 = vst [vmem:[#allocation2 + $0x20] sm:$0xff] %v705
  %770 = vst [vmem:[#allocation2 + $0x28] sm:$0xff] %v706
  %771 = vst [vmem:[#allocation2 + $0x30] sm:$0xff] %v707
  %772 = vst [vmem:[#allocation2 + $0x38] sm:$0xff] %v708
  %773 = vst [vmem:[#allocation2 + $0x40] sm:$0xff] %v709
  %774 = vst [vmem:[#allocation2 + $0x48] sm:$0xff] %v710
  %775 = vst [vmem:[#allocation2 + $0x50] sm:$0xff] %v711
  %776 = vst [vmem:[#allocation2 + $0x58] sm:$0xff] %v712
  %777 = vst [vmem:[#allocation2 + $0x60] sm:$0xff] %v713
  %778 = vst [vmem:[#allocation2 + $0x68] sm:$0xff] %v714
  %779 = vst [vmem:[#allocation2 + $0x70] sm:$0xff] %v715
  %780 = vst [vmem:[#allocation2 + $0x78] sm:$0xff] %v716
  %781 = vst [vmem:[#allocation2 + $0x80] sm:$0xff] %v717
  %782 = vst [vmem:[#allocation2 + $0x88] sm:$0xff] %v718
  %783 = vst [vmem:[#allocation2 + $0x90] sm:$0xff] %v719
  %784 = vst [vmem:[#allocation2 + $0x98] sm:$0xff] %v720
  %785 = vst [vmem:[#allocation2 + $0xa0] sm:$0xff] %v721
  %786 = vst [vmem:[#allocation2 + $0xa8] sm:$0xff] %v722
  %787 = vst [vmem:[#allocation2 + $0xb0] sm:$0xff] %v723
  %788 = vst [vmem:[#allocation2 + $0xb8] sm:$0xff] %v724
  %789 = vst [vmem:[#allocation2 + $0xc0] sm:$0xff] %v725
  %790 = vst [vmem:[#allocation2 + $0xc8] sm:$0xff] %v726
  %791 = vst [vmem:[#allocation2 + $0xd0] sm:$0xff] %v727
  %792 = vst [vmem:[#allocation2 + $0xd8] sm:$0xff] %v728
  %793 = vst [vmem:[#allocation2 + $0xe0] sm:$0xff] %v729
  %794 = vst [vmem:[#allocation2 + $0xe8] sm:$0xff] %v730
  %795 = vst [vmem:[#allocation2 + $0xf0] sm:$0xff] %v731
  %796 = vst [vmem:[#allocation2 + $0xf8] sm:$0xff] %v732
  %797 = vst [vmem:[#allocation2 + $0x100] sm:$0xff] %v733
  %798 = vst [vmem:[#allocation2 + $0x108] sm:$0xff] %v734
  %799 = vst [vmem:[#allocation2 + $0x110] sm:$0xff] %v735
  %800 = vst [vmem:[#allocation2 + $0x118] sm:$0xff] %v736
  %801 = vst [vmem:[#allocation2 + $0x120] sm:$0xff] %v737
  %802 = vst [vmem:[#allocation2 + $0x128] sm:$0xff] %v738
  %803 = vst [vmem:[#allocation2 + $0x130] sm:$0xff] %v739
  %804 = vst [vmem:[#allocation2 + $0x138] sm:$0xff] %v740
  %805 = vst [vmem:[#allocation2 + $0x140] sm:$0xff] %v741
  %806 = vst [vmem:[#allocation2 + $0x148] sm:$0xff] %v742
  %807 = vst [vmem:[#allocation2 + $0x150] sm:$0xff] %v743
  %808 = vst [vmem:[#allocation2 + $0x158] sm:$0xff] %v744
  %809 = vst [vmem:[#allocation2 + $0x160] sm:$0xff] %v745
  %810 = vst [vmem:[#allocation2 + $0x168] sm:$0xff] %v746
  %811 = vst [vmem:[#allocation2 + $0x170] sm:$0xff] %v747
  %812 = vst [vmem:[#allocation2 + $0x178] sm:$0xff] %v748
  %813 = vst [vmem:[#allocation2 + $0x180] sm:$0xff] %v749
  %814 = vst [vmem:[#allocation2 + $0x188] sm:$0xff] %v750
  %815 = vst [vmem:[#allocation2 + $0x190] sm:$0xff] %v751
  %816 = vst [vmem:[#allocation2 + $0x198] sm:$0xff] %v752
  %817 = vst [vmem:[#allocation2 + $0x1a0] sm:$0xff] %v753
  %818 = vst [vmem:[#allocation2 + $0x1a8] sm:$0xff] %v754
  %819 = vst [vmem:[#allocation2 + $0x1b0] sm:$0xff] %v755
  %820 = vst [vmem:[#allocation2 + $0x1b8] sm:$0xff] %v756
  %821 = vst [vmem:[#allocation2 + $0x1c0] sm:$0xff] %v757
  %822 = vst [vmem:[#allocation2 + $0x1c8] sm:$0xff] %v758
  %823 = vst [vmem:[#allocation2 + $0x1d0] sm:$0xff] %v759
  %824 = vst [vmem:[#allocation2 + $0x1d8] sm:$0xff] %v760
  %825 = vst [vmem:[#allocation2 + $0x1e0] sm:$0xff] %v761
  %826 = vst [vmem:[#allocation2 + $0x1e8] sm:$0xff] %v762
  %827 = vst [vmem:[#allocation2 + $0x1f0] sm:$0xff] %v763
  %828 = vst [vmem:[#allocation2 + $0x1f8] sm:$0xff] %v764
  %829 = vst [vmem:[#allocation3] sm:$0xff] %v701
  %830 = vst [vmem:[#allocation3 + $0x8] sm:$0xff] %v702
  %831 = vst [vmem:[#allocation3 + $0x10] sm:$0xff] %v703
  %832 = vst [vmem:[#allocation3 + $0x18] sm:$0xff] %v704
  %833 = vst [vmem:[#allocation3 + $0x20] sm:$0xff] %v705
  %834 = vst [vmem:[#allocation3 + $0x28] sm:$0xff] %v706
  %835 = vst [vmem:[#allocation3 + $0x30] sm:$0xff] %v707
  %836 = vst [vmem:[#allocation3 + $0x38] sm:$0xff] %v708
  %837 = vst [vmem:[#allocation3 + $0x40] sm:$0xff] %v709
  %838 = vst [vmem:[#allocation3 + $0x48] sm:$0xff] %v710
  %839 = vst [vmem:[#allocation3 + $0x50] sm:$0xff] %v711
  %840 = vst [vmem:[#allocation3 + $0x58] sm:$0xff] %v712
  %841 = vst [vmem:[#allocation3 + $0x60] sm:$0xff] %v713
  %842 = vst [vmem:[#allocation3 + $0x68] sm:$0xff] %v714
  %843 = vst [vmem:[#allocation3 + $0x70] sm:$0xff] %v715
  %844 = vst [vmem:[#allocation3 + $0x78] sm:$0xff] %v716
  %845 = vst [vmem:[#allocation3 + $0x80] sm:$0xff] %v717
  %846 = vst [vmem:[#allocation3 + $0x88] sm:$0xff] %v718
  %847 = vst [vmem:[#allocation3 + $0x90] sm:$0xff] %v719
  %848 = vst [vmem:[#allocation3 + $0x98] sm:$0xff] %v720
  %849 = vst [vmem:[#allocation3 + $0xa0] sm:$0xff] %v721
  %850 = vst [vmem:[#allocation3 + $0xa8] sm:$0xff] %v722
  %851 = vst [vmem:[#allocation3 + $0xb0] sm:$0xff] %v723
  %852 = vst [vmem:[#allocation3 + $0xb8] sm:$0xff] %v724
  %853 = vst [vmem:[#allocation3 + $0xc0] sm:$0xff] %v725
  %854 = vst [vmem:[#allocation3 + $0xc8] sm:$0xff] %v726
  %855 = vst [vmem:[#allocation3 + $0xd0] sm:$0xff] %v727
  %856 = vst [vmem:[#allocation3 + $0xd8] sm:$0xff] %v728
  %857 = vst [vmem:[#allocation3 + $0xe0] sm:$0xff] %v729
  %858 = vst [vmem:[#allocation3 + $0xe8] sm:$0xff] %v730
  %859 = vst [vmem:[#allocation3 + $0xf0] sm:$0xff] %v731
  %860 = vst [vmem:[#allocation3 + $0xf8] sm:$0xff] %v732
  %861 = vst [vmem:[#allocation3 + $0x100] sm:$0xff] %v733
  %862 = vst [vmem:[#allocation3 + $0x108] sm:$0xff] %v734
  %863 = vst [vmem:[#allocation3 + $0x110] sm:$0xff] %v735
  %864 = vst [vmem:[#allocation3 + $0x118] sm:$0xff] %v736
  %865 = vst [vmem:[#allocation3 + $0x120] sm:$0xff] %v737
  %866 = vst [vmem:[#allocation3 + $0x128] sm:$0xff] %v738
  %867 = vst [vmem:[#allocation3 + $0x130] sm:$0xff] %v739
  %868 = vst [vmem:[#allocation3 + $0x138] sm:$0xff] %v740
  %869 = vst [vmem:[#allocation3 + $0x140] sm:$0xff] %v741
  %870 = vst [vmem:[#allocation3 + $0x148] sm:$0xff] %v742
  %871 = vst [vmem:[#allocation3 + $0x150] sm:$0xff] %v743
  %872 = vst [vmem:[#allocation3 + $0x158] sm:$0xff] %v744
  %873 = vst [vmem:[#allocation3 + $0x160] sm:$0xff] %v745
  %874 = vst [vmem:[#allocation3 + $0x168] sm:$0xff] %v746
  %875 = vst [vmem:[#allocation3 + $0x170] sm:$0xff] %v747
  %876 = vst [vmem:[#allocation3 + $0x178] sm:$0xff] %v748
  %877 = vst [vmem:[#allocation3 + $0x180] sm:$0xff] %v749
  %878 = vst [vmem:[#allocation3 + $0x188] sm:$0xff] %v750
  %879 = vst [vmem:[#allocation3 + $0x190] sm:$0xff] %v751
  %880 = vst [vmem:[#allocation3 + $0x198] sm:$0xff] %v752
  %881 = vst [vmem:[#allocation3 + $0x1a0] sm:$0xff] %v753
  %882 = vst [vmem:[#allocation3 + $0x1a8] sm:$0xff] %v754
  %883 = vst [vmem:[#allocation3 + $0x1b0] sm:$0xff] %v755
  %884 = vst [vmem:[#allocation3 + $0x1b8] sm:$0xff] %v756
  %885 = vst [vmem:[#allocation3 + $0x1c0] sm:$0xff] %v757
  %886 = vst [vmem:[#allocation3 + $0x1c8] sm:$0xff] %v758
  %887 = vst [vmem:[#allocation3 + $0x1d0] sm:$0xff] %v759
  %888 = vst [vmem:[#allocation3 + $0x1d8] sm:$0xff] %v760
  %889 = vst [vmem:[#allocation3 + $0x1e0] sm:$0xff] %v761
  %890 = vst [vmem:[#allocation3 + $0x1e8] sm:$0xff] %v762
  %891 = vst [vmem:[#allocation3 + $0x1f0] sm:$0xff] %v763
  %892 = vst [vmem:[#allocation3 + $0x1f8] sm:$0xff] %v764
  loop: start=0, step=1, limit=3
  $region42: #{graphcon_gcn_forward.1} parent=0 // loop_pre_header
    _
  $region43: #{graphcon_gcn_forward.1} parent=0 // loop_header
    %s894 = sphi 0, %s898
    %p895 = scmp.ge.s32.totalorder %s894, 3
  $region44: #{graphcon_gcn_forward.1} parent=0 // loop_header_branch
    %897 = sbr.rel (%p895) target = $region48
  $region45: #{graphcon_gcn_forward.1} parent=0 // loop_body
    %v899 = vld [vmem:[#allocation2] sm:$0xff]
    %v900 = vld [vmem:[#allocation2 + $0x8] sm:$0xff]
    %v901 = vld [vmem:[#allocation2 + $0x10] sm:$0xff]
    %v902 = vld [vmem:[#allocation2 + $0x18] sm:$0xff]
    %v903 = vld [vmem:[#allocation2 + $0x20] sm:$0xff]
    %v904 = vld [vmem:[#allocation2 + $0x28] sm:$0xff]
    %v905 = vld [vmem:[#allocation2 + $0x30] sm:$0xff]
    %v906 = vld [vmem:[#allocation2 + $0x38] sm:$0xff]
    %v907 = vld [vmem:[#allocation2 + $0x40] sm:$0xff]
    %v908 = vld [vmem:[#allocation2 + $0x48] sm:$0xff]
    %v909 = vld [vmem:[#allocation2 + $0x50] sm:$0xff]
    %v910 = vld [vmem:[#allocation2 + $0x58] sm:$0xff]
    %v911 = vld [vmem:[#allocation2 + $0x60] sm:$0xff]
    %v912 = vld [vmem:[#allocation2 + $0x68] sm:$0xff]
    %v913 = vld [vmem:[#allocation2 + $0x70] sm:$0xff]
    %v914 = vld [vmem:[#allocation2 + $0x78] sm:$0xff]
    %v915 = vld [vmem:[#allocation2 + $0x80] sm:$0xff]
    %v916 = vld [vmem:[#allocation2 + $0x88] sm:$0xff]
    %v917 = vld [vmem:[#allocation2 + $0x90] sm:$0xff]
    %v918 = vld [vmem:[#allocation2 + $0x98] sm:$0xff]
    %v919 = vld [vmem:[#allocation2 + $0xa0] sm:$0xff]
    %v920 = vld [vmem:[#allocation2 + $0xa8] sm:$0xff]
    %v921 = vld [vmem:[#allocation2 + $0xb0] sm:$0xff]
    %v922 = vld [vmem:[#allocation2 + $0xb8] sm:$0xff]
    %v923 = vld [vmem:[#allocation2 + $0xc0] sm:$0xff]
    %v924 = vld [vmem:[#allocation2 + $0xc8] sm:$0xff]
    %v925 = vld [vmem:[#allocation2 + $0xd0] sm:$0xff]
    %v926 = vld [vmem:[#allocation2 + $0xd8] sm:$0xff]
    %v927 = vld [vmem:[#allocation2 + $0xe0] sm:$0xff]
    %v928 = vld [vmem:[#allocation2 + $0xe8] sm:$0xff]
    %v929 = vld [vmem:[#allocation2 + $0xf0] sm:$0xff]
    %v930 = vld [vmem:[#allocation2 + $0xf8] sm:$0xff]
    %v931 = vld [vmem:[#allocation2 + $0x100] sm:$0xff]
    %v932 = vld [vmem:[#allocation2 + $0x108] sm:$0xff]
    %v933 = vld [vmem:[#allocation2 + $0x110] sm:$0xff]
    %v934 = vld [vmem:[#allocation2 + $0x118] sm:$0xff]
    %v935 = vld [vmem:[#allocation2 + $0x120] sm:$0xff]
    %v936 = vld [vmem:[#allocation2 + $0x128] sm:$0xff]
    %v937 = vld [vmem:[#allocation2 + $0x130] sm:$0xff]
    %v938 = vld [vmem:[#allocation2 + $0x138] sm:$0xff]
    %v939 = vld [vmem:[#allocation2 + $0x140] sm:$0xff]
    %v940 = vld [vmem:[#allocation2 + $0x148] sm:$0xff]
    %v941 = vld [vmem:[#allocation2 + $0x150] sm:$0xff]
    %v942 = vld [vmem:[#allocation2 + $0x158] sm:$0xff]
    %v943 = vld [vmem:[#allocation2 + $0x160] sm:$0xff]
    %v944 = vld [vmem:[#allocation2 + $0x168] sm:$0xff]
    %v945 = vld [vmem:[#allocation2 + $0x170] sm:$0xff]
    %v946 = vld [vmem:[#allocation2 + $0x178] sm:$0xff]
    %v947 = vld [vmem:[#allocation2 + $0x180] sm:$0xff]
    %v948 = vld [vmem:[#allocation2 + $0x188] sm:$0xff]
    %v949 = vld [vmem:[#allocation2 + $0x190] sm:$0xff]
    %v950 = vld [vmem:[#allocation2 + $0x198] sm:$0xff]
    %v951 = vld [vmem:[#allocation2 + $0x1a0] sm:$0xff]
    %v952 = vld [vmem:[#allocation2 + $0x1a8] sm:$0xff]
    %v953 = vld [vmem:[#allocation2 + $0x1b0] sm:$0xff]
    %v954 = vld [vmem:[#allocation2 + $0x1b8] sm:$0xff]
    %v955 = vld [vmem:[#allocation2 + $0x1c0] sm:$0xff]
    %v956 = vld [vmem:[#allocation2 + $0x1c8] sm:$0xff]
    %v957 = vld [vmem:[#allocation2 + $0x1d0] sm:$0xff]
    %v958 = vld [vmem:[#allocation2 + $0x1d8] sm:$0xff]
    %v959 = vld [vmem:[#allocation2 + $0x1e0] sm:$0xff]
    %v960 = vld [vmem:[#allocation2 + $0x1e8] sm:$0xff]
    %v961 = vld [vmem:[#allocation2 + $0x1f0] sm:$0xff]
    %v962 = vld [vmem:[#allocation2 + $0x1f8] sm:$0xff]
    %v963 = vld [vmem:[#allocation3] sm:$0xff]
    %v964 = vld [vmem:[#allocation3 + $0x8] sm:$0xff]
    %v965 = vld [vmem:[#allocation3 + $0x10] sm:$0xff]
    %v966 = vld [vmem:[#allocation3 + $0x18] sm:$0xff]
    %v967 = vld [vmem:[#allocation3 + $0x20] sm:$0xff]
    %v968 = vld [vmem:[#allocation3 + $0x28] sm:$0xff]
    %v969 = vld [vmem:[#allocation3 + $0x30] sm:$0xff]
    %v970 = vld [vmem:[#allocation3 + $0x38] sm:$0xff]
    %v971 = vld [vmem:[#allocation3 + $0x40] sm:$0xff]
    %v972 = vld [vmem:[#allocation3 + $0x48] sm:$0xff]
    %v973 = vld [vmem:[#allocation3 + $0x50] sm:$0xff]
    %v974 = vld [vmem:[#allocation3 + $0x58] sm:$0xff]
    %v975 = vld [vmem:[#allocation3 + $0x60] sm:$0xff]
    %v976 = vld [vmem:[#allocation3 + $0x68] sm:$0xff]
    %v977 = vld [vmem:[#allocation3 + $0x70] sm:$0xff]
    %v978 = vld [vmem:[#allocation3 + $0x78] sm:$0xff]
    %v979 = vld [vmem:[#allocation3 + $0x80] sm:$0xff]
    %v980 = vld [vmem:[#allocation3 + $0x88] sm:$0xff]
    %v981 = vld [vmem:[#allocation3 + $0x90] sm:$0xff]
    %v982 = vld [vmem:[#allocation3 + $0x98] sm:$0xff]
    %v983 = vld [vmem:[#allocation3 + $0xa0] sm:$0xff]
    %v984 = vld [vmem:[#allocation3 + $0xa8] sm:$0xff]
    %v985 = vld [vmem:[#allocation3 + $0xb0] sm:$0xff]
    %v986 = vld [vmem:[#allocation3 + $0xb8] sm:$0xff]
    %v987 = vld [vmem:[#allocation3 + $0xc0] sm:$0xff]
    %v988 = vld [vmem:[#allocation3 + $0xc8] sm:$0xff]
    %v989 = vld [vmem:[#allocation3 + $0xd0] sm:$0xff]
    %v990 = vld [vmem:[#allocation3 + $0xd8] sm:$0xff]
    %v991 = vld [vmem:[#allocation3 + $0xe0] sm:$0xff]
    %v992 = vld [vmem:[#allocation3 + $0xe8] sm:$0xff]
    %v993 = vld [vmem:[#allocation3 + $0xf0] sm:$0xff]
    %v994 = vld [vmem:[#allocation3 + $0xf8] sm:$0xff]
    %v995 = vld [vmem:[#allocation3 + $0x100] sm:$0xff]
    %v996 = vld [vmem:[#allocation3 + $0x108] sm:$0xff]
    %v997 = vld [vmem:[#allocation3 + $0x110] sm:$0xff]
    %v998 = vld [vmem:[#allocation3 + $0x118] sm:$0xff]
    %v999 = vld [vmem:[#allocation3 + $0x120] sm:$0xff]
    %v1000 = vld [vmem:[#allocation3 + $0x128] sm:$0xff]
    %v1001 = vld [vmem:[#allocation3 + $0x130] sm:$0xff]
    %v1002 = vld [vmem:[#allocation3 + $0x138] sm:$0xff]
    %v1003 = vld [vmem:[#allocation3 + $0x140] sm:$0xff]
    %v1004 = vld [vmem:[#allocation3 + $0x148] sm:$0xff]
    %v1005 = vld [vmem:[#allocation3 + $0x150] sm:$0xff]
    %v1006 = vld [vmem:[#allocation3 + $0x158] sm:$0xff]
    %v1007 = vld [vmem:[#allocation3 + $0x160] sm:$0xff]
    %v1008 = vld [vmem:[#allocation3 + $0x168] sm:$0xff]
    %v1009 = vld [vmem:[#allocation3 + $0x170] sm:$0xff]
    %v1010 = vld [vmem:[#allocation3 + $0x178] sm:$0xff]
    %v1011 = vld [vmem:[#allocation3 + $0x180] sm:$0xff]
    %v1012 = vld [vmem:[#allocation3 + $0x188] sm:$0xff]
    %v1013 = vld [vmem:[#allocation3 + $0x190] sm:$0xff]
    %v1014 = vld [vmem:[#allocation3 + $0x198] sm:$0xff]
    %v1015 = vld [vmem:[#allocation3 + $0x1a0] sm:$0xff]
    %v1016 = vld [vmem:[#allocation3 + $0x1a8] sm:$0xff]
    %v1017 = vld [vmem:[#allocation3 + $0x1b0] sm:$0xff]
    %v1018 = vld [vmem:[#allocation3 + $0x1b8] sm:$0xff]
    %v1019 = vld [vmem:[#allocation3 + $0x1c0] sm:$0xff]
    %v1020 = vld [vmem:[#allocation3 + $0x1c8] sm:$0xff]
    %v1021 = vld [vmem:[#allocation3 + $0x1d0] sm:$0xff]
    %v1022 = vld [vmem:[#allocation3 + $0x1d8] sm:$0xff]
    %v1023 = vld [vmem:[#allocation3 + $0x1e0] sm:$0xff]
    %v1024 = vld [vmem:[#allocation3 + $0x1e8] sm:$0xff]
    %v1025 = vld [vmem:[#allocation3 + $0x1f0] sm:$0xff]
    %v1026 = vld [vmem:[#allocation3 + $0x1f8] sm:$0xff]
    %v1027 = vld [vmem:[%s4] sm:$0xff]
    %v1028 = vld [vmem:[%s4 + $0x8] sm:$0xff]
    %v1029 = vld [vmem:[%s4 + $0x10] sm:$0xff]
    %v1030 = vld [vmem:[%s4 + $0x18] sm:$0xff]
    %v1031 = vld [vmem:[%s4 + $0x20] sm:$0xff]
    %v1032 = vld [vmem:[%s4 + $0x28] sm:$0xff]
    %v1033 = vld [vmem:[%s4 + $0x30] sm:$0xff]
    %v1034 = vld [vmem:[%s4 + $0x38] sm:$0xff]
    %v1035 = vld [vmem:[%s4 + $0x40] sm:$0xff]
    %v1036 = vld [vmem:[%s4 + $0x48] sm:$0xff]
    %v1037 = vld [vmem:[%s4 + $0x50] sm:$0xff]
    %v1038 = vld [vmem:[%s4 + $0x58] sm:$0xff]
    %v1039 = vld [vmem:[%s4 + $0x60] sm:$0xff]
    %v1040 = vld [vmem:[%s4 + $0x68] sm:$0xff]
    %v1041 = vld [vmem:[%s4 + $0x70] sm:$0xff]
    %v1042 = vld [vmem:[%s4 + $0x78] sm:$0xff]
    %1043 = vmatprep.subr.mxu0 0.0
    %1044 = vmatpush1.msra.mxu0 %v1027
    %1045 = vmatprep.subr.mxu0 0.0
    %1046 = vmatpush1.msra.mxu0 %v1028
    %1047 = vmatprep.subr.mxu0 0.0
    %1048 = vmatpush1.msra.mxu0 %v1029
    %1049 = vmatprep.subr.mxu0 0.0
    %1050 = vmatpush1.msra.mxu0 %v1030
    %1051 = vmatprep.subr.mxu0 0.0
    %1052 = vmatpush1.msra.mxu0 %v1031
    %1053 = vmatprep.subr.mxu0 0.0
    %1054 = vmatpush1.msra.mxu0 %v1032
    %1055 = vmatprep.subr.mxu0 0.0
    %1056 = vmatpush1.msra.mxu0 %v1033
    %1057 = vmatprep.subr.mxu0 0.0
    %1058 = vmatpush1.msra.mxu0 %v1034
    %1059 = vmatprep.subr.mxu0 0.0
    %1060 = vmatpush1.msra.mxu0 %v1035
    %1061 = vmatprep.subr.mxu0 0.0
    %1062 = vmatpush1.msra.mxu0 %v1036
    %1063 = vmatprep.subr.mxu0 0.0
    %1064 = vmatpush1.msra.mxu0 %v1037
    %1065 = vmatprep.subr.mxu0 0.0
    %1066 = vmatpush1.msra.mxu0 %v1038
    %1067 = vmatprep.subr.mxu0 0.0
    %1068 = vmatpush1.msra.mxu0 %v1039
    %1069 = vmatprep.subr.mxu0 0.0
    %1070 = vmatpush1.msra.mxu0 %v1040
    %1071 = vmatprep.subr.mxu0 0.0
    %1072 = vmatpush1.msra.mxu0 %v1041
    %1073 = vmatprep.subr.mxu0 0.0
    %1074 = vmatpush1.msra.mxu0 %v1042
    %1075 = vmatprep.subr.mxu0 0.0
    %1076 = vmatpush1.msra.mxu0 0.0
    %1077 = vmatprep.subr.mxu0 0.0
    %1078 = vmatpush1.msra.mxu0 0.0
    %1079 = vmatprep.subr.mxu0 0.0
    %1080 = vmatpush1.msra.mxu0 0.0
    %1081 = vmatprep.subr.mxu0 0.0
    %1082 = vmatpush1.msra.mxu0 0.0
    %1083 = vmatprep.subr.mxu0 0.0
    %1084 = vmatpush1.msra.mxu0 0.0
    %1085 = vmatprep.subr.mxu0 0.0
    %1086 = vmatpush1.msra.mxu0 0.0
    %1087 = vmatprep.subr.mxu0 0.0
    %1088 = vmatpush1.msra.mxu0 0.0
    %1089 = vmatprep.subr.mxu0 0.0
    %1090 = vmatpush1.msra.mxu0 0.0
    %1091 = vmatprep.subr.mxu0 0.0
    %1092 = vmatpush1.msra.mxu0 0.0
    %1093 = vmatprep.subr.mxu0 0.0
    %1094 = vmatpush1.msra.mxu0 0.0
    %1095 = vmatprep.subr.mxu0 0.0
    %1096 = vmatpush1.msra.mxu0 0.0
    %1097 = vmatprep.subr.mxu0 0.0
    %1098 = vmatpush1.msra.mxu0 0.0
    %1099 = vmatprep.subr.mxu0 0.0
    %1100 = vmatpush1.msra.mxu0 0.0
    %1101 = vmatprep.subr.mxu0 0.0
    %1102 = vmatpush1.msra.mxu0 0.0
    %1103 = vmatprep.subr.mxu0 0.0
    %1104 = vmatpush1.msra.mxu0 0.0
    %1105 = vmatprep.subr.mxu0 0.0
    %1106 = vmatpush1.msra.mxu0 0.0
    %1107 = vmatprep.mubr.f32.mxu0 0.0
    %1108 = vmatmul.mubr.f32.gmra.mrb[0].mxu0 %v899
    %v1109 = vpop.f32.mrb[0].mxu0
    %v1110 = vadd.f32 0.0, %v1109
    %v1111 = vpop.f32.mrb[0].mxu0
    %1112 = vmatprep.mubr.f32.mxu0 0.0
    %1113 = vmatmul.mubr.f32.gmra.mrb[0].mxu0 %v900
    %v1114 = vpop.f32.mrb[0].mxu0
    %v1115 = vadd.f32 0.0, %v1114
    %v1116 = vpop.f32.mrb[0].mxu0
    %1117 = vmatprep.mubr.f32.mxu0 0.0
    %1118 = vmatmul.mubr.f32.gmra.mrb[0].mxu0 %v901
    %v1119 = vpop.f32.mrb[0].mxu0
    %v1120 = vadd.f32 0.0, %v1119
    %v1121 = vpop.f32.mrb[0].mxu0
    %1122 = vmatprep.mubr.f32.mxu0 0.0
    %1123 = vmatmul.mubr.f32.gmra.mrb[0].mxu0 %v902
    %v1124 = vpop.f32.mrb[0].mxu0
    %v1125 = vadd.f32 0.0, %v1124
    %v1126 = vpop.f32.mrb[0].mxu0
    %1127 = vmatprep.mubr.f32.mxu0 0.0
    %1128 = vmatmul.mubr.f32.gmra.mrb[0].mxu0 %v903
    %v1129 = vpop.f32.mrb[0].mxu0
    %v1130 = vadd.f32 0.0, %v1129
    %v1131 = vpop.f32.mrb[0].mxu0
    %1132 = vmatprep.mubr.f32.mxu0 0.0
    %1133 = vmatmul.mubr.f32.gmra.mrb[0].mxu0 %v904
    %v1134 = vpop.f32.mrb[0].mxu0
    %v1135 = vadd.f32 0.0, %v1134
    %v1136 = vpop.f32.mrb[0].mxu0
    %1137 = vmatprep.mubr.f32.mxu0 0.0
    %1138 = vmatmul.mubr.f32.gmra.mrb[0].mxu0 %v905
    %v1139 = vpop.f32.mrb[0].mxu0
    %v1140 = vadd.f32 0.0, %v1139
    %v1141 = vpop.f32.mrb[0].mxu0
    %1142 = vmatprep.mubr.f32.mxu0 0.0
    %1143 = vmatmul.mubr.f32.gmra.mrb[0].mxu0 %v906
    %v1144 = vpop.f32.mrb[0].mxu0
    %v1145 = vadd.f32 0.0, %v1144
    %v1146 = vpop.f32.mrb[0].mxu0
    %1147 = vmatprep.mubr.f32.mxu0 0.0
    %1148 = vmatmul.mubr.f32.gmra.mrb[0].mxu0 %v907
    %v1149 = vpop.f32.mrb[0].mxu0
    %v1150 = vadd.f32 0.0, %v1149
    %v1151 = vpop.f32.mrb[0].mxu0
    %1152 = vmatprep.mubr.f32.mxu0 0.0
    %1153 = vmatmul.mubr.f32.gmra.mrb[0].mxu0 %v908
    %v1154 = vpop.f32.mrb[0].mxu0
    %v1155 = vadd.f32 0.0, %v1154
    %v1156 = vpop.f32.mrb[0].mxu0
    %1157 = vmatprep.mubr.f32.mxu0 0.0
    %1158 = vmatmul.mubr.f32.gmra.mrb[0].mxu0 %v909
    %v1159 = vpop.f32.mrb[0].mxu0
    %v1160 = vadd.f32 0.0, %v1159
    %v1161 = vpop.f32.mrb[0].mxu0
    %1162 = vmatprep.mubr.f32.mxu0 0.0
    %1163 = vmatmul.mubr.f32.gmra.mrb[0].mxu0 %v910
    %v1164 = vpop.f32.mrb[0].mxu0
    %v1165 = vadd.f32 0.0, %v1164
    %v1166 = vpop.f32.mrb[0].mxu0
    %1167 = vmatprep.mubr.f32.mxu0 0.0
    %1168 = vmatmul.mubr.f32.gmra.mrb[0].mxu0 %v911
    %v1169 = vpop.f32.mrb[0].mxu0
    %v1170 = vadd.f32 0.0, %v1169
    %v1171 = vpop.f32.mrb[0].mxu0
    %1172 = vmatprep.mubr.f32.mxu0 0.0
    %1173 = vmatmul.mubr.f32.gmra.mrb[0].mxu0 %v912
    %v1174 = vpop.f32.mrb[0].mxu0
    %v1175 = vadd.f32 0.0, %v1174
    %v1176 = vpop.f32.mrb[0].mxu0
    %1177 = vmatprep.mubr.f32.mxu0 0.0
    %1178 = vmatmul.mubr.f32.gmra.mrb[0].mxu0 %v913
    %v1179 = vpop.f32.mrb[0].mxu0
    %v1180 = vadd.f32 0.0, %v1179
    %v1181 = vpop.f32.mrb[0].mxu0
    %1182 = vmatprep.mubr.f32.mxu0 0.0
    %1183 = vmatmul.mubr.f32.gmra.mrb[0].mxu0 %v914
    %v1184 = vpop.f32.mrb[0].mxu0
    %v1185 = vadd.f32 0.0, %v1184
    %v1186 = vpop.f32.mrb[0].mxu0
    %1187 = vmatprep.mubr.f32.mxu0 0.0
    %1188 = vmatmul.mubr.f32.gmra.mrb[0].mxu0 %v915
    %v1189 = vpop.f32.mrb[0].mxu0
    %v1190 = vadd.f32 0.0, %v1189
    %v1191 = vpop.f32.mrb[0].mxu0
    %1192 = vmatprep.mubr.f32.mxu0 0.0
    %1193 = vmatmul.mubr.f32.gmra.mrb[0].mxu0 %v916
    %v1194 = vpop.f32.mrb[0].mxu0
    %v1195 = vadd.f32 0.0, %v1194
    %v1196 = vpop.f32.mrb[0].mxu0
    %1197 = vmatprep.mubr.f32.mxu0 0.0
    %1198 = vmatmul.mubr.f32.gmra.mrb[0].mxu0 %v917
    %v1199 = vpop.f32.mrb[0].mxu0
    %v1200 = vadd.f32 0.0, %v1199
    %v1201 = vpop.f32.mrb[0].mxu0
    %1202 = vmatprep.mubr.f32.mxu0 0.0
    %1203 = vmatmul.mubr.f32.gmra.mrb[0].mxu0 %v918
    %v1204 = vpop.f32.mrb[0].mxu0
    %v1205 = vadd.f32 0.0, %v1204
    %v1206 = vpop.f32.mrb[0].mxu0
    %1207 = vmatprep.mubr.f32.mxu0 0.0
    %1208 = vmatmul.mubr.f32.gmra.mrb[0].mxu0 %v919
    %v1209 = vpop.f32.mrb[0].mxu0
    %v1210 = vadd.f32 0.0, %v1209
    %v1211 = vpop.f32.mrb[0].mxu0
    %1212 = vmatprep.mubr.f32.mxu0 0.0
    %1213 = vmatmul.mubr.f32.gmra.mrb[0].mxu0 %v920
    %v1214 = vpop.f32.mrb[0].mxu0
    %v1215 = vadd.f32 0.0, %v1214
    %v1216 = vpop.f32.mrb[0].mxu0
    %1217 = vmatprep.mubr.f32.mxu0 0.0
    %1218 = vmatmul.mubr.f32.gmra.mrb[0].mxu0 %v921
    %v1219 = vpop.f32.mrb[0].mxu0
    %v1220 = vadd.f32 0.0, %v1219
    %v1221 = vpop.f32.mrb[0].mxu0
    %1222 = vmatprep.mubr.f32.mxu0 0.0
    %1223 = vmatmul.mubr.f32.gmra.mrb[0].mxu0 %v922
    %v1224 = vpop.f32.mrb[0].mxu0
    %v1225 = vadd.f32 0.0, %v1224
    %v1226 = vpop.f32.mrb[0].mxu0
    %1227 = vmatprep.mubr.f32.mxu0 0.0
    %1228 = vmatmul.mubr.f32.gmra.mrb[0].mxu0 %v923
    %v1229 = vpop.f32.mrb[0].mxu0
    %v1230 = vadd.f32 0.0, %v1229
    %v1231 = vpop.f32.mrb[0].mxu0
    %1232 = vmatprep.mubr.f32.mxu0 0.0
    %1233 = vmatmul.mubr.f32.gmra.mrb[0].mxu0 %v924
    %v1234 = vpop.f32.mrb[0].mxu0
    %v1235 = vadd.f32 0.0, %v1234
    %v1236 = vpop.f32.mrb[0].mxu0
    %1237 = vmatprep.mubr.f32.mxu0 0.0
    %1238 = vmatmul.mubr.f32.gmra.mrb[0].mxu0 %v925
    %v1239 = vpop.f32.mrb[0].mxu0
    %v1240 = vadd.f32 0.0, %v1239
    %v1241 = vpop.f32.mrb[0].mxu0
    %1242 = vmatprep.mubr.f32.mxu0 0.0
    %1243 = vmatmul.mubr.f32.gmra.mrb[0].mxu0 %v926
    %v1244 = vpop.f32.mrb[0].mxu0
    %v1245 = vadd.f32 0.0, %v1244
    %v1246 = vpop.f32.mrb[0].mxu0
    %1247 = vmatprep.mubr.f32.mxu0 0.0
    %1248 = vmatmul.mubr.f32.gmra.mrb[0].mxu0 %v927
    %v1249 = vpop.f32.mrb[0].mxu0
    %v1250 = vadd.f32 0.0, %v1249
    %v1251 = vpop.f32.mrb[0].mxu0
    %1252 = vmatprep.mubr.f32.mxu0 0.0
    %1253 = vmatmul.mubr.f32.gmra.mrb[0].mxu0 %v928
    %v1254 = vpop.f32.mrb[0].mxu0
    %v1255 = vadd.f32 0.0, %v1254
    %v1256 = vpop.f32.mrb[0].mxu0
    %1257 = vmatprep.mubr.f32.mxu0 0.0
    %1258 = vmatmul.mubr.f32.gmra.mrb[0].mxu0 %v929
    %v1259 = vpop.f32.mrb[0].mxu0
    %v1260 = vadd.f32 0.0, %v1259
    %v1261 = vpop.f32.mrb[0].mxu0
    %1262 = vmatprep.mubr.f32.mxu0 0.0
    %1263 = vmatmul.mubr.f32.gmra.mrb[0].mxu0 %v930
    %v1264 = vpop.f32.mrb[0].mxu0
    %v1265 = vadd.f32 0.0, %v1264
    %v1266 = vpop.f32.mrb[0].mxu0
    %1267 = vmatprep.mubr.f32.mxu0 0.0
    %1268 = vmatmul.mubr.f32.gmra.mrb[0].mxu0 %v931
    %v1269 = vpop.f32.mrb[0].mxu0
    %v1270 = vadd.f32 0.0, %v1269
    %v1271 = vpop.f32.mrb[0].mxu0
    %1272 = vmatprep.mubr.f32.mxu0 0.0
    %1273 = vmatmul.mubr.f32.gmra.mrb[0].mxu0 %v932
    %v1274 = vpop.f32.mrb[0].mxu0
    %v1275 = vadd.f32 0.0, %v1274
    %v1276 = vpop.f32.mrb[0].mxu0
    %1277 = vmatprep.mubr.f32.mxu0 0.0
    %1278 = vmatmul.mubr.f32.gmra.mrb[0].mxu0 %v933
    %v1279 = vpop.f32.mrb[0].mxu0
    %v1280 = vadd.f32 0.0, %v1279
    %v1281 = vpop.f32.mrb[0].mxu0
    %1282 = vmatprep.mubr.f32.mxu0 0.0
    %1283 = vmatmul.mubr.f32.gmra.mrb[0].mxu0 %v934
    %v1284 = vpop.f32.mrb[0].mxu0
    %v1285 = vadd.f32 0.0, %v1284
    %v1286 = vpop.f32.mrb[0].mxu0
    %1287 = vmatprep.mubr.f32.mxu0 0.0
    %1288 = vmatmul.mubr.f32.gmra.mrb[0].mxu0 %v935
    %v1289 = vpop.f32.mrb[0].mxu0
    %v1290 = vadd.f32 0.0, %v1289
    %v1291 = vpop.f32.mrb[0].mxu0
    %1292 = vmatprep.mubr.f32.mxu0 0.0
    %1293 = vmatmul.mubr.f32.gmra.mrb[0].mxu0 %v936
    %v1294 = vpop.f32.mrb[0].mxu0
    %v1295 = vadd.f32 0.0, %v1294
    %v1296 = vpop.f32.mrb[0].mxu0
    %1297 = vmatprep.mubr.f32.mxu0 0.0
    %1298 = vmatmul.mubr.f32.gmra.mrb[0].mxu0 %v937
    %v1299 = vpop.f32.mrb[0].mxu0
    %v1300 = vadd.f32 0.0, %v1299
    %v1301 = vpop.f32.mrb[0].mxu0
    %1302 = vmatprep.mubr.f32.mxu0 0.0
    %1303 = vmatmul.mubr.f32.gmra.mrb[0].mxu0 %v938
    %v1304 = vpop.f32.mrb[0].mxu0
    %v1305 = vadd.f32 0.0, %v1304
    %v1306 = vpop.f32.mrb[0].mxu0
    %1307 = vmatprep.mubr.f32.mxu0 0.0
    %1308 = vmatmul.mubr.f32.gmra.mrb[0].mxu0 %v939
    %v1309 = vpop.f32.mrb[0].mxu0
    %v1310 = vadd.f32 0.0, %v1309
    %v1311 = vpop.f32.mrb[0].mxu0
    %1312 = vmatprep.mubr.f32.mxu0 0.0
    %1313 = vmatmul.mubr.f32.gmra.mrb[0].mxu0 %v940
    %v1314 = vpop.f32.mrb[0].mxu0
    %v1315 = vadd.f32 0.0, %v1314
    %v1316 = vpop.f32.mrb[0].mxu0
    %1317 = vmatprep.mubr.f32.mxu0 0.0
    %1318 = vmatmul.mubr.f32.gmra.mrb[0].mxu0 %v941
    %v1319 = vpop.f32.mrb[0].mxu0
    %v1320 = vadd.f32 0.0, %v1319
    %v1321 = vpop.f32.mrb[0].mxu0
    %1322 = vmatprep.mubr.f32.mxu0 0.0
    %1323 = vmatmul.mubr.f32.gmra.mrb[0].mxu0 %v942
    %v1324 = vpop.f32.mrb[0].mxu0
    %v1325 = vadd.f32 0.0, %v1324
    %v1326 = vpop.f32.mrb[0].mxu0
    %1327 = vmatprep.mubr.f32.mxu0 0.0
    %1328 = vmatmul.mubr.f32.gmra.mrb[0].mxu0 %v943
    %v1329 = vpop.f32.mrb[0].mxu0
    %v1330 = vadd.f32 0.0, %v1329
    %v1331 = vpop.f32.mrb[0].mxu0
    %1332 = vmatprep.mubr.f32.mxu0 0.0
    %1333 = vmatmul.mubr.f32.gmra.mrb[0].mxu0 %v944
    %v1334 = vpop.f32.mrb[0].mxu0
    %v1335 = vadd.f32 0.0, %v1334
    %v1336 = vpop.f32.mrb[0].mxu0
    %1337 = vmatprep.mubr.f32.mxu0 0.0
    %1338 = vmatmul.mubr.f32.gmra.mrb[0].mxu0 %v945
    %v1339 = vpop.f32.mrb[0].mxu0
    %v1340 = vadd.f32 0.0, %v1339
    %v1341 = vpop.f32.mrb[0].mxu0
    %1342 = vmatprep.mubr.f32.mxu0 0.0
    %1343 = vmatmul.mubr.f32.gmra.mrb[0].mxu0 %v946
    %v1344 = vpop.f32.mrb[0].mxu0
    %v1345 = vadd.f32 0.0, %v1344
    %v1346 = vpop.f32.mrb[0].mxu0
    %1347 = vmatprep.mubr.f32.mxu0 0.0
    %1348 = vmatmul.mubr.f32.gmra.mrb[0].mxu0 %v947
    %v1349 = vpop.f32.mrb[0].mxu0
    %v1350 = vadd.f32 0.0, %v1349
    %v1351 = vpop.f32.mrb[0].mxu0
    %1352 = vmatprep.mubr.f32.mxu0 0.0
    %1353 = vmatmul.mubr.f32.gmra.mrb[0].mxu0 %v948
    %v1354 = vpop.f32.mrb[0].mxu0
    %v1355 = vadd.f32 0.0, %v1354
    %v1356 = vpop.f32.mrb[0].mxu0
    %1357 = vmatprep.mubr.f32.mxu0 0.0
    %1358 = vmatmul.mubr.f32.gmra.mrb[0].mxu0 %v949
    %v1359 = vpop.f32.mrb[0].mxu0
    %v1360 = vadd.f32 0.0, %v1359
    %v1361 = vpop.f32.mrb[0].mxu0
    %1362 = vmatprep.mubr.f32.mxu0 0.0
    %1363 = vmatmul.mubr.f32.gmra.mrb[0].mxu0 %v950
    %v1364 = vpop.f32.mrb[0].mxu0
    %v1365 = vadd.f32 0.0, %v1364
    %v1366 = vpop.f32.mrb[0].mxu0
    %1367 = vmatprep.mubr.f32.mxu0 0.0
    %1368 = vmatmul.mubr.f32.gmra.mrb[0].mxu0 %v951
    %v1369 = vpop.f32.mrb[0].mxu0
    %v1370 = vadd.f32 0.0, %v1369
    %v1371 = vpop.f32.mrb[0].mxu0
    %1372 = vmatprep.mubr.f32.mxu0 0.0
    %1373 = vmatmul.mubr.f32.gmra.mrb[0].mxu0 %v952
    %v1374 = vpop.f32.mrb[0].mxu0
    %v1375 = vadd.f32 0.0, %v1374
    %v1376 = vpop.f32.mrb[0].mxu0
    %1377 = vmatprep.mubr.f32.mxu0 0.0
    %1378 = vmatmul.mubr.f32.gmra.mrb[0].mxu0 %v953
    %v1379 = vpop.f32.mrb[0].mxu0
    %v1380 = vadd.f32 0.0, %v1379
    %v1381 = vpop.f32.mrb[0].mxu0
    %1382 = vmatprep.mubr.f32.mxu0 0.0
    %1383 = vmatmul.mubr.f32.gmra.mrb[0].mxu0 %v954
    %v1384 = vpop.f32.mrb[0].mxu0
    %v1385 = vadd.f32 0.0, %v1384
    %v1386 = vpop.f32.mrb[0].mxu0
    %1387 = vmatprep.mubr.f32.mxu0 0.0
    %1388 = vmatmul.mubr.f32.gmra.mrb[0].mxu0 %v955
    %v1389 = vpop.f32.mrb[0].mxu0
    %v1390 = vadd.f32 0.0, %v1389
    %v1391 = vpop.f32.mrb[0].mxu0
    %1392 = vmatprep.mubr.f32.mxu0 0.0
    %1393 = vmatmul.mubr.f32.gmra.mrb[0].mxu0 %v956
    %v1394 = vpop.f32.mrb[0].mxu0
    %v1395 = vadd.f32 0.0, %v1394
    %v1396 = vpop.f32.mrb[0].mxu0
    %1397 = vmatprep.mubr.f32.mxu0 0.0
    %1398 = vmatmul.mubr.f32.gmra.mrb[0].mxu0 %v957
    %v1399 = vpop.f32.mrb[0].mxu0
    %v1400 = vadd.f32 0.0, %v1399
    %v1401 = vpop.f32.mrb[0].mxu0
    %1402 = vmatprep.mubr.f32.mxu0 0.0
    %1403 = vmatmul.mubr.f32.gmra.mrb[0].mxu0 %v958
    %v1404 = vpop.f32.mrb[0].mxu0
    %v1405 = vadd.f32 0.0, %v1404
    %v1406 = vpop.f32.mrb[0].mxu0
    %1407 = vmatprep.mubr.f32.mxu0 0.0
    %1408 = vmatmul.mubr.f32.gmra.mrb[0].mxu0 %v959
    %v1409 = vpop.f32.mrb[0].mxu0
    %v1410 = vadd.f32 0.0, %v1409
    %v1411 = vpop.f32.mrb[0].mxu0
    %1412 = vmatprep.mubr.f32.mxu0 0.0
    %1413 = vmatmul.mubr.f32.gmra.mrb[0].mxu0 %v960
    %v1414 = vpop.f32.mrb[0].mxu0
    %v1415 = vadd.f32 0.0, %v1414
    %v1416 = vpop.f32.mrb[0].mxu0
    %1417 = vmatprep.mubr.f32.mxu0 0.0
    %1418 = vmatmul.mubr.f32.gmra.mrb[0].mxu0 %v961
    %v1419 = vpop.f32.mrb[0].mxu0
    %v1420 = vadd.f32 0.0, %v1419
    %v1421 = vpop.f32.mrb[0].mxu0
    %1422 = vmatprep.mubr.f32.mxu0 0.0
    %1423 = vmatmul.mubr.f32.gmra.mrb[0].mxu0 %v962
    %v1424 = vpop.f32.mrb[0].mxu0
    %v1425 = vadd.f32 0.0, %v1424
    %v1426 = vpop.f32.mrb[0].mxu0
    %1427 = vdwg.mxu0
    %v1428 = vld [vmem:[%s1] sm:$0xff]
    %v1429 = vld [vmem:[%s1 + $0x8] sm:$0xff]
    %v1430 = vld [vmem:[%s1 + $0x10] sm:$0xff]
    %v1431 = vld [vmem:[%s1 + $0x18] sm:$0xff]
    %v1432 = vld [vmem:[%s1 + $0x20] sm:$0xff]
    %v1433 = vld [vmem:[%s1 + $0x28] sm:$0xff]
    %v1434 = vld [vmem:[%s1 + $0x30] sm:$0xff]
    %v1435 = vld [vmem:[%s1 + $0x38] sm:$0xff]
    %v1436 = vld [vmem:[%s1 + $0x40] sm:$0xff]
    %v1437 = vld [vmem:[%s1 + $0x48] sm:$0xff]
    %v1438 = vld [vmem:[%s1 + $0x50] sm:$0xff]
    %v1439 = vld [vmem:[%s1 + $0x58] sm:$0xff]
    %v1440 = vld [vmem:[%s1 + $0x60] sm:$0xff]
    %v1441 = vld [vmem:[%s1 + $0x68] sm:$0xff]
    %v1442 = vld [vmem:[%s1 + $0x70] sm:$0xff]
    %v1443 = vld [vmem:[%s1 + $0x78] sm:$0xff]
    %v1444 = vld [vmem:[%s1 + $0x80] sm:$0xff]
    %v1445 = vld [vmem:[%s1 + $0x88] sm:$0xff]
    %v1446 = vld [vmem:[%s1 + $0x90] sm:$0xff]
    %v1447 = vld [vmem:[%s1 + $0x98] sm:$0xff]
    %v1448 = vld [vmem:[%s1 + $0xa0] sm:$0xff]
    %v1449 = vld [vmem:[%s1 + $0xa8] sm:$0xff]
    %v1450 = vld [vmem:[%s1 + $0xb0] sm:$0xff]
    %v1451 = vld [vmem:[%s1 + $0xb8] sm:$0xff]
    %v1452 = vld [vmem:[%s1 + $0xc0] sm:$0xff]
    %v1453 = vld [vmem:[%s1 + $0xc8] sm:$0xff]
    %v1454 = vld [vmem:[%s1 + $0xd0] sm:$0xff]
    %v1455 = vld [vmem:[%s1 + $0xd8] sm:$0xff]
    %v1456 = vld [vmem:[%s1 + $0xe0] sm:$0xff]
    %v1457 = vld [vmem:[%s1 + $0xe8] sm:$0xff]
    %v1458 = vld [vmem:[%s1 + $0xf0] sm:$0xff]
    %v1459 = vld [vmem:[%s1 + $0xf8] sm:$0xff]
    %v1460 = vld [vmem:[%s1 + $0x100] sm:$0xff]
    %v1461 = vld [vmem:[%s1 + $0x108] sm:$0xff]
    %v1462 = vld [vmem:[%s1 + $0x110] sm:$0xff]
    %v1463 = vld [vmem:[%s1 + $0x118] sm:$0xff]
    %v1464 = vld [vmem:[%s1 + $0x120] sm:$0xff]
    %v1465 = vld [vmem:[%s1 + $0x128] sm:$0xff]
    %v1466 = vld [vmem:[%s1 + $0x130] sm:$0xff]
    %v1467 = vld [vmem:[%s1 + $0x138] sm:$0xff]
    %v1468 = vld [vmem:[%s1 + $0x140] sm:$0xff]
    %v1469 = vld [vmem:[%s1 + $0x148] sm:$0xff]
    %v1470 = vld [vmem:[%s1 + $0x150] sm:$0xff]
    %v1471 = vld [vmem:[%s1 + $0x158] sm:$0xff]
    %v1472 = vld [vmem:[%s1 + $0x160] sm:$0xff]
    %v1473 = vld [vmem:[%s1 + $0x168] sm:$0xff]
    %v1474 = vld [vmem:[%s1 + $0x170] sm:$0xff]
    %v1475 = vld [vmem:[%s1 + $0x178] sm:$0xff]
    %v1476 = vld [vmem:[%s1 + $0x180] sm:$0xff]
    %v1477 = vld [vmem:[%s1 + $0x188] sm:$0xff]
    %v1478 = vld [vmem:[%s1 + $0x190] sm:$0xff]
    %v1479 = vld [vmem:[%s1 + $0x198] sm:$0xff]
    %v1480 = vld [vmem:[%s1 + $0x1a0] sm:$0xff]
    %v1481 = vld [vmem:[%s1 + $0x1a8] sm:$0xff]
    %v1482 = vld [vmem:[%s1 + $0x1b0] sm:$0xff]
    %v1483 = vld [vmem:[%s1 + $0x1b8] sm:$0xff]
    %v1484 = vld [vmem:[%s1 + $0x1c0] sm:$0xff]
    %v1485 = vld [vmem:[%s1 + $0x1c8] sm:$0xff]
    %v1486 = vld [vmem:[%s1 + $0x1d0] sm:$0xff]
    %v1487 = vld [vmem:[%s1 + $0x1d8] sm:$0xff]
    %v1488 = vld [vmem:[%s1 + $0x1e0] sm:$0xff]
    %v1489 = vld [vmem:[%s1 + $0x1e8] sm:$0xff]
    %v1490 = vld [vmem:[%s1 + $0x1f0] sm:$0xff]
    %v1491 = vld [vmem:[%s1 + $0x1f8] sm:$0xff]
    %v1492 = vld [vmem:[%s1 + $0x200] sm:$0xff]
    %v1493 = vld [vmem:[%s1 + $0x208] sm:$0xff]
    %v1494 = vld [vmem:[%s1 + $0x210] sm:$0xff]
    %v1495 = vld [vmem:[%s1 + $0x218] sm:$0xff]
    %v1496 = vld [vmem:[%s1 + $0x220] sm:$0xff]
    %v1497 = vld [vmem:[%s1 + $0x228] sm:$0xff]
    %v1498 = vld [vmem:[%s1 + $0x230] sm:$0xff]
    %v1499 = vld [vmem:[%s1 + $0x238] sm:$0xff]
    %v1500 = vld [vmem:[%s1 + $0x240] sm:$0xff]
    %v1501 = vld [vmem:[%s1 + $0x248] sm:$0xff]
    %v1502 = vld [vmem:[%s1 + $0x250] sm:$0xff]
    %v1503 = vld [vmem:[%s1 + $0x258] sm:$0xff]
    %v1504 = vld [vmem:[%s1 + $0x260] sm:$0xff]
    %v1505 = vld [vmem:[%s1 + $0x268] sm:$0xff]
    %v1506 = vld [vmem:[%s1 + $0x270] sm:$0xff]
    %v1507 = vld [vmem:[%s1 + $0x278] sm:$0xff]
    %v1508 = vld [vmem:[%s1 + $0x280] sm:$0xff]
    %v1509 = vld [vmem:[%s1 + $0x288] sm:$0xff]
    %v1510 = vld [vmem:[%s1 + $0x290] sm:$0xff]
    %v1511 = vld [vmem:[%s1 + $0x298] sm:$0xff]
    %v1512 = vld [vmem:[%s1 + $0x2a0] sm:$0xff]
    %v1513 = vld [vmem:[%s1 + $0x2a8] sm:$0xff]
    %v1514 = vld [vmem:[%s1 + $0x2b0] sm:$0xff]
    %v1515 = vld [vmem:[%s1 + $0x2b8] sm:$0xff]
    %v1516 = vld [vmem:[%s1 + $0x2c0] sm:$0xff]
    %v1517 = vld [vmem:[%s1 + $0x2c8] sm:$0xff]
    %v1518 = vld [vmem:[%s1 + $0x2d0] sm:$0xff]
    %v1519 = vld [vmem:[%s1 + $0x2d8] sm:$0xff]
    %v1520 = vld [vmem:[%s1 + $0x2e0] sm:$0xff]
    %v1521 = vld [vmem:[%s1 + $0x2e8] sm:$0xff]
    %v1522 = vld [vmem:[%s1 + $0x2f0] sm:$0xff]
    %v1523 = vld [vmem:[%s1 + $0x2f8] sm:$0xff]
    %v1524 = vld [vmem:[%s1 + $0x300] sm:$0xff]
    %v1525 = vld [vmem:[%s1 + $0x308] sm:$0xff]
    %v1526 = vld [vmem:[%s1 + $0x310] sm:$0xff]
    %v1527 = vld [vmem:[%s1 + $0x318] sm:$0xff]
    %v1528 = vld [vmem:[%s1 + $0x320] sm:$0xff]
    %v1529 = vld [vmem:[%s1 + $0x328] sm:$0xff]
    %v1530 = vld [vmem:[%s1 + $0x330] sm:$0xff]
    %v1531 = vld [vmem:[%s1 + $0x338] sm:$0xff]
    %v1532 = vld [vmem:[%s1 + $0x340] sm:$0xff]
    %v1533 = vld [vmem:[%s1 + $0x348] sm:$0xff]
    %v1534 = vld [vmem:[%s1 + $0x350] sm:$0xff]
    %v1535 = vld [vmem:[%s1 + $0x358] sm:$0xff]
    %v1536 = vld [vmem:[%s1 + $0x360] sm:$0xff]
    %v1537 = vld [vmem:[%s1 + $0x368] sm:$0xff]
    %v1538 = vld [vmem:[%s1 + $0x370] sm:$0xff]
    %v1539 = vld [vmem:[%s1 + $0x378] sm:$0xff]
    %v1540 = vld [vmem:[%s1 + $0x380] sm:$0xff]
    %v1541 = vld [vmem:[%s1 + $0x388] sm:$0xff]
    %v1542 = vld [vmem:[%s1 + $0x390] sm:$0xff]
    %v1543 = vld [vmem:[%s1 + $0x398] sm:$0xff]
    %v1544 = vld [vmem:[%s1 + $0x3a0] sm:$0xff]
    %v1545 = vld [vmem:[%s1 + $0x3a8] sm:$0xff]
    %v1546 = vld [vmem:[%s1 + $0x3b0] sm:$0xff]
    %v1547 = vld [vmem:[%s1 + $0x3b8] sm:$0xff]
    %v1548 = vld [vmem:[%s1 + $0x3c0] sm:$0xff]
    %v1549 = vld [vmem:[%s1 + $0x3c8] sm:$0xff]
    %v1550 = vld [vmem:[%s1 + $0x3d0] sm:$0xff]
    %v1551 = vld [vmem:[%s1 + $0x3d8] sm:$0xff]
    %v1552 = vld [vmem:[%s1 + $0x3e0] sm:$0xff]
    %v1553 = vld [vmem:[%s1 + $0x3e8] sm:$0xff]
    %v1554 = vld [vmem:[%s1 + $0x3f0] sm:$0xff]
    %v1555 = vld [vmem:[%s1 + $0x3f8] sm:$0xff]
    %v1556 = vpack.c.bf16 %v1115, %v1110
    %v1557 = vpack.c.bf16 %v1125, %v1120
    %v1558 = vpack.c.bf16 %v1135, %v1130
    %v1559 = vpack.c.bf16 %v1145, %v1140
    %v1560 = vpack.c.bf16 %v1155, %v1150
    %v1561 = vpack.c.bf16 %v1165, %v1160
    %v1562 = vpack.c.bf16 %v1175, %v1170
    %v1563 = vpack.c.bf16 %v1185, %v1180
    %v1564 = vpack.c.bf16 %v1195, %v1190
    %v1565 = vpack.c.bf16 %v1205, %v1200
    %v1566 = vpack.c.bf16 %v1215, %v1210
    %v1567 = vpack.c.bf16 %v1225, %v1220
    %v1568 = vpack.c.bf16 %v1235, %v1230
    %v1569 = vpack.c.bf16 %v1245, %v1240
    %v1570 = vpack.c.bf16 %v1255, %v1250
    %v1571 = vpack.c.bf16 %v1265, %v1260
    %v1572 = vpack.c.bf16 %v1275, %v1270
    %v1573 = vpack.c.bf16 %v1285, %v1280
    %v1574 = vpack.c.bf16 %v1295, %v1290
    %v1575 = vpack.c.bf16 %v1305, %v1300
    %v1576 = vpack.c.bf16 %v1315, %v1310
    %v1577 = vpack.c.bf16 %v1325, %v1320
    %v1578 = vpack.c.bf16 %v1335, %v1330
    %v1579 = vpack.c.bf16 %v1345, %v1340
    %v1580 = vpack.c.bf16 %v1355, %v1350
    %v1581 = vpack.c.bf16 %v1365, %v1360
    %v1582 = vpack.c.bf16 %v1375, %v1370
    %v1583 = vpack.c.bf16 %v1385, %v1380
    %v1584 = vpack.c.bf16 %v1395, %v1390
    %v1585 = vpack.c.bf16 %v1405, %v1400
    %v1586 = vpack.c.bf16 %v1415, %v1410
    %v1587 = vpack.c.bf16 %v1425, %v1420
    %v1588 = vld [vmem:[%s5] sm:$0x1]
    %v1590 = vlaneseq
    %v1591 = vshrl.u32 %v1590, 7
    %v1592 = vsub.s32 0, %v1591
    %v1593 = vrot.slane %v1588, %v1592
    %v1723 = vunpack.c.l.b16 %v1428
    %v1724 = vunpack.c.h.b16 %v1428
    %v1725 = vunpack.c.l.b16 %v1429
    %v1726 = vunpack.c.h.b16 %v1429
    %v1727 = vunpack.c.l.b16 %v1430
    %v1728 = vunpack.c.h.b16 %v1430
    %v1729 = vunpack.c.l.b16 %v1431
    %v1730 = vunpack.c.h.b16 %v1431
    %v1731 = vunpack.c.l.b16 %v1432
    %v1732 = vunpack.c.h.b16 %v1432
    %v1733 = vunpack.c.l.b16 %v1433
    %v1734 = vunpack.c.h.b16 %v1433
    %v1735 = vunpack.c.l.b16 %v1434
    %v1736 = vunpack.c.h.b16 %v1434
    %v1737 = vunpack.c.l.b16 %v1435
    %v1738 = vunpack.c.h.b16 %v1435
    %v1739 = vunpack.c.l.b16 %v1436
    %v1740 = vunpack.c.h.b16 %v1436
    %v1741 = vunpack.c.l.b16 %v1437
    %v1742 = vunpack.c.h.b16 %v1437
    %v1743 = vunpack.c.l.b16 %v1438
    %v1744 = vunpack.c.h.b16 %v1438
    %v1745 = vunpack.c.l.b16 %v1439
    %v1746 = vunpack.c.h.b16 %v1439
    %v1747 = vunpack.c.l.b16 %v1440
    %v1748 = vunpack.c.h.b16 %v1440
    %v1749 = vunpack.c.l.b16 %v1441
    %v1750 = vunpack.c.h.b16 %v1441
    %v1751 = vunpack.c.l.b16 %v1442
    %v1752 = vunpack.c.h.b16 %v1442
    %v1753 = vunpack.c.l.b16 %v1443
    %v1754 = vunpack.c.h.b16 %v1443
    %v1755 = vunpack.c.l.b16 %v1444
    %v1756 = vunpack.c.h.b16 %v1444
    %v1757 = vunpack.c.l.b16 %v1445
    %v1758 = vunpack.c.h.b16 %v1445
    %v1759 = vunpack.c.l.b16 %v1446
    %v1760 = vunpack.c.h.b16 %v1446
    %v1761 = vunpack.c.l.b16 %v1447
    %v1762 = vunpack.c.h.b16 %v1447
    %v1763 = vunpack.c.l.b16 %v1448
    %v1764 = vunpack.c.h.b16 %v1448
    %v1765 = vunpack.c.l.b16 %v1449
    %v1766 = vunpack.c.h.b16 %v1449
    %v1767 = vunpack.c.l.b16 %v1450
    %v1768 = vunpack.c.h.b16 %v1450
    %v1769 = vunpack.c.l.b16 %v1451
    %v1770 = vunpack.c.h.b16 %v1451
    %v1771 = vunpack.c.l.b16 %v1452
    %v1772 = vunpack.c.h.b16 %v1452
    %v1773 = vunpack.c.l.b16 %v1453
    %v1774 = vunpack.c.h.b16 %v1453
    %v1775 = vunpack.c.l.b16 %v1454
    %v1776 = vunpack.c.h.b16 %v1454
    %v1777 = vunpack.c.l.b16 %v1455
    %v1778 = vunpack.c.h.b16 %v1455
    %v1779 = vunpack.c.l.b16 %v1456
    %v1780 = vunpack.c.h.b16 %v1456
    %v1781 = vunpack.c.l.b16 %v1457
    %v1782 = vunpack.c.h.b16 %v1457
    %v1783 = vunpack.c.l.b16 %v1458
    %v1784 = vunpack.c.h.b16 %v1458
    %v1785 = vunpack.c.l.b16 %v1459
    %v1786 = vunpack.c.h.b16 %v1459
    %v1787 = vunpack.c.l.b16 %v1460
    %v1788 = vunpack.c.h.b16 %v1460
    %v1789 = vunpack.c.l.b16 %v1461
    %v1790 = vunpack.c.h.b16 %v1461
    %v1791 = vunpack.c.l.b16 %v1462
    %v1792 = vunpack.c.h.b16 %v1462
    %v1793 = vunpack.c.l.b16 %v1463
    %v1794 = vunpack.c.h.b16 %v1463
    %v1795 = vunpack.c.l.b16 %v1464
    %v1796 = vunpack.c.h.b16 %v1464
    %v1797 = vunpack.c.l.b16 %v1465
    %v1798 = vunpack.c.h.b16 %v1465
    %v1799 = vunpack.c.l.b16 %v1466
    %v1800 = vunpack.c.h.b16 %v1466
    %v1801 = vunpack.c.l.b16 %v1467
    %v1802 = vunpack.c.h.b16 %v1467
    %v1803 = vunpack.c.l.b16 %v1468
    %v1804 = vunpack.c.h.b16 %v1468
    %v1805 = vunpack.c.l.b16 %v1469
    %v1806 = vunpack.c.h.b16 %v1469
    %v1807 = vunpack.c.l.b16 %v1470
    %v1808 = vunpack.c.h.b16 %v1470
    %v1809 = vunpack.c.l.b16 %v1471
    %v1810 = vunpack.c.h.b16 %v1471
    %v1811 = vunpack.c.l.b16 %v1472
    %v1812 = vunpack.c.h.b16 %v1472
    %v1813 = vunpack.c.l.b16 %v1473
    %v1814 = vunpack.c.h.b16 %v1473
    %v1815 = vunpack.c.l.b16 %v1474
    %v1816 = vunpack.c.h.b16 %v1474
    %v1817 = vunpack.c.l.b16 %v1475
    %v1818 = vunpack.c.h.b16 %v1475
    %v1819 = vunpack.c.l.b16 %v1476
    %v1820 = vunpack.c.h.b16 %v1476
    %v1821 = vunpack.c.l.b16 %v1477
    %v1822 = vunpack.c.h.b16 %v1477
    %v1823 = vunpack.c.l.b16 %v1478
    %v1824 = vunpack.c.h.b16 %v1478
    %v1825 = vunpack.c.l.b16 %v1479
    %v1826 = vunpack.c.h.b16 %v1479
    %v1827 = vunpack.c.l.b16 %v1480
    %v1828 = vunpack.c.h.b16 %v1480
    %v1829 = vunpack.c.l.b16 %v1481
    %v1830 = vunpack.c.h.b16 %v1481
    %v1831 = vunpack.c.l.b16 %v1482
    %v1832 = vunpack.c.h.b16 %v1482
    %v1833 = vunpack.c.l.b16 %v1483
    %v1834 = vunpack.c.h.b16 %v1483
    %v1835 = vunpack.c.l.b16 %v1484
    %v1836 = vunpack.c.h.b16 %v1484
    %v1837 = vunpack.c.l.b16 %v1485
    %v1838 = vunpack.c.h.b16 %v1485
    %v1839 = vunpack.c.l.b16 %v1486
    %v1840 = vunpack.c.h.b16 %v1486
    %v1841 = vunpack.c.l.b16 %v1487
    %v1842 = vunpack.c.h.b16 %v1487
    %v1843 = vunpack.c.l.b16 %v1488
    %v1844 = vunpack.c.h.b16 %v1488
    %v1845 = vunpack.c.l.b16 %v1489
    %v1846 = vunpack.c.h.b16 %v1489
    %v1847 = vunpack.c.l.b16 %v1490
    %v1848 = vunpack.c.h.b16 %v1490
    %v1849 = vunpack.c.l.b16 %v1491
    %v1850 = vunpack.c.h.b16 %v1491
    %v1851 = vunpack.c.l.b16 %v1492
    %v1852 = vunpack.c.h.b16 %v1492
    %v1853 = vunpack.c.l.b16 %v1493
    %v1854 = vunpack.c.h.b16 %v1493
    %v1855 = vunpack.c.l.b16 %v1494
    %v1856 = vunpack.c.h.b16 %v1494
    %v1857 = vunpack.c.l.b16 %v1495
    %v1858 = vunpack.c.h.b16 %v1495
    %v1859 = vunpack.c.l.b16 %v1496
    %v1860 = vunpack.c.h.b16 %v1496
    %v1861 = vunpack.c.l.b16 %v1497
    %v1862 = vunpack.c.h.b16 %v1497
    %v1863 = vunpack.c.l.b16 %v1498
    %v1864 = vunpack.c.h.b16 %v1498
    %v1865 = vunpack.c.l.b16 %v1499
    %v1866 = vunpack.c.h.b16 %v1499
    %v1867 = vunpack.c.l.b16 %v1500
    %v1868 = vunpack.c.h.b16 %v1500
    %v1869 = vunpack.c.l.b16 %v1501
    %v1870 = vunpack.c.h.b16 %v1501
    %v1871 = vunpack.c.l.b16 %v1502
    %v1872 = vunpack.c.h.b16 %v1502
    %v1873 = vunpack.c.l.b16 %v1503
    %v1874 = vunpack.c.h.b16 %v1503
    %v1875 = vunpack.c.l.b16 %v1504
    %v1876 = vunpack.c.h.b16 %v1504
    %v1877 = vunpack.c.l.b16 %v1505
    %v1878 = vunpack.c.h.b16 %v1505
    %v1879 = vunpack.c.l.b16 %v1506
    %v1880 = vunpack.c.h.b16 %v1506
    %v1881 = vunpack.c.l.b16 %v1507
    %v1882 = vunpack.c.h.b16 %v1507
    %v1883 = vunpack.c.l.b16 %v1508
    %v1884 = vunpack.c.h.b16 %v1508
    %v1885 = vunpack.c.l.b16 %v1509
    %v1886 = vunpack.c.h.b16 %v1509
    %v1887 = vunpack.c.l.b16 %v1510
    %v1888 = vunpack.c.h.b16 %v1510
    %v1889 = vunpack.c.l.b16 %v1511
    %v1890 = vunpack.c.h.b16 %v1511
    %v1891 = vunpack.c.l.b16 %v1512
    %v1892 = vunpack.c.h.b16 %v1512
    %v1893 = vunpack.c.l.b16 %v1513
    %v1894 = vunpack.c.h.b16 %v1513
    %v1895 = vunpack.c.l.b16 %v1514
    %v1896 = vunpack.c.h.b16 %v1514
    %v1897 = vunpack.c.l.b16 %v1515
    %v1898 = vunpack.c.h.b16 %v1515
    %v1899 = vunpack.c.l.b16 %v1516
    %v1900 = vunpack.c.h.b16 %v1516
    %v1901 = vunpack.c.l.b16 %v1517
    %v1902 = vunpack.c.h.b16 %v1517
    %v1903 = vunpack.c.l.b16 %v1518
    %v1904 = vunpack.c.h.b16 %v1518
    %v1905 = vunpack.c.l.b16 %v1519
    %v1906 = vunpack.c.h.b16 %v1519
    %v1907 = vunpack.c.l.b16 %v1520
    %v1908 = vunpack.c.h.b16 %v1520
    %v1909 = vunpack.c.l.b16 %v1521
    %v1910 = vunpack.c.h.b16 %v1521
    %v1911 = vunpack.c.l.b16 %v1522
    %v1912 = vunpack.c.h.b16 %v1522
    %v1913 = vunpack.c.l.b16 %v1523
    %v1914 = vunpack.c.h.b16 %v1523
    %v1915 = vunpack.c.l.b16 %v1524
    %v1916 = vunpack.c.h.b16 %v1524
    %v1917 = vunpack.c.l.b16 %v1525
    %v1918 = vunpack.c.h.b16 %v1525
    %v1919 = vunpack.c.l.b16 %v1526
    %v1920 = vunpack.c.h.b16 %v1526
    %v1921 = vunpack.c.l.b16 %v1527
    %v1922 = vunpack.c.h.b16 %v1527
    %v1923 = vunpack.c.l.b16 %v1528
    %v1924 = vunpack.c.h.b16 %v1528
    %v1925 = vunpack.c.l.b16 %v1529
    %v1926 = vunpack.c.h.b16 %v1529
    %v1927 = vunpack.c.l.b16 %v1530
    %v1928 = vunpack.c.h.b16 %v1530
    %v1929 = vunpack.c.l.b16 %v1531
    %v1930 = vunpack.c.h.b16 %v1531
    %v1931 = vunpack.c.l.b16 %v1532
    %v1932 = vunpack.c.h.b16 %v1532
    %v1933 = vunpack.c.l.b16 %v1533
    %v1934 = vunpack.c.h.b16 %v1533
    %v1935 = vunpack.c.l.b16 %v1534
    %v1936 = vunpack.c.h.b16 %v1534
    %v1937 = vunpack.c.l.b16 %v1535
    %v1938 = vunpack.c.h.b16 %v1535
    %v1939 = vunpack.c.l.b16 %v1536
    %v1940 = vunpack.c.h.b16 %v1536
    %v1941 = vunpack.c.l.b16 %v1537
    %v1942 = vunpack.c.h.b16 %v1537
    %v1943 = vunpack.c.l.b16 %v1538
    %v1944 = vunpack.c.h.b16 %v1538
    %v1945 = vunpack.c.l.b16 %v1539
    %v1946 = vunpack.c.h.b16 %v1539
    %v1947 = vunpack.c.l.b16 %v1540
    %v1948 = vunpack.c.h.b16 %v1540
    %v1949 = vunpack.c.l.b16 %v1541
    %v1950 = vunpack.c.h.b16 %v1541
    %v1951 = vunpack.c.l.b16 %v1542
    %v1952 = vunpack.c.h.b16 %v1542
    %v1953 = vunpack.c.l.b16 %v1543
    %v1954 = vunpack.c.h.b16 %v1543
    %v1955 = vunpack.c.l.b16 %v1544
    %v1956 = vunpack.c.h.b16 %v1544
    %v1957 = vunpack.c.l.b16 %v1545
    %v1958 = vunpack.c.h.b16 %v1545
    %v1959 = vunpack.c.l.b16 %v1546
    %v1960 = vunpack.c.h.b16 %v1546
    %v1961 = vunpack.c.l.b16 %v1547
    %v1962 = vunpack.c.h.b16 %v1547
    %v1963 = vunpack.c.l.b16 %v1548
    %v1964 = vunpack.c.h.b16 %v1548
    %v1965 = vunpack.c.l.b16 %v1549
    %v1966 = vunpack.c.h.b16 %v1549
    %v1967 = vunpack.c.l.b16 %v1550
    %v1968 = vunpack.c.h.b16 %v1550
    %v1969 = vunpack.c.l.b16 %v1551
    %v1970 = vunpack.c.h.b16 %v1551
    %v1971 = vunpack.c.l.b16 %v1552
    %v1972 = vunpack.c.h.b16 %v1552
    %v1973 = vunpack.c.l.b16 %v1553
    %v1974 = vunpack.c.h.b16 %v1553
    %v1975 = vunpack.c.l.b16 %v1554
    %v1976 = vunpack.c.h.b16 %v1554
    %v1977 = vunpack.c.l.b16 %v1555
    %v1978 = vunpack.c.h.b16 %v1555
    %v1979 = vpack.c.b16 %v1727, %v1723
    %v1980 = vpack.c.b16 %v1728, %v1724
    %v1981 = vpack.c.b16 %v1729, %v1725
    %v1982 = vpack.c.b16 %v1730, %v1726
    %v1983 = vpack.c.b16 %v1735, %v1731
    %v1984 = vpack.c.b16 %v1736, %v1732
    %v1985 = vpack.c.b16 %v1737, %v1733
    %v1986 = vpack.c.b16 %v1738, %v1734
    %v1987 = vpack.c.b16 %v1743, %v1739
    %v1988 = vpack.c.b16 %v1744, %v1740
    %v1989 = vpack.c.b16 %v1745, %v1741
    %v1990 = vpack.c.b16 %v1746, %v1742
    %v1991 = vpack.c.b16 %v1751, %v1747
    %v1992 = vpack.c.b16 %v1752, %v1748
    %v1993 = vpack.c.b16 %v1753, %v1749
    %v1994 = vpack.c.b16 %v1754, %v1750
    %v1995 = vpack.c.b16 %v1759, %v1755
    %v1996 = vpack.c.b16 %v1760, %v1756
    %v1997 = vpack.c.b16 %v1761, %v1757
    %v1998 = vpack.c.b16 %v1762, %v1758
    %v1999 = vpack.c.b16 %v1767, %v1763
    %v2000 = vpack.c.b16 %v1768, %v1764
    %v2001 = vpack.c.b16 %v1769, %v1765
    %v2002 = vpack.c.b16 %v1770, %v1766
    %v2003 = vpack.c.b16 %v1775, %v1771
    %v2004 = vpack.c.b16 %v1776, %v1772
    %v2005 = vpack.c.b16 %v1777, %v1773
    %v2006 = vpack.c.b16 %v1778, %v1774
    %v2007 = vpack.c.b16 %v1783, %v1779
    %v2008 = vpack.c.b16 %v1784, %v1780
    %v2009 = vpack.c.b16 %v1785, %v1781
    %v2010 = vpack.c.b16 %v1786, %v1782
    %v2011 = vpack.c.b16 %v1791, %v1787
    %v2012 = vpack.c.b16 %v1792, %v1788
    %v2013 = vpack.c.b16 %v1793, %v1789
    %v2014 = vpack.c.b16 %v1794, %v1790
    %v2015 = vpack.c.b16 %v1799, %v1795
    %v2016 = vpack.c.b16 %v1800, %v1796
    %v2017 = vpack.c.b16 %v1801, %v1797
    %v2018 = vpack.c.b16 %v1802, %v1798
    %v2019 = vpack.c.b16 %v1807, %v1803
    %v2020 = vpack.c.b16 %v1808, %v1804
    %v2021 = vpack.c.b16 %v1809, %v1805
    %v2022 = vpack.c.b16 %v1810, %v1806
    %v2023 = vpack.c.b16 %v1815, %v1811
    %v2024 = vpack.c.b16 %v1816, %v1812
    %v2025 = vpack.c.b16 %v1817, %v1813
    %v2026 = vpack.c.b16 %v1818, %v1814
    %v2027 = vpack.c.b16 %v1823, %v1819
    %v2028 = vpack.c.b16 %v1824, %v1820
    %v2029 = vpack.c.b16 %v1825, %v1821
    %v2030 = vpack.c.b16 %v1826, %v1822
    %v2031 = vpack.c.b16 %v1831, %v1827
    %v2032 = vpack.c.b16 %v1832, %v1828
    %v2033 = vpack.c.b16 %v1833, %v1829
    %v2034 = vpack.c.b16 %v1834, %v1830
    %v2035 = vpack.c.b16 %v1839, %v1835
    %v2036 = vpack.c.b16 %v1840, %v1836
    %v2037 = vpack.c.b16 %v1841, %v1837
    %v2038 = vpack.c.b16 %v1842, %v1838
    %v2039 = vpack.c.b16 %v1847, %v1843
    %v2040 = vpack.c.b16 %v1848, %v1844
    %v2041 = vpack.c.b16 %v1849, %v1845
    %v2042 = vpack.c.b16 %v1850, %v1846
    %v2043 = vpack.c.b16 %v1855, %v1851
    %v2044 = vpack.c.b16 %v1856, %v1852
    %v2045 = vpack.c.b16 %v1857, %v1853
    %v2046 = vpack.c.b16 %v1858, %v1854
    %v2047 = vpack.c.b16 %v1863, %v1859
    %v2048 = vpack.c.b16 %v1864, %v1860
    %v2049 = vpack.c.b16 %v1865, %v1861
    %v2050 = vpack.c.b16 %v1866, %v1862
    %v2051 = vpack.c.b16 %v1871, %v1867
    %v2052 = vpack.c.b16 %v1872, %v1868
    %v2053 = vpack.c.b16 %v1873, %v1869
    %v2054 = vpack.c.b16 %v1874, %v1870
    %v2055 = vpack.c.b16 %v1879, %v1875
    %v2056 = vpack.c.b16 %v1880, %v1876
    %v2057 = vpack.c.b16 %v1881, %v1877
    %v2058 = vpack.c.b16 %v1882, %v1878
    %v2059 = vpack.c.b16 %v1887, %v1883
    %v2060 = vpack.c.b16 %v1888, %v1884
    %v2061 = vpack.c.b16 %v1889, %v1885
    %v2062 = vpack.c.b16 %v1890, %v1886
    %v2063 = vpack.c.b16 %v1895, %v1891
    %v2064 = vpack.c.b16 %v1896, %v1892
    %v2065 = vpack.c.b16 %v1897, %v1893
    %v2066 = vpack.c.b16 %v1898, %v1894
    %v2067 = vpack.c.b16 %v1903, %v1899
    %v2068 = vpack.c.b16 %v1904, %v1900
    %v2069 = vpack.c.b16 %v1905, %v1901
    %v2070 = vpack.c.b16 %v1906, %v1902
    %v2071 = vpack.c.b16 %v1911, %v1907
    %v2072 = vpack.c.b16 %v1912, %v1908
    %v2073 = vpack.c.b16 %v1913, %v1909
    %v2074 = vpack.c.b16 %v1914, %v1910
    %v2075 = vpack.c.b16 %v1919, %v1915
    %v2076 = vpack.c.b16 %v1920, %v1916
    %v2077 = vpack.c.b16 %v1921, %v1917
    %v2078 = vpack.c.b16 %v1922, %v1918
    %v2079 = vpack.c.b16 %v1927, %v1923
    %v2080 = vpack.c.b16 %v1928, %v1924
    %v2081 = vpack.c.b16 %v1929, %v1925
    %v2082 = vpack.c.b16 %v1930, %v1926
    %v2083 = vpack.c.b16 %v1935, %v1931
    %v2084 = vpack.c.b16 %v1936, %v1932
    %v2085 = vpack.c.b16 %v1937, %v1933
    %v2086 = vpack.c.b16 %v1938, %v1934
    %v2087 = vpack.c.b16 %v1943, %v1939
    %v2088 = vpack.c.b16 %v1944, %v1940
    %v2089 = vpack.c.b16 %v1945, %v1941
    %v2090 = vpack.c.b16 %v1946, %v1942
    %v2091 = vpack.c.b16 %v1951, %v1947
    %v2092 = vpack.c.b16 %v1952, %v1948
    %v2093 = vpack.c.b16 %v1953, %v1949
    %v2094 = vpack.c.b16 %v1954, %v1950
    %v2095 = vpack.c.b16 %v1959, %v1955
    %v2096 = vpack.c.b16 %v1960, %v1956
    %v2097 = vpack.c.b16 %v1961, %v1957
    %v2098 = vpack.c.b16 %v1962, %v1958
    %v2099 = vpack.c.b16 %v1967, %v1963
    %v2100 = vpack.c.b16 %v1968, %v1964
    %v2101 = vpack.c.b16 %v1969, %v1965
    %v2102 = vpack.c.b16 %v1970, %v1966
    %v2103 = vpack.c.b16 %v1975, %v1971
    %v2104 = vpack.c.b16 %v1976, %v1972
    %v2105 = vpack.c.b16 %v1977, %v1973
    %v2106 = vpack.c.b16 %v1978, %v1974
    %2235 = vmatprep.subr.bf16.mxu0 0
    %2236 = vmatpush1.bf16.msra.mxu0 %v1556
    %2237 = vmatprep.subr.bf16.mxu0 0
    %2238 = vmatpush1.bf16.msra.mxu0 %v1557
    %2239 = vmatprep.subr.bf16.mxu0 0
    %2240 = vmatpush1.bf16.msra.mxu0 %v1558
    %2241 = vmatprep.subr.bf16.mxu0 0
    %2242 = vmatpush1.bf16.msra.mxu0 %v1559
    %2243 = vmatprep.subr.bf16.mxu0 0
    %2244 = vmatpush1.bf16.msra.mxu0 %v1560
    %2245 = vmatprep.subr.bf16.mxu0 0
    %2246 = vmatpush1.bf16.msra.mxu0 %v1561
    %2247 = vmatprep.subr.bf16.mxu0 0
    %2248 = vmatpush1.bf16.msra.mxu0 %v1562
    %2249 = vmatprep.subr.bf16.mxu0 0
    %2250 = vmatpush1.bf16.msra.mxu0 %v1563
    %2251 = vmatprep.subr.bf16.mxu0 0
    %2252 = vmatpush1.bf16.msra.mxu0 %v1564
    %2253 = vmatprep.subr.bf16.mxu0 0
    %2254 = vmatpush1.bf16.msra.mxu0 %v1565
    %2255 = vmatprep.subr.bf16.mxu0 0
    %2256 = vmatpush1.bf16.msra.mxu0 %v1566
    %2257 = vmatprep.subr.bf16.mxu0 0
    %2258 = vmatpush1.bf16.msra.mxu0 %v1567
    %2259 = vmatprep.subr.bf16.mxu0 0
    %2260 = vmatpush1.bf16.msra.mxu0 %v1568
    %2261 = vmatprep.subr.bf16.mxu0 0
    %2262 = vmatpush1.bf16.msra.mxu0 %v1569
    %2263 = vmatprep.subr.bf16.mxu0 0
    %2264 = vmatpush1.bf16.msra.mxu0 %v1570
    %2265 = vmatprep.subr.bf16.mxu0 0
    %2266 = vmatpush1.bf16.msra.mxu0 %v1571
    %2267 = vmatprep.mubr.bf16.mxu0 %v1980
    %2268 = vmatmul.mubr.bf16.gmra.mrb[0].mxu0 %v1979
    %v2269 = vpop.f32.mrb[0].mxu0
    %v2270 = vadd.f32 %v1593, %v2269
    %v2271 = vpop.f32.mrb[0].mxu0
    %v2272 = vpop.f32.mrb[0].mxu0
    %v2273 = vadd.f32 %v1593, %v2272
    %v2274 = vpop.f32.mrb[0].mxu0
    %2275 = vmatprep.mubr.bf16.mxu0 %v1984
    %2276 = vmatmul.mubr.bf16.gmra.mrb[0].mxu0 %v1983
    %v2277 = vpop.f32.mrb[0].mxu0
    %v2278 = vadd.f32 %v1593, %v2277
    %v2279 = vpop.f32.mrb[0].mxu0
    %v2280 = vpop.f32.mrb[0].mxu0
    %v2281 = vadd.f32 %v1593, %v2280
    %v2282 = vpop.f32.mrb[0].mxu0
    %2283 = vmatprep.mubr.bf16.mxu0 %v1988
    %2284 = vmatmul.mubr.bf16.gmra.mrb[0].mxu0 %v1987
    %v2285 = vpop.f32.mrb[0].mxu0
    %v2286 = vadd.f32 %v1593, %v2285
    %v2287 = vpop.f32.mrb[0].mxu0
    %v2288 = vpop.f32.mrb[0].mxu0
    %v2289 = vadd.f32 %v1593, %v2288
    %v2290 = vpop.f32.mrb[0].mxu0
    %2291 = vmatprep.mubr.bf16.mxu0 %v1992
    %2292 = vmatmul.mubr.bf16.gmra.mrb[0].mxu0 %v1991
    %v2293 = vpop.f32.mrb[0].mxu0
    %v2294 = vadd.f32 %v1593, %v2293
    %v2295 = vpop.f32.mrb[0].mxu0
    %v2296 = vpop.f32.mrb[0].mxu0
    %v2297 = vadd.f32 %v1593, %v2296
    %v2298 = vpop.f32.mrb[0].mxu0
    %2299 = vmatprep.mubr.bf16.mxu0 %v1996
    %2300 = vmatmul.mubr.bf16.gmra.mrb[0].mxu0 %v1995
    %v2301 = vpop.f32.mrb[0].mxu0
    %v2302 = vadd.f32 %v1593, %v2301
    %v2303 = vpop.f32.mrb[0].mxu0
    %v2304 = vpop.f32.mrb[0].mxu0
    %v2305 = vadd.f32 %v1593, %v2304
    %v2306 = vpop.f32.mrb[0].mxu0
    %2307 = vmatprep.mubr.bf16.mxu0 %v2000
    %2308 = vmatmul.mubr.bf16.gmra.mrb[0].mxu0 %v1999
    %v2309 = vpop.f32.mrb[0].mxu0
    %v2310 = vadd.f32 %v1593, %v2309
    %v2311 = vpop.f32.mrb[0].mxu0
    %v2312 = vpop.f32.mrb[0].mxu0
    %v2313 = vadd.f32 %v1593, %v2312
    %v2314 = vpop.f32.mrb[0].mxu0
    %2315 = vmatprep.mubr.bf16.mxu0 %v2004
    %2316 = vmatmul.mubr.bf16.gmra.mrb[0].mxu0 %v2003
    %v2317 = vpop.f32.mrb[0].mxu0
    %v2318 = vadd.f32 %v1593, %v2317
    %v2319 = vpop.f32.mrb[0].mxu0
    %v2320 = vpop.f32.mrb[0].mxu0
    %v2321 = vadd.f32 %v1593, %v2320
    %v2322 = vpop.f32.mrb[0].mxu0
    %2323 = vmatprep.mubr.bf16.mxu0 %v2008
    %2324 = vmatmul.mubr.bf16.gmra.mrb[0].mxu0 %v2007
    %v2325 = vpop.f32.mrb[0].mxu0
    %v2326 = vadd.f32 %v1593, %v2325
    %v2327 = vpop.f32.mrb[0].mxu0
    %v2328 = vpop.f32.mrb[0].mxu0
    %v2329 = vadd.f32 %v1593, %v2328
    %v2330 = vpop.f32.mrb[0].mxu0
    %2331 = vmatprep.mubr.bf16.mxu0 %v2012
    %2332 = vmatmul.mubr.bf16.gmra.mrb[0].mxu0 %v2011
    %v2333 = vpop.f32.mrb[0].mxu0
    %v2334 = vadd.f32 %v1593, %v2333
    %v2335 = vpop.f32.mrb[0].mxu0
    %v2336 = vpop.f32.mrb[0].mxu0
    %v2337 = vadd.f32 %v1593, %v2336
    %v2338 = vpop.f32.mrb[0].mxu0
    %2339 = vmatprep.mubr.bf16.mxu0 %v2016
    %2340 = vmatmul.mubr.bf16.gmra.mrb[0].mxu0 %v2015
    %v2341 = vpop.f32.mrb[0].mxu0
    %v2342 = vadd.f32 %v1593, %v2341
    %v2343 = vpop.f32.mrb[0].mxu0
    %v2344 = vpop.f32.mrb[0].mxu0
    %v2345 = vadd.f32 %v1593, %v2344
    %v2346 = vpop.f32.mrb[0].mxu0
    %2347 = vmatprep.mubr.bf16.mxu0 %v2020
    %2348 = vmatmul.mubr.bf16.gmra.mrb[0].mxu0 %v2019
    %v2349 = vpop.f32.mrb[0].mxu0
    %v2350 = vadd.f32 %v1593, %v2349
    %v2351 = vpop.f32.mrb[0].mxu0
    %v2352 = vpop.f32.mrb[0].mxu0
    %v2353 = vadd.f32 %v1593, %v2352
    %v2354 = vpop.f32.mrb[0].mxu0
    %2355 = vmatprep.mubr.bf16.mxu0 %v2024
    %2356 = vmatmul.mubr.bf16.gmra.mrb[0].mxu0 %v2023
    %v2357 = vpop.f32.mrb[0].mxu0
    %v2358 = vadd.f32 %v1593, %v2357
    %v2359 = vpop.f32.mrb[0].mxu0
    %v2360 = vpop.f32.mrb[0].mxu0
    %v2361 = vadd.f32 %v1593, %v2360
    %v2362 = vpop.f32.mrb[0].mxu0
    %2363 = vmatprep.mubr.bf16.mxu0 %v2028
    %2364 = vmatmul.mubr.bf16.gmra.mrb[0].mxu0 %v2027
    %v2365 = vpop.f32.mrb[0].mxu0
    %v2366 = vadd.f32 %v1593, %v2365
    %v2367 = vpop.f32.mrb[0].mxu0
    %v2368 = vpop.f32.mrb[0].mxu0
    %v2369 = vadd.f32 %v1593, %v2368
    %v2370 = vpop.f32.mrb[0].mxu0
    %2371 = vmatprep.mubr.bf16.mxu0 %v2032
    %2372 = vmatmul.mubr.bf16.gmra.mrb[0].mxu0 %v2031
    %v2373 = vpop.f32.mrb[0].mxu0
    %v2374 = vadd.f32 %v1593, %v2373
    %v2375 = vpop.f32.mrb[0].mxu0
    %v2376 = vpop.f32.mrb[0].mxu0
    %v2377 = vadd.f32 %v1593, %v2376
    %v2378 = vpop.f32.mrb[0].mxu0
    %2379 = vmatprep.mubr.bf16.mxu0 %v2036
    %2380 = vmatmul.mubr.bf16.gmra.mrb[0].mxu0 %v2035
    %v2381 = vpop.f32.mrb[0].mxu0
    %v2382 = vadd.f32 %v1593, %v2381
    %v2383 = vpop.f32.mrb[0].mxu0
    %v2384 = vpop.f32.mrb[0].mxu0
    %v2385 = vadd.f32 %v1593, %v2384
    %v2386 = vpop.f32.mrb[0].mxu0
    %2387 = vmatprep.mubr.bf16.mxu0 %v2040
    %2388 = vmatmul.mubr.bf16.gmra.mrb[0].mxu0 %v2039
    %v2389 = vpop.f32.mrb[0].mxu0
    %v2390 = vadd.f32 %v1593, %v2389
    %v2391 = vpop.f32.mrb[0].mxu0
    %v2392 = vpop.f32.mrb[0].mxu0
    %v2393 = vadd.f32 %v1593, %v2392
    %v2394 = vpop.f32.mrb[0].mxu0
    %2395 = vmatprep.mubr.bf16.mxu0 %v2044
    %2396 = vmatmul.mubr.bf16.gmra.mrb[0].mxu0 %v2043
    %v2397 = vpop.f32.mrb[0].mxu0
    %v2398 = vadd.f32 %v1593, %v2397
    %v2399 = vpop.f32.mrb[0].mxu0
    %v2400 = vpop.f32.mrb[0].mxu0
    %v2401 = vadd.f32 %v1593, %v2400
    %v2402 = vpop.f32.mrb[0].mxu0
    %2403 = vmatprep.mubr.bf16.mxu0 %v2048
    %2404 = vmatmul.mubr.bf16.gmra.mrb[0].mxu0 %v2047
    %v2405 = vpop.f32.mrb[0].mxu0
    %v2406 = vadd.f32 %v1593, %v2405
    %v2407 = vpop.f32.mrb[0].mxu0
    %v2408 = vpop.f32.mrb[0].mxu0
    %v2409 = vadd.f32 %v1593, %v2408
    %v2410 = vpop.f32.mrb[0].mxu0
    %2411 = vmatprep.mubr.bf16.mxu0 %v2052
    %2412 = vmatmul.mubr.bf16.gmra.mrb[0].mxu0 %v2051
    %v2413 = vpop.f32.mrb[0].mxu0
    %v2414 = vadd.f32 %v1593, %v2413
    %v2415 = vpop.f32.mrb[0].mxu0
    %v2416 = vpop.f32.mrb[0].mxu0
    %v2417 = vadd.f32 %v1593, %v2416
    %v2418 = vpop.f32.mrb[0].mxu0
    %2419 = vmatprep.mubr.bf16.mxu0 %v2056
    %2420 = vmatmul.mubr.bf16.gmra.mrb[0].mxu0 %v2055
    %v2421 = vpop.f32.mrb[0].mxu0
    %v2422 = vadd.f32 %v1593, %v2421
    %v2423 = vpop.f32.mrb[0].mxu0
    %v2424 = vpop.f32.mrb[0].mxu0
    %v2425 = vadd.f32 %v1593, %v2424
    %v2426 = vpop.f32.mrb[0].mxu0
    %2427 = vmatprep.mubr.bf16.mxu0 %v2060
    %2428 = vmatmul.mubr.bf16.gmra.mrb[0].mxu0 %v2059
    %v2429 = vpop.f32.mrb[0].mxu0
    %v2430 = vadd.f32 %v1593, %v2429
    %v2431 = vpop.f32.mrb[0].mxu0
    %v2432 = vpop.f32.mrb[0].mxu0
    %v2433 = vadd.f32 %v1593, %v2432
    %v2434 = vpop.f32.mrb[0].mxu0
    %2435 = vmatprep.mubr.bf16.mxu0 %v2064
    %2436 = vmatmul.mubr.bf16.gmra.mrb[0].mxu0 %v2063
    %v2437 = vpop.f32.mrb[0].mxu0
    %v2438 = vadd.f32 %v1593, %v2437
    %v2439 = vpop.f32.mrb[0].mxu0
    %v2440 = vpop.f32.mrb[0].mxu0
    %v2441 = vadd.f32 %v1593, %v2440
    %v2442 = vpop.f32.mrb[0].mxu0
    %2443 = vmatprep.mubr.bf16.mxu0 %v2068
    %2444 = vmatmul.mubr.bf16.gmra.mrb[0].mxu0 %v2067
    %v2445 = vpop.f32.mrb[0].mxu0
    %v2446 = vadd.f32 %v1593, %v2445
    %v2447 = vpop.f32.mrb[0].mxu0
    %v2448 = vpop.f32.mrb[0].mxu0
    %v2449 = vadd.f32 %v1593, %v2448
    %v2450 = vpop.f32.mrb[0].mxu0
    %2451 = vmatprep.mubr.bf16.mxu0 %v2072
    %2452 = vmatmul.mubr.bf16.gmra.mrb[0].mxu0 %v2071
    %v2453 = vpop.f32.mrb[0].mxu0
    %v2454 = vadd.f32 %v1593, %v2453
    %v2455 = vpop.f32.mrb[0].mxu0
    %v2456 = vpop.f32.mrb[0].mxu0
    %v2457 = vadd.f32 %v1593, %v2456
    %v2458 = vpop.f32.mrb[0].mxu0
    %2459 = vmatprep.mubr.bf16.mxu0 %v2076
    %2460 = vmatmul.mubr.bf16.gmra.mrb[0].mxu0 %v2075
    %v2461 = vpop.f32.mrb[0].mxu0
    %v2462 = vadd.f32 %v1593, %v2461
    %v2463 = vpop.f32.mrb[0].mxu0
    %v2464 = vpop.f32.mrb[0].mxu0
    %v2465 = vadd.f32 %v1593, %v2464
    %v2466 = vpop.f32.mrb[0].mxu0
    %2467 = vmatprep.mubr.bf16.mxu0 %v2080
    %2468 = vmatmul.mubr.bf16.gmra.mrb[0].mxu0 %v2079
    %v2469 = vpop.f32.mrb[0].mxu0
    %v2470 = vadd.f32 %v1593, %v2469
    %v2471 = vpop.f32.mrb[0].mxu0
    %v2472 = vpop.f32.mrb[0].mxu0
    %v2473 = vadd.f32 %v1593, %v2472
    %v2474 = vpop.f32.mrb[0].mxu0
    %2475 = vmatprep.mubr.bf16.mxu0 %v2084
    %2476 = vmatmul.mubr.bf16.gmra.mrb[0].mxu0 %v2083
    %v2477 = vpop.f32.mrb[0].mxu0
    %v2478 = vadd.f32 %v1593, %v2477
    %v2479 = vpop.f32.mrb[0].mxu0
    %v2480 = vpop.f32.mrb[0].mxu0
    %v2481 = vadd.f32 %v1593, %v2480
    %v2482 = vpop.f32.mrb[0].mxu0
    %2483 = vmatprep.mubr.bf16.mxu0 %v2088
    %2484 = vmatmul.mubr.bf16.gmra.mrb[0].mxu0 %v2087
    %v2485 = vpop.f32.mrb[0].mxu0
    %v2486 = vadd.f32 %v1593, %v2485
    %v2487 = vpop.f32.mrb[0].mxu0
    %v2488 = vpop.f32.mrb[0].mxu0
    %v2489 = vadd.f32 %v1593, %v2488
    %v2490 = vpop.f32.mrb[0].mxu0
    %2491 = vmatprep.mubr.bf16.mxu0 %v2092
    %2492 = vmatmul.mubr.bf16.gmra.mrb[0].mxu0 %v2091
    %v2493 = vpop.f32.mrb[0].mxu0
    %v2494 = vadd.f32 %v1593, %v2493
    %v2495 = vpop.f32.mrb[0].mxu0
    %v2496 = vpop.f32.mrb[0].mxu0
    %v2497 = vadd.f32 %v1593, %v2496
    %v2498 = vpop.f32.mrb[0].mxu0
    %2499 = vmatprep.mubr.bf16.mxu0 %v2096
    %2500 = vmatmul.mubr.bf16.gmra.mrb[0].mxu0 %v2095
    %v2501 = vpop.f32.mrb[0].mxu0
    %v2502 = vadd.f32 %v1593, %v2501
    %v2503 = vpop.f32.mrb[0].mxu0
    %v2504 = vpop.f32.mrb[0].mxu0
    %v2505 = vadd.f32 %v1593, %v2504
    %v2506 = vpop.f32.mrb[0].mxu0
    %2507 = vmatprep.mubr.bf16.mxu0 %v2100
    %2508 = vmatmul.mubr.bf16.gmra.mrb[0].mxu0 %v2099
    %v2509 = vpop.f32.mrb[0].mxu0
    %v2510 = vadd.f32 %v1593, %v2509
    %v2511 = vpop.f32.mrb[0].mxu0
    %v2512 = vpop.f32.mrb[0].mxu0
    %v2513 = vadd.f32 %v1593, %v2512
    %v2514 = vpop.f32.mrb[0].mxu0
    %2515 = vmatprep.mubr.bf16.mxu0 %v2104
    %2516 = vmatmul.mubr.bf16.gmra.mrb[0].mxu0 %v2103
    %v2517 = vpop.f32.mrb[0].mxu0
    %v2518 = vadd.f32 %v1593, %v2517
    %v2519 = vpop.f32.mrb[0].mxu0
    %v2520 = vpop.f32.mrb[0].mxu0
    %v2521 = vadd.f32 %v1593, %v2520
    %v2522 = vpop.f32.mrb[0].mxu0
    %2523 = vdwg.mxu0
    %2524 = vmatprep.subr.bf16.mxu0 0
    %2525 = vmatpush1.bf16.msra.mxu0 %v1572
    %2526 = vmatprep.subr.bf16.mxu0 0
    %2527 = vmatpush1.bf16.msra.mxu0 %v1573
    %2528 = vmatprep.subr.bf16.mxu0 0
    %2529 = vmatpush1.bf16.msra.mxu0 %v1574
    %2530 = vmatprep.subr.bf16.mxu0 0
    %2531 = vmatpush1.bf16.msra.mxu0 %v1575
    %2532 = vmatprep.subr.bf16.mxu0 0
    %2533 = vmatpush1.bf16.msra.mxu0 %v1576
    %2534 = vmatprep.subr.bf16.mxu0 0
    %2535 = vmatpush1.bf16.msra.mxu0 %v1577
    %2536 = vmatprep.subr.bf16.mxu0 0
    %2537 = vmatpush1.bf16.msra.mxu0 %v1578
    %2538 = vmatprep.subr.bf16.mxu0 0
    %2539 = vmatpush1.bf16.msra.mxu0 %v1579
    %2540 = vmatprep.subr.bf16.mxu0 0
    %2541 = vmatpush1.bf16.msra.mxu0 %v1580
    %2542 = vmatprep.subr.bf16.mxu0 0
    %2543 = vmatpush1.bf16.msra.mxu0 %v1581
    %2544 = vmatprep.subr.bf16.mxu0 0
    %2545 = vmatpush1.bf16.msra.mxu0 %v1582
    %2546 = vmatprep.subr.bf16.mxu0 0
    %2547 = vmatpush1.bf16.msra.mxu0 %v1583
    %2548 = vmatprep.subr.bf16.mxu0 0
    %2549 = vmatpush1.bf16.msra.mxu0 %v1584
    %2550 = vmatprep.subr.bf16.mxu0 0
    %2551 = vmatpush1.bf16.msra.mxu0 %v1585
    %2552 = vmatprep.subr.bf16.mxu0 0
    %2553 = vmatpush1.bf16.msra.mxu0 %v1586
    %2554 = vmatprep.subr.bf16.mxu0 0
    %2555 = vmatpush1.bf16.msra.mxu0 %v1587
    %2556 = vmatprep.mubr.bf16.mxu0 %v1982
    %2557 = vmatmul.mubr.bf16.gmra.mrb[0].mxu0 %v1981
    %v2558 = vpop.f32.mrb[0].mxu0
    %v2559 = vadd.f32 %v2270, %v2558
    %v2560 = vpop.f32.mrb[0].mxu0
    %v2561 = vpop.f32.mrb[0].mxu0
    %v2562 = vadd.f32 %v2273, %v2561
    %v2563 = vpop.f32.mrb[0].mxu0
    %2564 = vmatprep.mubr.bf16.mxu0 %v1986
    %2565 = vmatmul.mubr.bf16.gmra.mrb[0].mxu0 %v1985
    %v2566 = vpop.f32.mrb[0].mxu0
    %v2567 = vadd.f32 %v2278, %v2566
    %v2568 = vpop.f32.mrb[0].mxu0
    %v2569 = vpop.f32.mrb[0].mxu0
    %v2570 = vadd.f32 %v2281, %v2569
    %v2571 = vpop.f32.mrb[0].mxu0
    %2572 = vmatprep.mubr.bf16.mxu0 %v1990
    %2573 = vmatmul.mubr.bf16.gmra.mrb[0].mxu0 %v1989
    %v2574 = vpop.f32.mrb[0].mxu0
    %v2575 = vadd.f32 %v2286, %v2574
    %v2576 = vpop.f32.mrb[0].mxu0
    %v2577 = vpop.f32.mrb[0].mxu0
    %v2578 = vadd.f32 %v2289, %v2577
    %v2579 = vpop.f32.mrb[0].mxu0
    %2580 = vmatprep.mubr.bf16.mxu0 %v1994
    %2581 = vmatmul.mubr.bf16.gmra.mrb[0].mxu0 %v1993
    %v2582 = vpop.f32.mrb[0].mxu0
    %v2583 = vadd.f32 %v2294, %v2582
    %v2584 = vpop.f32.mrb[0].mxu0
    %v2585 = vpop.f32.mrb[0].mxu0
    %v2586 = vadd.f32 %v2297, %v2585
    %v2587 = vpop.f32.mrb[0].mxu0
    %2588 = vmatprep.mubr.bf16.mxu0 %v1998
    %2589 = vmatmul.mubr.bf16.gmra.mrb[0].mxu0 %v1997
    %v2590 = vpop.f32.mrb[0].mxu0
    %v2591 = vadd.f32 %v2302, %v2590
    %v2592 = vpop.f32.mrb[0].mxu0
    %v2593 = vpop.f32.mrb[0].mxu0
    %v2594 = vadd.f32 %v2305, %v2593
    %v2595 = vpop.f32.mrb[0].mxu0
    %2596 = vmatprep.mubr.bf16.mxu0 %v2002
    %2597 = vmatmul.mubr.bf16.gmra.mrb[0].mxu0 %v2001
    %v2598 = vpop.f32.mrb[0].mxu0
    %v2599 = vadd.f32 %v2310, %v2598
    %v2600 = vpop.f32.mrb[0].mxu0
    %v2601 = vpop.f32.mrb[0].mxu0
    %v2602 = vadd.f32 %v2313, %v2601
    %v2603 = vpop.f32.mrb[0].mxu0
    %2604 = vmatprep.mubr.bf16.mxu0 %v2006
    %2605 = vmatmul.mubr.bf16.gmra.mrb[0].mxu0 %v2005
    %v2606 = vpop.f32.mrb[0].mxu0
    %v2607 = vadd.f32 %v2318, %v2606
    %v2608 = vpop.f32.mrb[0].mxu0
    %v2609 = vpop.f32.mrb[0].mxu0
    %v2610 = vadd.f32 %v2321, %v2609
    %v2611 = vpop.f32.mrb[0].mxu0
    %2612 = vmatprep.mubr.bf16.mxu0 %v2010
    %2613 = vmatmul.mubr.bf16.gmra.mrb[0].mxu0 %v2009
    %v2614 = vpop.f32.mrb[0].mxu0
    %v2615 = vadd.f32 %v2326, %v2614
    %v2616 = vpop.f32.mrb[0].mxu0
    %v2617 = vpop.f32.mrb[0].mxu0
    %v2618 = vadd.f32 %v2329, %v2617
    %v2619 = vpop.f32.mrb[0].mxu0
    %2620 = vmatprep.mubr.bf16.mxu0 %v2014
    %2621 = vmatmul.mubr.bf16.gmra.mrb[0].mxu0 %v2013
    %v2622 = vpop.f32.mrb[0].mxu0
    %v2623 = vadd.f32 %v2334, %v2622
    %v2624 = vpop.f32.mrb[0].mxu0
    %v2625 = vpop.f32.mrb[0].mxu0
    %v2626 = vadd.f32 %v2337, %v2625
    %v2627 = vpop.f32.mrb[0].mxu0
    %2628 = vmatprep.mubr.bf16.mxu0 %v2018
    %2629 = vmatmul.mubr.bf16.gmra.mrb[0].mxu0 %v2017
    %v2630 = vpop.f32.mrb[0].mxu0
    %v2631 = vadd.f32 %v2342, %v2630
    %v2632 = vpop.f32.mrb[0].mxu0
    %v2633 = vpop.f32.mrb[0].mxu0
    %v2634 = vadd.f32 %v2345, %v2633
    %v2635 = vpop.f32.mrb[0].mxu0
    %2636 = vmatprep.mubr.bf16.mxu0 %v2022
    %2637 = vmatmul.mubr.bf16.gmra.mrb[0].mxu0 %v2021
    %v2638 = vpop.f32.mrb[0].mxu0
    %v2639 = vadd.f32 %v2350, %v2638
    %v2640 = vpop.f32.mrb[0].mxu0
    %v2641 = vpop.f32.mrb[0].mxu0
    %v2642 = vadd.f32 %v2353, %v2641
    %v2643 = vpop.f32.mrb[0].mxu0
    %2644 = vmatprep.mubr.bf16.mxu0 %v2026
    %2645 = vmatmul.mubr.bf16.gmra.mrb[0].mxu0 %v2025
    %v2646 = vpop.f32.mrb[0].mxu0
    %v2647 = vadd.f32 %v2358, %v2646
    %v2648 = vpop.f32.mrb[0].mxu0
    %v2649 = vpop.f32.mrb[0].mxu0
    %v2650 = vadd.f32 %v2361, %v2649
    %v2651 = vpop.f32.mrb[0].mxu0
    %2652 = vmatprep.mubr.bf16.mxu0 %v2030
    %2653 = vmatmul.mubr.bf16.gmra.mrb[0].mxu0 %v2029
    %v2654 = vpop.f32.mrb[0].mxu0
    %v2655 = vadd.f32 %v2366, %v2654
    %v2656 = vpop.f32.mrb[0].mxu0
    %v2657 = vpop.f32.mrb[0].mxu0
    %v2658 = vadd.f32 %v2369, %v2657
    %v2659 = vpop.f32.mrb[0].mxu0
    %2660 = vmatprep.mubr.bf16.mxu0 %v2034
    %2661 = vmatmul.mubr.bf16.gmra.mrb[0].mxu0 %v2033
    %v2662 = vpop.f32.mrb[0].mxu0
    %v2663 = vadd.f32 %v2374, %v2662
    %v2664 = vpop.f32.mrb[0].mxu0
    %v2665 = vpop.f32.mrb[0].mxu0
    %v2666 = vadd.f32 %v2377, %v2665
    %v2667 = vpop.f32.mrb[0].mxu0
    %2668 = vmatprep.mubr.bf16.mxu0 %v2038
    %2669 = vmatmul.mubr.bf16.gmra.mrb[0].mxu0 %v2037
    %v2670 = vpop.f32.mrb[0].mxu0
    %v2671 = vadd.f32 %v2382, %v2670
    %v2672 = vpop.f32.mrb[0].mxu0
    %v2673 = vpop.f32.mrb[0].mxu0
    %v2674 = vadd.f32 %v2385, %v2673
    %v2675 = vpop.f32.mrb[0].mxu0
    %2676 = vmatprep.mubr.bf16.mxu0 %v2042
    %2677 = vmatmul.mubr.bf16.gmra.mrb[0].mxu0 %v2041
    %v2678 = vpop.f32.mrb[0].mxu0
    %v2679 = vadd.f32 %v2390, %v2678
    %v2680 = vpop.f32.mrb[0].mxu0
    %v2681 = vpop.f32.mrb[0].mxu0
    %v2682 = vadd.f32 %v2393, %v2681
    %v2683 = vpop.f32.mrb[0].mxu0
    %2684 = vmatprep.mubr.bf16.mxu0 %v2046
    %2685 = vmatmul.mubr.bf16.gmra.mrb[0].mxu0 %v2045
    %v2686 = vpop.f32.mrb[0].mxu0
    %v2687 = vadd.f32 %v2398, %v2686
    %v2688 = vpop.f32.mrb[0].mxu0
    %v2689 = vpop.f32.mrb[0].mxu0
    %v2690 = vadd.f32 %v2401, %v2689
    %v2691 = vpop.f32.mrb[0].mxu0
    %2692 = vmatprep.mubr.bf16.mxu0 %v2050
    %2693 = vmatmul.mubr.bf16.gmra.mrb[0].mxu0 %v2049
    %v2694 = vpop.f32.mrb[0].mxu0
    %v2695 = vadd.f32 %v2406, %v2694
    %v2696 = vpop.f32.mrb[0].mxu0
    %v2697 = vpop.f32.mrb[0].mxu0
    %v2698 = vadd.f32 %v2409, %v2697
    %v2699 = vpop.f32.mrb[0].mxu0
    %2700 = vmatprep.mubr.bf16.mxu0 %v2054
    %2701 = vmatmul.mubr.bf16.gmra.mrb[0].mxu0 %v2053
    %v2702 = vpop.f32.mrb[0].mxu0
    %v2703 = vadd.f32 %v2414, %v2702
    %v2704 = vpop.f32.mrb[0].mxu0
    %v2705 = vpop.f32.mrb[0].mxu0
    %v2706 = vadd.f32 %v2417, %v2705
    %v2707 = vpop.f32.mrb[0].mxu0
    %2708 = vmatprep.mubr.bf16.mxu0 %v2058
    %2709 = vmatmul.mubr.bf16.gmra.mrb[0].mxu0 %v2057
    %v2710 = vpop.f32.mrb[0].mxu0
    %v2711 = vadd.f32 %v2422, %v2710
    %v2712 = vpop.f32.mrb[0].mxu0
    %v2713 = vpop.f32.mrb[0].mxu0
    %v2714 = vadd.f32 %v2425, %v2713
    %v2715 = vpop.f32.mrb[0].mxu0
    %2716 = vmatprep.mubr.bf16.mxu0 %v2062
    %2717 = vmatmul.mubr.bf16.gmra.mrb[0].mxu0 %v2061
    %v2718 = vpop.f32.mrb[0].mxu0
    %v2719 = vadd.f32 %v2430, %v2718
    %v2720 = vpop.f32.mrb[0].mxu0
    %v2721 = vpop.f32.mrb[0].mxu0
    %v2722 = vadd.f32 %v2433, %v2721
    %v2723 = vpop.f32.mrb[0].mxu0
    %2724 = vmatprep.mubr.bf16.mxu0 %v2066
    %2725 = vmatmul.mubr.bf16.gmra.mrb[0].mxu0 %v2065
    %v2726 = vpop.f32.mrb[0].mxu0
    %v2727 = vadd.f32 %v2438, %v2726
    %v2728 = vpop.f32.mrb[0].mxu0
    %v2729 = vpop.f32.mrb[0].mxu0
    %v2730 = vadd.f32 %v2441, %v2729
    %v2731 = vpop.f32.mrb[0].mxu0
    %2732 = vmatprep.mubr.bf16.mxu0 %v2070
    %2733 = vmatmul.mubr.bf16.gmra.mrb[0].mxu0 %v2069
    %v2734 = vpop.f32.mrb[0].mxu0
    %v2735 = vadd.f32 %v2446, %v2734
    %v2736 = vpop.f32.mrb[0].mxu0
    %v2737 = vpop.f32.mrb[0].mxu0
    %v2738 = vadd.f32 %v2449, %v2737
    %v2739 = vpop.f32.mrb[0].mxu0
    %2740 = vmatprep.mubr.bf16.mxu0 %v2074
    %2741 = vmatmul.mubr.bf16.gmra.mrb[0].mxu0 %v2073
    %v2742 = vpop.f32.mrb[0].mxu0
    %v2743 = vadd.f32 %v2454, %v2742
    %v2744 = vpop.f32.mrb[0].mxu0
    %v2745 = vpop.f32.mrb[0].mxu0
    %v2746 = vadd.f32 %v2457, %v2745
    %v2747 = vpop.f32.mrb[0].mxu0
    %2748 = vmatprep.mubr.bf16.mxu0 %v2078
    %2749 = vmatmul.mubr.bf16.gmra.mrb[0].mxu0 %v2077
    %v2750 = vpop.f32.mrb[0].mxu0
    %v2751 = vadd.f32 %v2462, %v2750
    %v2752 = vpop.f32.mrb[0].mxu0
    %v2753 = vpop.f32.mrb[0].mxu0
    %v2754 = vadd.f32 %v2465, %v2753
    %v2755 = vpop.f32.mrb[0].mxu0
    %2756 = vmatprep.mubr.bf16.mxu0 %v2082
    %2757 = vmatmul.mubr.bf16.gmra.mrb[0].mxu0 %v2081
    %v2758 = vpop.f32.mrb[0].mxu0
    %v2759 = vadd.f32 %v2470, %v2758
    %v2760 = vpop.f32.mrb[0].mxu0
    %v2761 = vpop.f32.mrb[0].mxu0
    %v2762 = vadd.f32 %v2473, %v2761
    %v2763 = vpop.f32.mrb[0].mxu0
    %2764 = vmatprep.mubr.bf16.mxu0 %v2086
    %2765 = vmatmul.mubr.bf16.gmra.mrb[0].mxu0 %v2085
    %v2766 = vpop.f32.mrb[0].mxu0
    %v2767 = vadd.f32 %v2478, %v2766
    %v2768 = vpop.f32.mrb[0].mxu0
    %v2769 = vpop.f32.mrb[0].mxu0
    %v2770 = vadd.f32 %v2481, %v2769
    %v2771 = vpop.f32.mrb[0].mxu0
    %2772 = vmatprep.mubr.bf16.mxu0 %v2090
    %2773 = vmatmul.mubr.bf16.gmra.mrb[0].mxu0 %v2089
    %v2774 = vpop.f32.mrb[0].mxu0
    %v2775 = vadd.f32 %v2486, %v2774
    %v2776 = vpop.f32.mrb[0].mxu0
    %v2777 = vpop.f32.mrb[0].mxu0
    %v2778 = vadd.f32 %v2489, %v2777
    %v2779 = vpop.f32.mrb[0].mxu0
    %2780 = vmatprep.mubr.bf16.mxu0 %v2094
    %2781 = vmatmul.mubr.bf16.gmra.mrb[0].mxu0 %v2093
    %v2782 = vpop.f32.mrb[0].mxu0
    %v2783 = vadd.f32 %v2494, %v2782
    %v2784 = vpop.f32.mrb[0].mxu0
    %v2785 = vpop.f32.mrb[0].mxu0
    %v2786 = vadd.f32 %v2497, %v2785
    %v2787 = vpop.f32.mrb[0].mxu0
    %2788 = vmatprep.mubr.bf16.mxu0 %v2098
    %2789 = vmatmul.mubr.bf16.gmra.mrb[0].mxu0 %v2097
    %v2790 = vpop.f32.mrb[0].mxu0
    %v2791 = vadd.f32 %v2502, %v2790
    %v2792 = vpop.f32.mrb[0].mxu0
    %v2793 = vpop.f32.mrb[0].mxu0
    %v2794 = vadd.f32 %v2505, %v2793
    %v2795 = vpop.f32.mrb[0].mxu0
    %2796 = vmatprep.mubr.bf16.mxu0 %v2102
    %2797 = vmatmul.mubr.bf16.gmra.mrb[0].mxu0 %v2101
    %v2798 = vpop.f32.mrb[0].mxu0
    %v2799 = vadd.f32 %v2510, %v2798
    %v2800 = vpop.f32.mrb[0].mxu0
    %v2801 = vpop.f32.mrb[0].mxu0
    %v2802 = vadd.f32 %v2513, %v2801
    %v2803 = vpop.f32.mrb[0].mxu0
    %2804 = vmatprep.mubr.bf16.mxu0 %v2106
    %2805 = vmatmul.mubr.bf16.gmra.mrb[0].mxu0 %v2105
    %v2806 = vpop.f32.mrb[0].mxu0
    %v2807 = vadd.f32 %v2518, %v2806
    %v2808 = vpop.f32.mrb[0].mxu0
    %v2809 = vpop.f32.mrb[0].mxu0
    %v2810 = vadd.f32 %v2521, %v2809
    %v2811 = vpop.f32.mrb[0].mxu0
    %2812 = vdwg.mxu0
    %v2813 = vld [vmem:[%s6] sm:$0xff]
    %v2814 = vld [vmem:[%s6 + $0x8] sm:$0xff]
    %v2815 = vld [vmem:[%s6 + $0x10] sm:$0xff]
    %v2816 = vld [vmem:[%s6 + $0x18] sm:$0xff]
    %v2817 = vld [vmem:[%s6 + $0x20] sm:$0xff]
    %v2818 = vld [vmem:[%s6 + $0x28] sm:$0xff]
    %v2819 = vld [vmem:[%s6 + $0x30] sm:$0xff]
    %v2820 = vld [vmem:[%s6 + $0x38] sm:$0xff]
    %v2821 = vld [vmem:[%s6 + $0x40] sm:$0xff]
    %v2822 = vld [vmem:[%s6 + $0x48] sm:$0xff]
    %v2823 = vld [vmem:[%s6 + $0x50] sm:$0xff]
    %v2824 = vld [vmem:[%s6 + $0x58] sm:$0xff]
    %v2825 = vld [vmem:[%s6 + $0x60] sm:$0xff]
    %v2826 = vld [vmem:[%s6 + $0x68] sm:$0xff]
    %v2827 = vld [vmem:[%s6 + $0x70] sm:$0xff]
    %v2828 = vld [vmem:[%s6 + $0x78] sm:$0xff]
    %v2829 = vld [vmem:[%s7] sm:$0x1]
    %v2831 = vlaneseq
    %v2832 = vshrl.u32 %v2831, 7
    %v2833 = vsub.s32 0, %v2832
    %v2834 = vrot.slane %v2829, %v2833
    %2836 = vmatprep.subr.mxu0 0.0
    %2837 = vmatpush1.msra.mxu0 %v2813
    %2838 = vmatprep.subr.mxu0 0.0
    %2839 = vmatpush1.msra.mxu0 %v2814
    %2840 = vmatprep.subr.mxu0 0.0
    %2841 = vmatpush1.msra.mxu0 %v2815
    %2842 = vmatprep.subr.mxu0 0.0
    %2843 = vmatpush1.msra.mxu0 %v2816
    %2844 = vmatprep.subr.mxu0 0.0
    %2845 = vmatpush1.msra.mxu0 %v2817
    %2846 = vmatprep.subr.mxu0 0.0
    %2847 = vmatpush1.msra.mxu0 %v2818
    %2848 = vmatprep.subr.mxu0 0.0
    %2849 = vmatpush1.msra.mxu0 %v2819
    %2850 = vmatprep.subr.mxu0 0.0
    %2851 = vmatpush1.msra.mxu0 %v2820
    %2852 = vmatprep.subr.mxu0 0.0
    %2853 = vmatpush1.msra.mxu0 %v2821
    %2854 = vmatprep.subr.mxu0 0.0
    %2855 = vmatpush1.msra.mxu0 %v2822
    %2856 = vmatprep.subr.mxu0 0.0
    %2857 = vmatpush1.msra.mxu0 %v2823
    %2858 = vmatprep.subr.mxu0 0.0
    %2859 = vmatpush1.msra.mxu0 %v2824
    %2860 = vmatprep.subr.mxu0 0.0
    %2861 = vmatpush1.msra.mxu0 %v2825
    %2862 = vmatprep.subr.mxu0 0.0
    %2863 = vmatpush1.msra.mxu0 %v2826
    %2864 = vmatprep.subr.mxu0 0.0
    %2865 = vmatpush1.msra.mxu0 %v2827
    %2866 = vmatprep.subr.mxu0 0.0
    %2867 = vmatpush1.msra.mxu0 %v2828
    %2868 = vmatprep.subr.mxu0 0.0
    %2869 = vmatpush1.msra.mxu0 0.0
    %2870 = vmatprep.subr.mxu0 0.0
    %2871 = vmatpush1.msra.mxu0 0.0
    %2872 = vmatprep.subr.mxu0 0.0
    %2873 = vmatpush1.msra.mxu0 0.0
    %2874 = vmatprep.subr.mxu0 0.0
    %2875 = vmatpush1.msra.mxu0 0.0
    %2876 = vmatprep.subr.mxu0 0.0
    %2877 = vmatpush1.msra.mxu0 0.0
    %2878 = vmatprep.subr.mxu0 0.0
    %2879 = vmatpush1.msra.mxu0 0.0
    %2880 = vmatprep.subr.mxu0 0.0
    %2881 = vmatpush1.msra.mxu0 0.0
    %2882 = vmatprep.subr.mxu0 0.0
    %2883 = vmatpush1.msra.mxu0 0.0
    %2884 = vmatprep.subr.mxu0 0.0
    %2885 = vmatpush1.msra.mxu0 0.0
    %2886 = vmatprep.subr.mxu0 0.0
    %2887 = vmatpush1.msra.mxu0 0.0
    %2888 = vmatprep.subr.mxu0 0.0
    %2889 = vmatpush1.msra.mxu0 0.0
    %2890 = vmatprep.subr.mxu0 0.0
    %2891 = vmatpush1.msra.mxu0 0.0
    %2892 = vmatprep.subr.mxu0 0.0
    %2893 = vmatpush1.msra.mxu0 0.0
    %2894 = vmatprep.subr.mxu0 0.0
    %2895 = vmatpush1.msra.mxu0 0.0
    %2896 = vmatprep.subr.mxu0 0.0
    %2897 = vmatpush1.msra.mxu0 0.0
    %2898 = vmatprep.subr.mxu0 0.0
    %2899 = vmatpush1.msra.mxu0 0.0
    %2900 = vmatprep.mubr.f32.mxu0 0.0
    %2901 = vmatmul.mubr.f32.gmra.mrb[0].mxu0 %v1110
    %v2902 = vpop.f32.mrb[0].mxu0
    %v2903 = vadd.f32 %v2834, %v2902
    %v2904 = vpop.f32.mrb[0].mxu0
    %2905 = vmatprep.mubr.f32.mxu0 0.0
    %2906 = vmatmul.mubr.f32.gmra.mrb[0].mxu0 %v1115
    %v2907 = vpop.f32.mrb[0].mxu0
    %v2908 = vadd.f32 %v2834, %v2907
    %v2909 = vpop.f32.mrb[0].mxu0
    %2910 = vmatprep.mubr.f32.mxu0 0.0
    %2911 = vmatmul.mubr.f32.gmra.mrb[0].mxu0 %v1120
    %v2912 = vpop.f32.mrb[0].mxu0
    %v2913 = vadd.f32 %v2834, %v2912
    %v2914 = vpop.f32.mrb[0].mxu0
    %2915 = vmatprep.mubr.f32.mxu0 0.0
    %2916 = vmatmul.mubr.f32.gmra.mrb[0].mxu0 %v1125
    %v2917 = vpop.f32.mrb[0].mxu0
    %v2918 = vadd.f32 %v2834, %v2917
    %v2919 = vpop.f32.mrb[0].mxu0
    %2920 = vmatprep.mubr.f32.mxu0 0.0
    %2921 = vmatmul.mubr.f32.gmra.mrb[0].mxu0 %v1130
    %v2922 = vpop.f32.mrb[0].mxu0
    %v2923 = vadd.f32 %v2834, %v2922
    %v2924 = vpop.f32.mrb[0].mxu0
    %2925 = vmatprep.mubr.f32.mxu0 0.0
    %2926 = vmatmul.mubr.f32.gmra.mrb[0].mxu0 %v1135
    %v2927 = vpop.f32.mrb[0].mxu0
    %v2928 = vadd.f32 %v2834, %v2927
    %v2929 = vpop.f32.mrb[0].mxu0
    %2930 = vmatprep.mubr.f32.mxu0 0.0
    %2931 = vmatmul.mubr.f32.gmra.mrb[0].mxu0 %v1140
    %v2932 = vpop.f32.mrb[0].mxu0
    %v2933 = vadd.f32 %v2834, %v2932
    %v2934 = vpop.f32.mrb[0].mxu0
    %2935 = vmatprep.mubr.f32.mxu0 0.0
    %2936 = vmatmul.mubr.f32.gmra.mrb[0].mxu0 %v1145
    %v2937 = vpop.f32.mrb[0].mxu0
    %v2938 = vadd.f32 %v2834, %v2937
    %v2939 = vpop.f32.mrb[0].mxu0
    %2940 = vmatprep.mubr.f32.mxu0 0.0
    %2941 = vmatmul.mubr.f32.gmra.mrb[0].mxu0 %v1150
    %v2942 = vpop.f32.mrb[0].mxu0
    %v2943 = vadd.f32 %v2834, %v2942
    %v2944 = vpop.f32.mrb[0].mxu0
    %2945 = vmatprep.mubr.f32.mxu0 0.0
    %2946 = vmatmul.mubr.f32.gmra.mrb[0].mxu0 %v1155
    %v2947 = vpop.f32.mrb[0].mxu0
    %v2948 = vadd.f32 %v2834, %v2947
    %v2949 = vpop.f32.mrb[0].mxu0
    %2950 = vmatprep.mubr.f32.mxu0 0.0
    %2951 = vmatmul.mubr.f32.gmra.mrb[0].mxu0 %v1160
    %v2952 = vpop.f32.mrb[0].mxu0
    %v2953 = vadd.f32 %v2834, %v2952
    %v2954 = vpop.f32.mrb[0].mxu0
    %2955 = vmatprep.mubr.f32.mxu0 0.0
    %2956 = vmatmul.mubr.f32.gmra.mrb[0].mxu0 %v1165
    %v2957 = vpop.f32.mrb[0].mxu0
    %v2958 = vadd.f32 %v2834, %v2957
    %v2959 = vpop.f32.mrb[0].mxu0
    %2960 = vmatprep.mubr.f32.mxu0 0.0
    %2961 = vmatmul.mubr.f32.gmra.mrb[0].mxu0 %v1170
    %v2962 = vpop.f32.mrb[0].mxu0
    %v2963 = vadd.f32 %v2834, %v2962
    %v2964 = vpop.f32.mrb[0].mxu0
    %2965 = vmatprep.mubr.f32.mxu0 0.0
    %2966 = vmatmul.mubr.f32.gmra.mrb[0].mxu0 %v1175
    %v2967 = vpop.f32.mrb[0].mxu0
    %v2968 = vadd.f32 %v2834, %v2967
    %v2969 = vpop.f32.mrb[0].mxu0
    %2970 = vmatprep.mubr.f32.mxu0 0.0
    %2971 = vmatmul.mubr.f32.gmra.mrb[0].mxu0 %v1180
    %v2972 = vpop.f32.mrb[0].mxu0
    %v2973 = vadd.f32 %v2834, %v2972
    %v2974 = vpop.f32.mrb[0].mxu0
    %2975 = vmatprep.mubr.f32.mxu0 0.0
    %2976 = vmatmul.mubr.f32.gmra.mrb[0].mxu0 %v1185
    %v2977 = vpop.f32.mrb[0].mxu0
    %v2978 = vadd.f32 %v2834, %v2977
    %v2979 = vpop.f32.mrb[0].mxu0
    %2980 = vmatprep.mubr.f32.mxu0 0.0
    %2981 = vmatmul.mubr.f32.gmra.mrb[0].mxu0 %v1190
    %v2982 = vpop.f32.mrb[0].mxu0
    %v2983 = vadd.f32 %v2834, %v2982
    %v2984 = vpop.f32.mrb[0].mxu0
    %2985 = vmatprep.mubr.f32.mxu0 0.0
    %2986 = vmatmul.mubr.f32.gmra.mrb[0].mxu0 %v1195
    %v2987 = vpop.f32.mrb[0].mxu0
    %v2988 = vadd.f32 %v2834, %v2987
    %v2989 = vpop.f32.mrb[0].mxu0
    %2990 = vmatprep.mubr.f32.mxu0 0.0
    %2991 = vmatmul.mubr.f32.gmra.mrb[0].mxu0 %v1200
    %v2992 = vpop.f32.mrb[0].mxu0
    %v2993 = vadd.f32 %v2834, %v2992
    %v2994 = vpop.f32.mrb[0].mxu0
    %2995 = vmatprep.mubr.f32.mxu0 0.0
    %2996 = vmatmul.mubr.f32.gmra.mrb[0].mxu0 %v1205
    %v2997 = vpop.f32.mrb[0].mxu0
    %v2998 = vadd.f32 %v2834, %v2997
    %v2999 = vpop.f32.mrb[0].mxu0
    %3000 = vmatprep.mubr.f32.mxu0 0.0
    %3001 = vmatmul.mubr.f32.gmra.mrb[0].mxu0 %v1210
    %v3002 = vpop.f32.mrb[0].mxu0
    %v3003 = vadd.f32 %v2834, %v3002
    %v3004 = vpop.f32.mrb[0].mxu0
    %3005 = vmatprep.mubr.f32.mxu0 0.0
    %3006 = vmatmul.mubr.f32.gmra.mrb[0].mxu0 %v1215
    %v3007 = vpop.f32.mrb[0].mxu0
    %v3008 = vadd.f32 %v2834, %v3007
    %v3009 = vpop.f32.mrb[0].mxu0
    %3010 = vmatprep.mubr.f32.mxu0 0.0
    %3011 = vmatmul.mubr.f32.gmra.mrb[0].mxu0 %v1220
    %v3012 = vpop.f32.mrb[0].mxu0
    %v3013 = vadd.f32 %v2834, %v3012
    %v3014 = vpop.f32.mrb[0].mxu0
    %3015 = vmatprep.mubr.f32.mxu0 0.0
    %3016 = vmatmul.mubr.f32.gmra.mrb[0].mxu0 %v1225
    %v3017 = vpop.f32.mrb[0].mxu0
    %v3018 = vadd.f32 %v2834, %v3017
    %v3019 = vpop.f32.mrb[0].mxu0
    %3020 = vmatprep.mubr.f32.mxu0 0.0
    %3021 = vmatmul.mubr.f32.gmra.mrb[0].mxu0 %v1230
    %v3022 = vpop.f32.mrb[0].mxu0
    %v3023 = vadd.f32 %v2834, %v3022
    %v3024 = vpop.f32.mrb[0].mxu0
    %3025 = vmatprep.mubr.f32.mxu0 0.0
    %3026 = vmatmul.mubr.f32.gmra.mrb[0].mxu0 %v1235
    %v3027 = vpop.f32.mrb[0].mxu0
    %v3028 = vadd.f32 %v2834, %v3027
    %v3029 = vpop.f32.mrb[0].mxu0
    %3030 = vmatprep.mubr.f32.mxu0 0.0
    %3031 = vmatmul.mubr.f32.gmra.mrb[0].mxu0 %v1240
    %v3032 = vpop.f32.mrb[0].mxu0
    %v3033 = vadd.f32 %v2834, %v3032
    %v3034 = vpop.f32.mrb[0].mxu0
    %3035 = vmatprep.mubr.f32.mxu0 0.0
    %3036 = vmatmul.mubr.f32.gmra.mrb[0].mxu0 %v1245
    %v3037 = vpop.f32.mrb[0].mxu0
    %v3038 = vadd.f32 %v2834, %v3037
    %v3039 = vpop.f32.mrb[0].mxu0
    %3040 = vmatprep.mubr.f32.mxu0 0.0
    %3041 = vmatmul.mubr.f32.gmra.mrb[0].mxu0 %v1250
    %v3042 = vpop.f32.mrb[0].mxu0
    %v3043 = vadd.f32 %v2834, %v3042
    %v3044 = vpop.f32.mrb[0].mxu0
    %3045 = vmatprep.mubr.f32.mxu0 0.0
    %3046 = vmatmul.mubr.f32.gmra.mrb[0].mxu0 %v1255
    %v3047 = vpop.f32.mrb[0].mxu0
    %v3048 = vadd.f32 %v2834, %v3047
    %v3049 = vpop.f32.mrb[0].mxu0
    %3050 = vmatprep.mubr.f32.mxu0 0.0
    %3051 = vmatmul.mubr.f32.gmra.mrb[0].mxu0 %v1260
    %v3052 = vpop.f32.mrb[0].mxu0
    %v3053 = vadd.f32 %v2834, %v3052
    %v3054 = vpop.f32.mrb[0].mxu0
    %3055 = vmatprep.mubr.f32.mxu0 0.0
    %3056 = vmatmul.mubr.f32.gmra.mrb[0].mxu0 %v1265
    %v3057 = vpop.f32.mrb[0].mxu0
    %v3058 = vadd.f32 %v2834, %v3057
    %v3059 = vpop.f32.mrb[0].mxu0
    %3060 = vmatprep.mubr.f32.mxu0 0.0
    %3061 = vmatmul.mubr.f32.gmra.mrb[0].mxu0 %v1270
    %v3062 = vpop.f32.mrb[0].mxu0
    %v3063 = vadd.f32 %v2834, %v3062
    %v3064 = vpop.f32.mrb[0].mxu0
    %3065 = vmatprep.mubr.f32.mxu0 0.0
    %3066 = vmatmul.mubr.f32.gmra.mrb[0].mxu0 %v1275
    %v3067 = vpop.f32.mrb[0].mxu0
    %v3068 = vadd.f32 %v2834, %v3067
    %v3069 = vpop.f32.mrb[0].mxu0
    %3070 = vmatprep.mubr.f32.mxu0 0.0
    %3071 = vmatmul.mubr.f32.gmra.mrb[0].mxu0 %v1280
    %v3072 = vpop.f32.mrb[0].mxu0
    %v3073 = vadd.f32 %v2834, %v3072
    %v3074 = vpop.f32.mrb[0].mxu0
    %3075 = vmatprep.mubr.f32.mxu0 0.0
    %3076 = vmatmul.mubr.f32.gmra.mrb[0].mxu0 %v1285
    %v3077 = vpop.f32.mrb[0].mxu0
    %v3078 = vadd.f32 %v2834, %v3077
    %v3079 = vpop.f32.mrb[0].mxu0
    %3080 = vmatprep.mubr.f32.mxu0 0.0
    %3081 = vmatmul.mubr.f32.gmra.mrb[0].mxu0 %v1290
    %v3082 = vpop.f32.mrb[0].mxu0
    %v3083 = vadd.f32 %v2834, %v3082
    %v3084 = vpop.f32.mrb[0].mxu0
    %3085 = vmatprep.mubr.f32.mxu0 0.0
    %3086 = vmatmul.mubr.f32.gmra.mrb[0].mxu0 %v1295
    %v3087 = vpop.f32.mrb[0].mxu0
    %v3088 = vadd.f32 %v2834, %v3087
    %v3089 = vpop.f32.mrb[0].mxu0
    %3090 = vmatprep.mubr.f32.mxu0 0.0
    %3091 = vmatmul.mubr.f32.gmra.mrb[0].mxu0 %v1300
    %v3092 = vpop.f32.mrb[0].mxu0
    %v3093 = vadd.f32 %v2834, %v3092
    %v3094 = vpop.f32.mrb[0].mxu0
    %3095 = vmatprep.mubr.f32.mxu0 0.0
    %3096 = vmatmul.mubr.f32.gmra.mrb[0].mxu0 %v1305
    %v3097 = vpop.f32.mrb[0].mxu0
    %v3098 = vadd.f32 %v2834, %v3097
    %v3099 = vpop.f32.mrb[0].mxu0
    %3100 = vmatprep.mubr.f32.mxu0 0.0
    %3101 = vmatmul.mubr.f32.gmra.mrb[0].mxu0 %v1310
    %v3102 = vpop.f32.mrb[0].mxu0
    %v3103 = vadd.f32 %v2834, %v3102
    %v3104 = vpop.f32.mrb[0].mxu0
    %3105 = vmatprep.mubr.f32.mxu0 0.0
    %3106 = vmatmul.mubr.f32.gmra.mrb[0].mxu0 %v1315
    %v3107 = vpop.f32.mrb[0].mxu0
    %v3108 = vadd.f32 %v2834, %v3107
    %v3109 = vpop.f32.mrb[0].mxu0
    %3110 = vmatprep.mubr.f32.mxu0 0.0
    %3111 = vmatmul.mubr.f32.gmra.mrb[0].mxu0 %v1320
    %v3112 = vpop.f32.mrb[0].mxu0
    %v3113 = vadd.f32 %v2834, %v3112
    %v3114 = vpop.f32.mrb[0].mxu0
    %3115 = vmatprep.mubr.f32.mxu0 0.0
    %3116 = vmatmul.mubr.f32.gmra.mrb[0].mxu0 %v1325
    %v3117 = vpop.f32.mrb[0].mxu0
    %v3118 = vadd.f32 %v2834, %v3117
    %v3119 = vpop.f32.mrb[0].mxu0
    %3120 = vmatprep.mubr.f32.mxu0 0.0
    %3121 = vmatmul.mubr.f32.gmra.mrb[0].mxu0 %v1330
    %v3122 = vpop.f32.mrb[0].mxu0
    %v3123 = vadd.f32 %v2834, %v3122
    %v3124 = vpop.f32.mrb[0].mxu0
    %3125 = vmatprep.mubr.f32.mxu0 0.0
    %3126 = vmatmul.mubr.f32.gmra.mrb[0].mxu0 %v1335
    %v3127 = vpop.f32.mrb[0].mxu0
    %v3128 = vadd.f32 %v2834, %v3127
    %v3129 = vpop.f32.mrb[0].mxu0
    %3130 = vmatprep.mubr.f32.mxu0 0.0
    %3131 = vmatmul.mubr.f32.gmra.mrb[0].mxu0 %v1340
    %v3132 = vpop.f32.mrb[0].mxu0
    %v3133 = vadd.f32 %v2834, %v3132
    %v3134 = vpop.f32.mrb[0].mxu0
    %3135 = vmatprep.mubr.f32.mxu0 0.0
    %3136 = vmatmul.mubr.f32.gmra.mrb[0].mxu0 %v1345
    %v3137 = vpop.f32.mrb[0].mxu0
    %v3138 = vadd.f32 %v2834, %v3137
    %v3139 = vpop.f32.mrb[0].mxu0
    %3140 = vmatprep.mubr.f32.mxu0 0.0
    %3141 = vmatmul.mubr.f32.gmra.mrb[0].mxu0 %v1350
    %v3142 = vpop.f32.mrb[0].mxu0
    %v3143 = vadd.f32 %v2834, %v3142
    %v3144 = vpop.f32.mrb[0].mxu0
    %3145 = vmatprep.mubr.f32.mxu0 0.0
    %3146 = vmatmul.mubr.f32.gmra.mrb[0].mxu0 %v1355
    %v3147 = vpop.f32.mrb[0].mxu0
    %v3148 = vadd.f32 %v2834, %v3147
    %v3149 = vpop.f32.mrb[0].mxu0
    %3150 = vmatprep.mubr.f32.mxu0 0.0
    %3151 = vmatmul.mubr.f32.gmra.mrb[0].mxu0 %v1360
    %v3152 = vpop.f32.mrb[0].mxu0
    %v3153 = vadd.f32 %v2834, %v3152
    %v3154 = vpop.f32.mrb[0].mxu0
    %3155 = vmatprep.mubr.f32.mxu0 0.0
    %3156 = vmatmul.mubr.f32.gmra.mrb[0].mxu0 %v1365
    %v3157 = vpop.f32.mrb[0].mxu0
    %v3158 = vadd.f32 %v2834, %v3157
    %v3159 = vpop.f32.mrb[0].mxu0
    %3160 = vmatprep.mubr.f32.mxu0 0.0
    %3161 = vmatmul.mubr.f32.gmra.mrb[0].mxu0 %v1370
    %v3162 = vpop.f32.mrb[0].mxu0
    %v3163 = vadd.f32 %v2834, %v3162
    %v3164 = vpop.f32.mrb[0].mxu0
    %3165 = vmatprep.mubr.f32.mxu0 0.0
    %3166 = vmatmul.mubr.f32.gmra.mrb[0].mxu0 %v1375
    %v3167 = vpop.f32.mrb[0].mxu0
    %v3168 = vadd.f32 %v2834, %v3167
    %v3169 = vpop.f32.mrb[0].mxu0
    %3170 = vmatprep.mubr.f32.mxu0 0.0
    %3171 = vmatmul.mubr.f32.gmra.mrb[0].mxu0 %v1380
    %v3172 = vpop.f32.mrb[0].mxu0
    %v3173 = vadd.f32 %v2834, %v3172
    %v3174 = vpop.f32.mrb[0].mxu0
    %3175 = vmatprep.mubr.f32.mxu0 0.0
    %3176 = vmatmul.mubr.f32.gmra.mrb[0].mxu0 %v1385
    %v3177 = vpop.f32.mrb[0].mxu0
    %v3178 = vadd.f32 %v2834, %v3177
    %v3179 = vpop.f32.mrb[0].mxu0
    %3180 = vmatprep.mubr.f32.mxu0 0.0
    %3181 = vmatmul.mubr.f32.gmra.mrb[0].mxu0 %v1390
    %v3182 = vpop.f32.mrb[0].mxu0
    %v3183 = vadd.f32 %v2834, %v3182
    %v3184 = vpop.f32.mrb[0].mxu0
    %3185 = vmatprep.mubr.f32.mxu0 0.0
    %3186 = vmatmul.mubr.f32.gmra.mrb[0].mxu0 %v1395
    %v3187 = vpop.f32.mrb[0].mxu0
    %v3188 = vadd.f32 %v2834, %v3187
    %v3189 = vpop.f32.mrb[0].mxu0
    %3190 = vmatprep.mubr.f32.mxu0 0.0
    %3191 = vmatmul.mubr.f32.gmra.mrb[0].mxu0 %v1400
    %v3192 = vpop.f32.mrb[0].mxu0
    %v3193 = vadd.f32 %v2834, %v3192
    %v3194 = vpop.f32.mrb[0].mxu0
    %3195 = vmatprep.mubr.f32.mxu0 0.0
    %3196 = vmatmul.mubr.f32.gmra.mrb[0].mxu0 %v1405
    %v3197 = vpop.f32.mrb[0].mxu0
    %v3198 = vadd.f32 %v2834, %v3197
    %v3199 = vpop.f32.mrb[0].mxu0
    %3200 = vmatprep.mubr.f32.mxu0 0.0
    %3201 = vmatmul.mubr.f32.gmra.mrb[0].mxu0 %v1410
    %v3202 = vpop.f32.mrb[0].mxu0
    %v3203 = vadd.f32 %v2834, %v3202
    %v3204 = vpop.f32.mrb[0].mxu0
    %3205 = vmatprep.mubr.f32.mxu0 0.0
    %3206 = vmatmul.mubr.f32.gmra.mrb[0].mxu0 %v1415
    %v3207 = vpop.f32.mrb[0].mxu0
    %v3208 = vadd.f32 %v2834, %v3207
    %v3209 = vpop.f32.mrb[0].mxu0
    %3210 = vmatprep.mubr.f32.mxu0 0.0
    %3211 = vmatmul.mubr.f32.gmra.mrb[0].mxu0 %v1420
    %v3212 = vpop.f32.mrb[0].mxu0
    %v3213 = vadd.f32 %v2834, %v3212
    %v3214 = vpop.f32.mrb[0].mxu0
    %3215 = vmatprep.mubr.f32.mxu0 0.0
    %3216 = vmatmul.mubr.f32.gmra.mrb[0].mxu0 %v1425
    %v3217 = vpop.f32.mrb[0].mxu0
    %v3218 = vadd.f32 %v2834, %v3217
    %v3219 = vpop.f32.mrb[0].mxu0
    %3220 = vdwg.mxu0
    %v3221 = vsub.f32 0.0, %v2903
    %v3222 = vsub.f32 0.0, %v2908
    %v3223 = vsub.f32 0.0, %v2913
    %v3224 = vsub.f32 0.0, %v2918
    %v3225 = vsub.f32 0.0, %v2923
    %v3226 = vsub.f32 0.0, %v2928
    %v3227 = vsub.f32 0.0, %v2933
    %v3228 = vsub.f32 0.0, %v2938
    %v3229 = vsub.f32 0.0, %v2943
    %v3230 = vsub.f32 0.0, %v2948
    %v3231 = vsub.f32 0.0, %v2953
    %v3232 = vsub.f32 0.0, %v2958
    %v3233 = vsub.f32 0.0, %v2963
    %v3234 = vsub.f32 0.0, %v2968
    %v3235 = vsub.f32 0.0, %v2973
    %v3236 = vsub.f32 0.0, %v2978
    %v3237 = vsub.f32 0.0, %v2983
    %v3238 = vsub.f32 0.0, %v2988
    %v3239 = vsub.f32 0.0, %v2993
    %v3240 = vsub.f32 0.0, %v2998
    %v3241 = vsub.f32 0.0, %v3003
    %v3242 = vsub.f32 0.0, %v3008
    %v3243 = vsub.f32 0.0, %v3013
    %v3244 = vsub.f32 0.0, %v3018
    %v3245 = vsub.f32 0.0, %v3023
    %v3246 = vsub.f32 0.0, %v3028
    %v3247 = vsub.f32 0.0, %v3033
    %v3248 = vsub.f32 0.0, %v3038
    %v3249 = vsub.f32 0.0, %v3043
    %v3250 = vsub.f32 0.0, %v3048
    %v3251 = vsub.f32 0.0, %v3053
    %v3252 = vsub.f32 0.0, %v3058
    %v3253 = vsub.f32 0.0, %v3063
    %v3254 = vsub.f32 0.0, %v3068
    %v3255 = vsub.f32 0.0, %v3073
    %v3256 = vsub.f32 0.0, %v3078
    %v3257 = vsub.f32 0.0, %v3083
    %v3258 = vsub.f32 0.0, %v3088
    %v3259 = vsub.f32 0.0, %v3093
    %v3260 = vsub.f32 0.0, %v3098
    %v3261 = vsub.f32 0.0, %v3103
    %v3262 = vsub.f32 0.0, %v3108
    %v3263 = vsub.f32 0.0, %v3113
    %v3264 = vsub.f32 0.0, %v3118
    %v3265 = vsub.f32 0.0, %v3123
    %v3266 = vsub.f32 0.0, %v3128
    %v3267 = vsub.f32 0.0, %v3133
    %v3268 = vsub.f32 0.0, %v3138
    %v3269 = vsub.f32 0.0, %v3143
    %v3270 = vsub.f32 0.0, %v3148
    %v3271 = vsub.f32 0.0, %v3153
    %v3272 = vsub.f32 0.0, %v3158
    %v3273 = vsub.f32 0.0, %v3163
    %v3274 = vsub.f32 0.0, %v3168
    %v3275 = vsub.f32 0.0, %v3173
    %v3276 = vsub.f32 0.0, %v3178
    %v3277 = vsub.f32 0.0, %v3183
    %v3278 = vsub.f32 0.0, %v3188
    %v3279 = vsub.f32 0.0, %v3193
    %v3280 = vsub.f32 0.0, %v3198
    %v3281 = vsub.f32 0.0, %v3203
    %v3282 = vsub.f32 0.0, %v3208
    %v3283 = vsub.f32 0.0, %v3213
    %v3284 = vsub.f32 0.0, %v3218
    %v3285 = vadd.f32 %v2559, %v3221
    %v3286 = vadd.f32 %v2562, %v3222
    %v3287 = vadd.f32 %v2567, %v3223
    %v3288 = vadd.f32 %v2570, %v3224
    %v3289 = vadd.f32 %v2575, %v3225
    %v3290 = vadd.f32 %v2578, %v3226
    %v3291 = vadd.f32 %v2583, %v3227
    %v3292 = vadd.f32 %v2586, %v3228
    %v3293 = vadd.f32 %v2591, %v3229
    %v3294 = vadd.f32 %v2594, %v3230
    %v3295 = vadd.f32 %v2599, %v3231
    %v3296 = vadd.f32 %v2602, %v3232
    %v3297 = vadd.f32 %v2607, %v3233
    %v3298 = vadd.f32 %v2610, %v3234
    %v3299 = vadd.f32 %v2615, %v3235
    %v3300 = vadd.f32 %v2618, %v3236
    %v3301 = vadd.f32 %v2623, %v3237
    %v3302 = vadd.f32 %v2626, %v3238
    %v3303 = vadd.f32 %v2631, %v3239
    %v3304 = vadd.f32 %v2634, %v3240
    %v3305 = vadd.f32 %v2639, %v3241
    %v3306 = vadd.f32 %v2642, %v3242
    %v3307 = vadd.f32 %v2647, %v3243
    %v3308 = vadd.f32 %v2650, %v3244
    %v3309 = vadd.f32 %v2655, %v3245
    %v3310 = vadd.f32 %v2658, %v3246
    %v3311 = vadd.f32 %v2663, %v3247
    %v3312 = vadd.f32 %v2666, %v3248
    %v3313 = vadd.f32 %v2671, %v3249
    %v3314 = vadd.f32 %v2674, %v3250
    %v3315 = vadd.f32 %v2679, %v3251
    %v3316 = vadd.f32 %v2682, %v3252
    %v3317 = vadd.f32 %v2687, %v3253
    %v3318 = vadd.f32 %v2690, %v3254
    %v3319 = vadd.f32 %v2695, %v3255
    %v3320 = vadd.f32 %v2698, %v3256
    %v3321 = vadd.f32 %v2703, %v3257
    %v3322 = vadd.f32 %v2706, %v3258
    %v3323 = vadd.f32 %v2711, %v3259
    %v3324 = vadd.f32 %v2714, %v3260
    %v3325 = vadd.f32 %v2719, %v3261
    %v3326 = vadd.f32 %v2722, %v3262
    %v3327 = vadd.f32 %v2727, %v3263
    %v3328 = vadd.f32 %v2730, %v3264
    %v3329 = vadd.f32 %v2735, %v3265
    %v3330 = vadd.f32 %v2738, %v3266
    %v3331 = vadd.f32 %v2743, %v3267
    %v3332 = vadd.f32 %v2746, %v3268
    %v3333 = vadd.f32 %v2751, %v3269
    %v3334 = vadd.f32 %v2754, %v3270
    %v3335 = vadd.f32 %v2759, %v3271
    %v3336 = vadd.f32 %v2762, %v3272
    %v3337 = vadd.f32 %v2767, %v3273
    %v3338 = vadd.f32 %v2770, %v3274
    %v3339 = vadd.f32 %v2775, %v3275
    %v3340 = vadd.f32 %v2778, %v3276
    %v3341 = vadd.f32 %v2783, %v3277
    %v3342 = vadd.f32 %v2786, %v3278
    %v3343 = vadd.f32 %v2791, %v3279
    %v3344 = vadd.f32 %v2794, %v3280
    %v3345 = vadd.f32 %v2799, %v3281
    %v3346 = vadd.f32 %v2802, %v3282
    %v3347 = vadd.f32 %v2807, %v3283
    %v3348 = vadd.f32 %v2810, %v3284
    %v3349 = vmax.f32 %v3285, 0.0
    %v3350 = vmax.f32 %v3286, 0.0
    %v3351 = vmax.f32 %v3287, 0.0
    %v3352 = vmax.f32 %v3288, 0.0
    %v3353 = vmax.f32 %v3289, 0.0
    %v3354 = vmax.f32 %v3290, 0.0
    %v3355 = vmax.f32 %v3291, 0.0
    %v3356 = vmax.f32 %v3292, 0.0
    %v3357 = vmax.f32 %v3293, 0.0
    %v3358 = vmax.f32 %v3294, 0.0
    %v3359 = vmax.f32 %v3295, 0.0
    %v3360 = vmax.f32 %v3296, 0.0
    %v3361 = vmax.f32 %v3297, 0.0
    %v3362 = vmax.f32 %v3298, 0.0
    %v3363 = vmax.f32 %v3299, 0.0
    %v3364 = vmax.f32 %v3300, 0.0
    %v3365 = vmax.f32 %v3301, 0.0
    %v3366 = vmax.f32 %v3302, 0.0
    %v3367 = vmax.f32 %v3303, 0.0
    %v3368 = vmax.f32 %v3304, 0.0
    %v3369 = vmax.f32 %v3305, 0.0
    %v3370 = vmax.f32 %v3306, 0.0
    %v3371 = vmax.f32 %v3307, 0.0
    %v3372 = vmax.f32 %v3308, 0.0
    %v3373 = vmax.f32 %v3309, 0.0
    %v3374 = vmax.f32 %v3310, 0.0
    %v3375 = vmax.f32 %v3311, 0.0
    %v3376 = vmax.f32 %v3312, 0.0
    %v3377 = vmax.f32 %v3313, 0.0
    %v3378 = vmax.f32 %v3314, 0.0
    %v3379 = vmax.f32 %v3315, 0.0
    %v3380 = vmax.f32 %v3316, 0.0
    %v3381 = vmax.f32 %v3317, 0.0
    %v3382 = vmax.f32 %v3318, 0.0
    %v3383 = vmax.f32 %v3319, 0.0
    %v3384 = vmax.f32 %v3320, 0.0
    %v3385 = vmax.f32 %v3321, 0.0
    %v3386 = vmax.f32 %v3322, 0.0
    %v3387 = vmax.f32 %v3323, 0.0
    %v3388 = vmax.f32 %v3324, 0.0
    %v3389 = vmax.f32 %v3325, 0.0
    %v3390 = vmax.f32 %v3326, 0.0
    %v3391 = vmax.f32 %v3327, 0.0
    %v3392 = vmax.f32 %v3328, 0.0
    %v3393 = vmax.f32 %v3329, 0.0
    %v3394 = vmax.f32 %v3330, 0.0
    %v3395 = vmax.f32 %v3331, 0.0
    %v3396 = vmax.f32 %v3332, 0.0
    %v3397 = vmax.f32 %v3333, 0.0
    %v3398 = vmax.f32 %v3334, 0.0
    %v3399 = vmax.f32 %v3335, 0.0
    %v3400 = vmax.f32 %v3336, 0.0
    %v3401 = vmax.f32 %v3337, 0.0
    %v3402 = vmax.f32 %v3338, 0.0
    %v3403 = vmax.f32 %v3339, 0.0
    %v3404 = vmax.f32 %v3340, 0.0
    %v3405 = vmax.f32 %v3341, 0.0
    %v3406 = vmax.f32 %v3342, 0.0
    %v3407 = vmax.f32 %v3343, 0.0
    %v3408 = vmax.f32 %v3344, 0.0
    %v3409 = vmax.f32 %v3345, 0.0
    %v3410 = vmax.f32 %v3346, 0.0
    %v3411 = vmax.f32 %v3347, 0.0
    %v3412 = vmax.f32 %v3348, 0.0
    %v3413 = vsub.f32 %v3349, %v963
    %v3414 = vsub.f32 %v3350, %v964
    %v3415 = vsub.f32 %v3351, %v965
    %v3416 = vsub.f32 %v3352, %v966
    %v3417 = vsub.f32 %v3353, %v967
    %v3418 = vsub.f32 %v3354, %v968
    %v3419 = vsub.f32 %v3355, %v969
    %v3420 = vsub.f32 %v3356, %v970
    %v3421 = vsub.f32 %v3357, %v971
    %v3422 = vsub.f32 %v3358, %v972
    %v3423 = vsub.f32 %v3359, %v973
    %v3424 = vsub.f32 %v3360, %v974
    %v3425 = vsub.f32 %v3361, %v975
    %v3426 = vsub.f32 %v3362, %v976
    %v3427 = vsub.f32 %v3363, %v977
    %v3428 = vsub.f32 %v3364, %v978
    %v3429 = vsub.f32 %v3365, %v979
    %v3430 = vsub.f32 %v3366, %v980
    %v3431 = vsub.f32 %v3367, %v981
    %v3432 = vsub.f32 %v3368, %v982
    %v3433 = vsub.f32 %v3369, %v983
    %v3434 = vsub.f32 %v3370, %v984
    %v3435 = vsub.f32 %v3371, %v985
    %v3436 = vsub.f32 %v3372, %v986
    %v3437 = vsub.f32 %v3373, %v987
    %v3438 = vsub.f32 %v3374, %v988
    %v3439 = vsub.f32 %v3375, %v989
    %v3440 = vsub.f32 %v3376, %v990
    %v3441 = vsub.f32 %v3377, %v991
    %v3442 = vsub.f32 %v3378, %v992
    %v3443 = vsub.f32 %v3379, %v993
    %v3444 = vsub.f32 %v3380, %v994
    %v3445 = vsub.f32 %v3381, %v995
    %v3446 = vsub.f32 %v3382, %v996
    %v3447 = vsub.f32 %v3383, %v997
    %v3448 = vsub.f32 %v3384, %v998
    %v3449 = vsub.f32 %v3385, %v999
    %v3450 = vsub.f32 %v3386, %v1000
    %v3451 = vsub.f32 %v3387, %v1001
    %v3452 = vsub.f32 %v3388, %v1002
    %v3453 = vsub.f32 %v3389, %v1003
    %v3454 = vsub.f32 %v3390, %v1004
    %v3455 = vsub.f32 %v3391, %v1005
    %v3456 = vsub.f32 %v3392, %v1006
    %v3457 = vsub.f32 %v3393, %v1007
    %v3458 = vsub.f32 %v3394, %v1008
    %v3459 = vsub.f32 %v3395, %v1009
    %v3460 = vsub.f32 %v3396, %v1010
    %v3461 = vsub.f32 %v3397, %v1011
    %v3462 = vsub.f32 %v3398, %v1012
    %v3463 = vsub.f32 %v3399, %v1013
    %v3464 = vsub.f32 %v3400, %v1014
    %v3465 = vsub.f32 %v3401, %v1015
    %v3466 = vsub.f32 %v3402, %v1016
    %v3467 = vsub.f32 %v3403, %v1017
    %v3468 = vsub.f32 %v3404, %v1018
    %v3469 = vsub.f32 %v3405, %v1019
    %v3470 = vsub.f32 %v3406, %v1020
    %v3471 = vsub.f32 %v3407, %v1021
    %v3472 = vsub.f32 %v3408, %v1022
    %v3473 = vsub.f32 %v3409, %v1023
    %v3474 = vsub.f32 %v3410, %v1024
    %v3475 = vsub.f32 %v3411, %v1025
    %v3476 = vsub.f32 %v3412, %v1026
    %v3477 = vsub.f32 %v3413, %v899
    %v3478 = vsub.f32 %v3414, %v900
    %v3479 = vsub.f32 %v3415, %v901
    %v3480 = vsub.f32 %v3416, %v902
    %v3481 = vsub.f32 %v3417, %v903
    %v3482 = vsub.f32 %v3418, %v904
    %v3483 = vsub.f32 %v3419, %v905
    %v3484 = vsub.f32 %v3420, %v906
    %v3485 = vsub.f32 %v3421, %v907
    %v3486 = vsub.f32 %v3422, %v908
    %v3487 = vsub.f32 %v3423, %v909
    %v3488 = vsub.f32 %v3424, %v910
    %v3489 = vsub.f32 %v3425, %v911
    %v3490 = vsub.f32 %v3426, %v912
    %v3491 = vsub.f32 %v3427, %v913
    %v3492 = vsub.f32 %v3428, %v914
    %v3493 = vsub.f32 %v3429, %v915
    %v3494 = vsub.f32 %v3430, %v916
    %v3495 = vsub.f32 %v3431, %v917
    %v3496 = vsub.f32 %v3432, %v918
    %v3497 = vsub.f32 %v3433, %v919
    %v3498 = vsub.f32 %v3434, %v920
    %v3499 = vsub.f32 %v3435, %v921
    %v3500 = vsub.f32 %v3436, %v922
    %v3501 = vsub.f32 %v3437, %v923
    %v3502 = vsub.f32 %v3438, %v924
    %v3503 = vsub.f32 %v3439, %v925
    %v3504 = vsub.f32 %v3440, %v926
    %v3505 = vsub.f32 %v3441, %v927
    %v3506 = vsub.f32 %v3442, %v928
    %v3507 = vsub.f32 %v3443, %v929
    %v3508 = vsub.f32 %v3444, %v930
    %v3509 = vsub.f32 %v3445, %v931
    %v3510 = vsub.f32 %v3446, %v932
    %v3511 = vsub.f32 %v3447, %v933
    %v3512 = vsub.f32 %v3448, %v934
    %v3513 = vsub.f32 %v3449, %v935
    %v3514 = vsub.f32 %v3450, %v936
    %v3515 = vsub.f32 %v3451, %v937
    %v3516 = vsub.f32 %v3452, %v938
    %v3517 = vsub.f32 %v3453, %v939
    %v3518 = vsub.f32 %v3454, %v940
    %v3519 = vsub.f32 %v3455, %v941
    %v3520 = vsub.f32 %v3456, %v942
    %v3521 = vsub.f32 %v3457, %v943
    %v3522 = vsub.f32 %v3458, %v944
    %v3523 = vsub.f32 %v3459, %v945
    %v3524 = vsub.f32 %v3460, %v946
    %v3525 = vsub.f32 %v3461, %v947
    %v3526 = vsub.f32 %v3462, %v948
    %v3527 = vsub.f32 %v3463, %v949
    %v3528 = vsub.f32 %v3464, %v950
    %v3529 = vsub.f32 %v3465, %v951
    %v3530 = vsub.f32 %v3466, %v952
    %v3531 = vsub.f32 %v3467, %v953
    %v3532 = vsub.f32 %v3468, %v954
    %v3533 = vsub.f32 %v3469, %v955
    %v3534 = vsub.f32 %v3470, %v956
    %v3535 = vsub.f32 %v3471, %v957
    %v3536 = vsub.f32 %v3472, %v958
    %v3537 = vsub.f32 %v3473, %v959
    %v3538 = vsub.f32 %v3474, %v960
    %v3539 = vsub.f32 %v3475, %v961
    %v3540 = vsub.f32 %v3476, %v962
    %v3541 = vadd.f32 %v963, %v3477
    %v3542 = vadd.f32 %v964, %v3478
    %v3543 = vadd.f32 %v965, %v3479
    %v3544 = vadd.f32 %v966, %v3480
    %v3545 = vadd.f32 %v967, %v3481
    %v3546 = vadd.f32 %v968, %v3482
    %v3547 = vadd.f32 %v969, %v3483
    %v3548 = vadd.f32 %v970, %v3484
    %v3549 = vadd.f32 %v971, %v3485
    %v3550 = vadd.f32 %v972, %v3486
    %v3551 = vadd.f32 %v973, %v3487
    %v3552 = vadd.f32 %v974, %v3488
    %v3553 = vadd.f32 %v975, %v3489
    %v3554 = vadd.f32 %v976, %v3490
    %v3555 = vadd.f32 %v977, %v3491
    %v3556 = vadd.f32 %v978, %v3492
    %v3557 = vadd.f32 %v979, %v3493
    %v3558 = vadd.f32 %v980, %v3494
    %v3559 = vadd.f32 %v981, %v3495
    %v3560 = vadd.f32 %v982, %v3496
    %v3561 = vadd.f32 %v983, %v3497
    %v3562 = vadd.f32 %v984, %v3498
    %v3563 = vadd.f32 %v985, %v3499
    %v3564 = vadd.f32 %v986, %v3500
    %v3565 = vadd.f32 %v987, %v3501
    %v3566 = vadd.f32 %v988, %v3502
    %v3567 = vadd.f32 %v989, %v3503
    %v3568 = vadd.f32 %v990, %v3504
    %v3569 = vadd.f32 %v991, %v3505
    %v3570 = vadd.f32 %v992, %v3506
    %v3571 = vadd.f32 %v993, %v3507
    %v3572 = vadd.f32 %v994, %v3508
    %v3573 = vadd.f32 %v995, %v3509
    %v3574 = vadd.f32 %v996, %v3510
    %v3575 = vadd.f32 %v997, %v3511
    %v3576 = vadd.f32 %v998, %v3512
    %v3577 = vadd.f32 %v999, %v3513
    %v3578 = vadd.f32 %v1000, %v3514
    %v3579 = vadd.f32 %v1001, %v3515
    %v3580 = vadd.f32 %v1002, %v3516
    %v3581 = vadd.f32 %v1003, %v3517
    %v3582 = vadd.f32 %v1004, %v3518
    %v3583 = vadd.f32 %v1005, %v3519
    %v3584 = vadd.f32 %v1006, %v3520
    %v3585 = vadd.f32 %v1007, %v3521
    %v3586 = vadd.f32 %v1008, %v3522
    %v3587 = vadd.f32 %v1009, %v3523
    %v3588 = vadd.f32 %v1010, %v3524
    %v3589 = vadd.f32 %v1011, %v3525
    %v3590 = vadd.f32 %v1012, %v3526
    %v3591 = vadd.f32 %v1013, %v3527
    %v3592 = vadd.f32 %v1014, %v3528
    %v3593 = vadd.f32 %v1015, %v3529
    %v3594 = vadd.f32 %v1016, %v3530
    %v3595 = vadd.f32 %v1017, %v3531
    %v3596 = vadd.f32 %v1018, %v3532
    %v3597 = vadd.f32 %v1019, %v3533
    %v3598 = vadd.f32 %v1020, %v3534
    %v3599 = vadd.f32 %v1021, %v3535
    %v3600 = vadd.f32 %v1022, %v3536
    %v3601 = vadd.f32 %v1023, %v3537
    %v3602 = vadd.f32 %v1024, %v3538
    %v3603 = vadd.f32 %v1025, %v3539
    %v3604 = vadd.f32 %v1026, %v3540
    %v3605 = vadd.f32 %v899, %v3541
    %v3606 = vadd.f32 %v900, %v3542
    %v3607 = vadd.f32 %v901, %v3543
    %v3608 = vadd.f32 %v902, %v3544
    %v3609 = vadd.f32 %v903, %v3545
    %v3610 = vadd.f32 %v904, %v3546
    %v3611 = vadd.f32 %v905, %v3547
    %v3612 = vadd.f32 %v906, %v3548
    %v3613 = vadd.f32 %v907, %v3549
    %v3614 = vadd.f32 %v908, %v3550
    %v3615 = vadd.f32 %v909, %v3551
    %v3616 = vadd.f32 %v910, %v3552
    %v3617 = vadd.f32 %v911, %v3553
    %v3618 = vadd.f32 %v912, %v3554
    %v3619 = vadd.f32 %v913, %v3555
    %v3620 = vadd.f32 %v914, %v3556
    %v3621 = vadd.f32 %v915, %v3557
    %v3622 = vadd.f32 %v916, %v3558
    %v3623 = vadd.f32 %v917, %v3559
    %v3624 = vadd.f32 %v918, %v3560
    %v3625 = vadd.f32 %v919, %v3561
    %v3626 = vadd.f32 %v920, %v3562
    %v3627 = vadd.f32 %v921, %v3563
    %v3628 = vadd.f32 %v922, %v3564
    %v3629 = vadd.f32 %v923, %v3565
    %v3630 = vadd.f32 %v924, %v3566
    %v3631 = vadd.f32 %v925, %v3567
    %v3632 = vadd.f32 %v926, %v3568
    %v3633 = vadd.f32 %v927, %v3569
    %v3634 = vadd.f32 %v928, %v3570
    %v3635 = vadd.f32 %v929, %v3571
    %v3636 = vadd.f32 %v930, %v3572
    %v3637 = vadd.f32 %v931, %v3573
    %v3638 = vadd.f32 %v932, %v3574
    %v3639 = vadd.f32 %v933, %v3575
    %v3640 = vadd.f32 %v934, %v3576
    %v3641 = vadd.f32 %v935, %v3577
    %v3642 = vadd.f32 %v936, %v3578
    %v3643 = vadd.f32 %v937, %v3579
    %v3644 = vadd.f32 %v938, %v3580
    %v3645 = vadd.f32 %v939, %v3581
    %v3646 = vadd.f32 %v940, %v3582
    %v3647 = vadd.f32 %v941, %v3583
    %v3648 = vadd.f32 %v942, %v3584
    %v3649 = vadd.f32 %v943, %v3585
    %v3650 = vadd.f32 %v944, %v3586
    %v3651 = vadd.f32 %v945, %v3587
    %v3652 = vadd.f32 %v946, %v3588
    %v3653 = vadd.f32 %v947, %v3589
    %v3654 = vadd.f32 %v948, %v3590
    %v3655 = vadd.f32 %v949, %v3591
    %v3656 = vadd.f32 %v950, %v3592
    %v3657 = vadd.f32 %v951, %v3593
    %v3658 = vadd.f32 %v952, %v3594
    %v3659 = vadd.f32 %v953, %v3595
    %v3660 = vadd.f32 %v954, %v3596
    %v3661 = vadd.f32 %v955, %v3597
    %v3662 = vadd.f32 %v956, %v3598
    %v3663 = vadd.f32 %v957, %v3599
    %v3664 = vadd.f32 %v958, %v3600
    %v3665 = vadd.f32 %v959, %v3601
    %v3666 = vadd.f32 %v960, %v3602
    %v3667 = vadd.f32 %v961, %v3603
    %v3668 = vadd.f32 %v962, %v3604
    %v3669 = vsel %vm637, %v3541, 0.0
    %v3670 = vsel %vm638, %v3542, 0.0
    %v3671 = vsel %vm639, %v3543, 0.0
    %v3672 = vsel %vm640, %v3544, 0.0
    %v3673 = vsel %vm641, %v3545, 0.0
    %v3674 = vsel %vm642, %v3546, 0.0
    %v3675 = vsel %vm643, %v3547, 0.0
    %v3676 = vsel %vm644, %v3548, 0.0
    %v3677 = vsel %vm645, %v3549, 0.0
    %v3678 = vsel %vm646, %v3550, 0.0
    %v3679 = vsel %vm647, %v3551, 0.0
    %v3680 = vsel %vm648, %v3552, 0.0
    %v3681 = vsel %vm649, %v3553, 0.0
    %v3682 = vsel %vm650, %v3554, 0.0
    %v3683 = vsel %vm651, %v3555, 0.0
    %v3684 = vsel %vm652, %v3556, 0.0
    %v3685 = vsel %vm653, %v3557, 0.0
    %v3686 = vsel %vm654, %v3558, 0.0
    %v3687 = vsel %vm655, %v3559, 0.0
    %v3688 = vsel %vm656, %v3560, 0.0
    %v3689 = vsel %vm657, %v3561, 0.0
    %v3690 = vsel %vm658, %v3562, 0.0
    %v3691 = vsel %vm659, %v3563, 0.0
    %v3692 = vsel %vm660, %v3564, 0.0
    %v3693 = vsel %vm661, %v3565, 0.0
    %v3694 = vsel %vm662, %v3566, 0.0
    %v3695 = vsel %vm663, %v3567, 0.0
    %v3696 = vsel %vm664, %v3568, 0.0
    %v3697 = vsel %vm665, %v3569, 0.0
    %v3698 = vsel %vm666, %v3570, 0.0
    %v3699 = vsel %vm667, %v3571, 0.0
    %v3700 = vsel %vm668, %v3572, 0.0
    %v3701 = vsel %vm669, %v3573, 0.0
    %v3702 = vsel %vm670, %v3574, 0.0
    %v3703 = vsel %vm671, %v3575, 0.0
    %v3704 = vsel %vm672, %v3576, 0.0
    %v3705 = vsel %vm673, %v3577, 0.0
    %v3706 = vsel %vm674, %v3578, 0.0
    %v3707 = vsel %vm675, %v3579, 0.0
    %v3708 = vsel %vm676, %v3580, 0.0
    %v3709 = vsel %vm677, %v3581, 0.0
    %v3710 = vsel %vm678, %v3582, 0.0
    %v3711 = vsel %vm679, %v3583, 0.0
    %v3712 = vsel %vm680, %v3584, 0.0
    %v3713 = vsel %vm681, %v3585, 0.0
    %v3714 = vsel %vm682, %v3586, 0.0
    %v3715 = vsel %vm683, %v3587, 0.0
    %v3716 = vsel %vm684, %v3588, 0.0
    %v3717 = vsel %vm685, %v3589, 0.0
    %v3718 = vsel %vm686, %v3590, 0.0
    %v3719 = vsel %vm687, %v3591, 0.0
    %v3720 = vsel %vm688, %v3592, 0.0
    %v3721 = vsel %vm689, %v3593, 0.0
    %v3722 = vsel %vm690, %v3594, 0.0
    %v3723 = vsel %vm691, %v3595, 0.0
    %v3724 = vsel %vm692, %v3596, 0.0
    %v3725 = vsel %vm693, %v3597, 0.0
    %v3726 = vsel %vm694, %v3598, 0.0
    %v3727 = vsel %vm695, %v3599, 0.0
    %v3728 = vsel %vm696, %v3600, 0.0
    %v3729 = vsel %vm697, %v3601, 0.0
    %v3730 = vsel %vm698, %v3602, 0.0
    %v3731 = vsel %vm699, %v3603, 0.0
    %v3732 = vsel %vm700, %v3604, 0.0
    %3733 = vst [vmem:[#allocation3] sm:$0xff] %v3669
    %3734 = vst [vmem:[#allocation3 + $0x8] sm:$0xff] %v3670
    %3735 = vst [vmem:[#allocation3 + $0x10] sm:$0xff] %v3671
    %3736 = vst [vmem:[#allocation3 + $0x18] sm:$0xff] %v3672
    %3737 = vst [vmem:[#allocation3 + $0x20] sm:$0xff] %v3673
    %3738 = vst [vmem:[#allocation3 + $0x28] sm:$0xff] %v3674
    %3739 = vst [vmem:[#allocation3 + $0x30] sm:$0xff] %v3675
    %3740 = vst [vmem:[#allocation3 + $0x38] sm:$0xff] %v3676
    %3741 = vst [vmem:[#allocation3 + $0x40] sm:$0xff] %v3677
    %3742 = vst [vmem:[#allocation3 + $0x48] sm:$0xff] %v3678
    %3743 = vst [vmem:[#allocation3 + $0x50] sm:$0xff] %v3679
    %3744 = vst [vmem:[#allocation3 + $0x58] sm:$0xff] %v3680
    %3745 = vst [vmem:[#allocation3 + $0x60] sm:$0xff] %v3681
    %3746 = vst [vmem:[#allocation3 + $0x68] sm:$0xff] %v3682
    %3747 = vst [vmem:[#allocation3 + $0x70] sm:$0xff] %v3683
    %3748 = vst [vmem:[#allocation3 + $0x78] sm:$0xff] %v3684
    %3749 = vst [vmem:[#allocation3 + $0x80] sm:$0xff] %v3685
    %3750 = vst [vmem:[#allocation3 + $0x88] sm:$0xff] %v3686
    %3751 = vst [vmem:[#allocation3 + $0x90] sm:$0xff] %v3687
    %3752 = vst [vmem:[#allocation3 + $0x98] sm:$0xff] %v3688
    %3753 = vst [vmem:[#allocation3 + $0xa0] sm:$0xff] %v3689
    %3754 = vst [vmem:[#allocation3 + $0xa8] sm:$0xff] %v3690
    %3755 = vst [vmem:[#allocation3 + $0xb0] sm:$0xff] %v3691
    %3756 = vst [vmem:[#allocation3 + $0xb8] sm:$0xff] %v3692
    %3757 = vst [vmem:[#allocation3 + $0xc0] sm:$0xff] %v3693
    %3758 = vst [vmem:[#allocation3 + $0xc8] sm:$0xff] %v3694
    %3759 = vst [vmem:[#allocation3 + $0xd0] sm:$0xff] %v3695
    %3760 = vst [vmem:[#allocation3 + $0xd8] sm:$0xff] %v3696
    %3761 = vst [vmem:[#allocation3 + $0xe0] sm:$0xff] %v3697
    %3762 = vst [vmem:[#allocation3 + $0xe8] sm:$0xff] %v3698
    %3763 = vst [vmem:[#allocation3 + $0xf0] sm:$0xff] %v3699
    %3764 = vst [vmem:[#allocation3 + $0xf8] sm:$0xff] %v3700
    %3765 = vst [vmem:[#allocation3 + $0x100] sm:$0xff] %v3701
    %3766 = vst [vmem:[#allocation3 + $0x108] sm:$0xff] %v3702
    %3767 = vst [vmem:[#allocation3 + $0x110] sm:$0xff] %v3703
    %3768 = vst [vmem:[#allocation3 + $0x118] sm:$0xff] %v3704
    %3769 = vst [vmem:[#allocation3 + $0x120] sm:$0xff] %v3705
    %3770 = vst [vmem:[#allocation3 + $0x128] sm:$0xff] %v3706
    %3771 = vst [vmem:[#allocation3 + $0x130] sm:$0xff] %v3707
    %3772 = vst [vmem:[#allocation3 + $0x138] sm:$0xff] %v3708
    %3773 = vst [vmem:[#allocation3 + $0x140] sm:$0xff] %v3709
    %3774 = vst [vmem:[#allocation3 + $0x148] sm:$0xff] %v3710
    %3775 = vst [vmem:[#allocation3 + $0x150] sm:$0xff] %v3711
    %3776 = vst [vmem:[#allocation3 + $0x158] sm:$0xff] %v3712
    %3777 = vst [vmem:[#allocation3 + $0x160] sm:$0xff] %v3713
    %3778 = vst [vmem:[#allocation3 + $0x168] sm:$0xff] %v3714
    %3779 = vst [vmem:[#allocation3 + $0x170] sm:$0xff] %v3715
    %3780 = vst [vmem:[#allocation3 + $0x178] sm:$0xff] %v3716
    %3781 = vst [vmem:[#allocation3 + $0x180] sm:$0xff] %v3717
    %3782 = vst [vmem:[#allocation3 + $0x188] sm:$0xff] %v3718
    %3783 = vst [vmem:[#allocation3 + $0x190] sm:$0xff] %v3719
    %3784 = vst [vmem:[#allocation3 + $0x198] sm:$0xff] %v3720
    %3785 = vst [vmem:[#allocation3 + $0x1a0] sm:$0xff] %v3721
    %3786 = vst [vmem:[#allocation3 + $0x1a8] sm:$0xff] %v3722
    %3787 = vst [vmem:[#allocation3 + $0x1b0] sm:$0xff] %v3723
    %3788 = vst [vmem:[#allocation3 + $0x1b8] sm:$0xff] %v3724
    %3789 = vst [vmem:[#allocation3 + $0x1c0] sm:$0xff] %v3725
    %3790 = vst [vmem:[#allocation3 + $0x1c8] sm:$0xff] %v3726
    %3791 = vst [vmem:[#allocation3 + $0x1d0] sm:$0xff] %v3727
    %3792 = vst [vmem:[#allocation3 + $0x1d8] sm:$0xff] %v3728
    %3793 = vst [vmem:[#allocation3 + $0x1e0] sm:$0xff] %v3729
    %3794 = vst [vmem:[#allocation3 + $0x1e8] sm:$0xff] %v3730
    %3795 = vst [vmem:[#allocation3 + $0x1f0] sm:$0xff] %v3731
    %3796 = vst [vmem:[#allocation3 + $0x1f8] sm:$0xff] %v3732
    %v3797 = vsel %vm637, %v3605, 0.0
    %v3798 = vsel %vm638, %v3606, 0.0
    %v3799 = vsel %vm639, %v3607, 0.0
    %v3800 = vsel %vm640, %v3608, 0.0
    %v3801 = vsel %vm641, %v3609, 0.0
    %v3802 = vsel %vm642, %v3610, 0.0
    %v3803 = vsel %vm643, %v3611, 0.0
    %v3804 = vsel %vm644, %v3612, 0.0
    %v3805 = vsel %vm645, %v3613, 0.0
    %v3806 = vsel %vm646, %v3614, 0.0
    %v3807 = vsel %vm647, %v3615, 0.0
    %v3808 = vsel %vm648, %v3616, 0.0
    %v3809 = vsel %vm649, %v3617, 0.0
    %v3810 = vsel %vm650, %v3618, 0.0
    %v3811 = vsel %vm651, %v3619, 0.0
    %v3812 = vsel %vm652, %v3620, 0.0
    %v3813 = vsel %vm653, %v3621, 0.0
    %v3814 = vsel %vm654, %v3622, 0.0
    %v3815 = vsel %vm655, %v3623, 0.0
    %v3816 = vsel %vm656, %v3624, 0.0
    %v3817 = vsel %vm657, %v3625, 0.0
    %v3818 = vsel %vm658, %v3626, 0.0
    %v3819 = vsel %vm659, %v3627, 0.0
    %v3820 = vsel %vm660, %v3628, 0.0
    %v3821 = vsel %vm661, %v3629, 0.0
    %v3822 = vsel %vm662, %v3630, 0.0
    %v3823 = vsel %vm663, %v3631, 0.0
    %v3824 = vsel %vm664, %v3632, 0.0
    %v3825 = vsel %vm665, %v3633, 0.0
    %v3826 = vsel %vm666, %v3634, 0.0
    %v3827 = vsel %vm667, %v3635, 0.0
    %v3828 = vsel %vm668, %v3636, 0.0
    %v3829 = vsel %vm669, %v3637, 0.0
    %v3830 = vsel %vm670, %v3638, 0.0
    %v3831 = vsel %vm671, %v3639, 0.0
    %v3832 = vsel %vm672, %v3640, 0.0
    %v3833 = vsel %vm673, %v3641, 0.0
    %v3834 = vsel %vm674, %v3642, 0.0
    %v3835 = vsel %vm675, %v3643, 0.0
    %v3836 = vsel %vm676, %v3644, 0.0
    %v3837 = vsel %vm677, %v3645, 0.0
    %v3838 = vsel %vm678, %v3646, 0.0
    %v3839 = vsel %vm679, %v3647, 0.0
    %v3840 = vsel %vm680, %v3648, 0.0
    %v3841 = vsel %vm681, %v3649, 0.0
    %v3842 = vsel %vm682, %v3650, 0.0
    %v3843 = vsel %vm683, %v3651, 0.0
    %v3844 = vsel %vm684, %v3652, 0.0
    %v3845 = vsel %vm685, %v3653, 0.0
    %v3846 = vsel %vm686, %v3654, 0.0
    %v3847 = vsel %vm687, %v3655, 0.0
    %v3848 = vsel %vm688, %v3656, 0.0
    %v3849 = vsel %vm689, %v3657, 0.0
    %v3850 = vsel %vm690, %v3658, 0.0
    %v3851 = vsel %vm691, %v3659, 0.0
    %v3852 = vsel %vm692, %v3660, 0.0
    %v3853 = vsel %vm693, %v3661, 0.0
    %v3854 = vsel %vm694, %v3662, 0.0
    %v3855 = vsel %vm695, %v3663, 0.0
    %v3856 = vsel %vm696, %v3664, 0.0
    %v3857 = vsel %vm697, %v3665, 0.0
    %v3858 = vsel %vm698, %v3666, 0.0
    %v3859 = vsel %vm699, %v3667, 0.0
    %v3860 = vsel %vm700, %v3668, 0.0
    %3861 = vst [vmem:[#allocation2] sm:$0xff] %v3797
    %3862 = vst [vmem:[#allocation2 + $0x8] sm:$0xff] %v3798
    %3863 = vst [vmem:[#allocation2 + $0x10] sm:$0xff] %v3799
    %3864 = vst [vmem:[#allocation2 + $0x18] sm:$0xff] %v3800
    %3865 = vst [vmem:[#allocation2 + $0x20] sm:$0xff] %v3801
    %3866 = vst [vmem:[#allocation2 + $0x28] sm:$0xff] %v3802
    %3867 = vst [vmem:[#allocation2 + $0x30] sm:$0xff] %v3803
    %3868 = vst [vmem:[#allocation2 + $0x38] sm:$0xff] %v3804
    %3869 = vst [vmem:[#allocation2 + $0x40] sm:$0xff] %v3805
    %3870 = vst [vmem:[#allocation2 + $0x48] sm:$0xff] %v3806
    %3871 = vst [vmem:[#allocation2 + $0x50] sm:$0xff] %v3807
    %3872 = vst [vmem:[#allocation2 + $0x58] sm:$0xff] %v3808
    %3873 = vst [vmem:[#allocation2 + $0x60] sm:$0xff] %v3809
    %3874 = vst [vmem:[#allocation2 + $0x68] sm:$0xff] %v3810
    %3875 = vst [vmem:[#allocation2 + $0x70] sm:$0xff] %v3811
    %3876 = vst [vmem:[#allocation2 + $0x78] sm:$0xff] %v3812
    %3877 = vst [vmem:[#allocation2 + $0x80] sm:$0xff] %v3813
    %3878 = vst [vmem:[#allocation2 + $0x88] sm:$0xff] %v3814
    %3879 = vst [vmem:[#allocation2 + $0x90] sm:$0xff] %v3815
    %3880 = vst [vmem:[#allocation2 + $0x98] sm:$0xff] %v3816
    %3881 = vst [vmem:[#allocation2 + $0xa0] sm:$0xff] %v3817
    %3882 = vst [vmem:[#allocation2 + $0xa8] sm:$0xff] %v3818
    %3883 = vst [vmem:[#allocation2 + $0xb0] sm:$0xff] %v3819
    %3884 = vst [vmem:[#allocation2 + $0xb8] sm:$0xff] %v3820
    %3885 = vst [vmem:[#allocation2 + $0xc0] sm:$0xff] %v3821
    %3886 = vst [vmem:[#allocation2 + $0xc8] sm:$0xff] %v3822
    %3887 = vst [vmem:[#allocation2 + $0xd0] sm:$0xff] %v3823
    %3888 = vst [vmem:[#allocation2 + $0xd8] sm:$0xff] %v3824
    %3889 = vst [vmem:[#allocation2 + $0xe0] sm:$0xff] %v3825
    %3890 = vst [vmem:[#allocation2 + $0xe8] sm:$0xff] %v3826
    %3891 = vst [vmem:[#allocation2 + $0xf0] sm:$0xff] %v3827
    %3892 = vst [vmem:[#allocation2 + $0xf8] sm:$0xff] %v3828
    %3893 = vst [vmem:[#allocation2 + $0x100] sm:$0xff] %v3829
    %3894 = vst [vmem:[#allocation2 + $0x108] sm:$0xff] %v3830
    %3895 = vst [vmem:[#allocation2 + $0x110] sm:$0xff] %v3831
    %3896 = vst [vmem:[#allocation2 + $0x118] sm:$0xff] %v3832
    %3897 = vst [vmem:[#allocation2 + $0x120] sm:$0xff] %v3833
    %3898 = vst [vmem:[#allocation2 + $0x128] sm:$0xff] %v3834
    %3899 = vst [vmem:[#allocation2 + $0x130] sm:$0xff] %v3835
    %3900 = vst [vmem:[#allocation2 + $0x138] sm:$0xff] %v3836
    %3901 = vst [vmem:[#allocation2 + $0x140] sm:$0xff] %v3837
    %3902 = vst [vmem:[#allocation2 + $0x148] sm:$0xff] %v3838
    %3903 = vst [vmem:[#allocation2 + $0x150] sm:$0xff] %v3839
    %3904 = vst [vmem:[#allocation2 + $0x158] sm:$0xff] %v3840
    %3905 = vst [vmem:[#allocation2 + $0x160] sm:$0xff] %v3841
    %3906 = vst [vmem:[#allocation2 + $0x168] sm:$0xff] %v3842
    %3907 = vst [vmem:[#allocation2 + $0x170] sm:$0xff] %v3843
    %3908 = vst [vmem:[#allocation2 + $0x178] sm:$0xff] %v3844
    %3909 = vst [vmem:[#allocation2 + $0x180] sm:$0xff] %v3845
    %3910 = vst [vmem:[#allocation2 + $0x188] sm:$0xff] %v3846
    %3911 = vst [vmem:[#allocation2 + $0x190] sm:$0xff] %v3847
    %3912 = vst [vmem:[#allocation2 + $0x198] sm:$0xff] %v3848
    %3913 = vst [vmem:[#allocation2 + $0x1a0] sm:$0xff] %v3849
    %3914 = vst [vmem:[#allocation2 + $0x1a8] sm:$0xff] %v3850
    %3915 = vst [vmem:[#allocation2 + $0x1b0] sm:$0xff] %v3851
    %3916 = vst [vmem:[#allocation2 + $0x1b8] sm:$0xff] %v3852
    %3917 = vst [vmem:[#allocation2 + $0x1c0] sm:$0xff] %v3853
    %3918 = vst [vmem:[#allocation2 + $0x1c8] sm:$0xff] %v3854
    %3919 = vst [vmem:[#allocation2 + $0x1d0] sm:$0xff] %v3855
    %3920 = vst [vmem:[#allocation2 + $0x1d8] sm:$0xff] %v3856
    %3921 = vst [vmem:[#allocation2 + $0x1e0] sm:$0xff] %v3857
    %3922 = vst [vmem:[#allocation2 + $0x1e8] sm:$0xff] %v3858
    %3923 = vst [vmem:[#allocation2 + $0x1f0] sm:$0xff] %v3859
    %3924 = vst [vmem:[#allocation2 + $0x1f8] sm:$0xff] %v3860
  $region46: #{graphcon_gcn_forward.1} parent=0 // loop_footer
    %s898 = sadd.s32 1, %s894
  $region47: #{graphcon_gcn_forward.1} parent=0 // loop_footer_branch
    %893 = sbr.rel target = $region43
  $region48: #{graphcon_gcn_forward.1} parent=0 // loop_exit
    _
  %v3925 = vld [vmem:[#allocation2] sm:$0xff]
  %v3926 = vld [vmem:[#allocation2 + $0x8] sm:$0xff]
  %v3927 = vld [vmem:[#allocation2 + $0x10] sm:$0xff]
  %v3928 = vld [vmem:[#allocation2 + $0x18] sm:$0xff]
  %v3929 = vld [vmem:[#allocation2 + $0x20] sm:$0xff]
  %v3930 = vld [vmem:[#allocation2 + $0x28] sm:$0xff]
  %v3931 = vld [vmem:[#allocation2 + $0x30] sm:$0xff]
  %v3932 = vld [vmem:[#allocation2 + $0x38] sm:$0xff]
  %v3933 = vld [vmem:[#allocation2 + $0x40] sm:$0xff]
  %v3934 = vld [vmem:[#allocation2 + $0x48] sm:$0xff]
  %v3935 = vld [vmem:[#allocation2 + $0x50] sm:$0xff]
  %v3936 = vld [vmem:[#allocation2 + $0x58] sm:$0xff]
  %v3937 = vld [vmem:[#allocation2 + $0x60] sm:$0xff]
  %v3938 = vld [vmem:[#allocation2 + $0x68] sm:$0xff]
  %v3939 = vld [vmem:[#allocation2 + $0x70] sm:$0xff]
  %v3940 = vld [vmem:[#allocation2 + $0x78] sm:$0xff]
  %v3941 = vld [vmem:[#allocation2 + $0x80] sm:$0xff]
  %v3942 = vld [vmem:[#allocation2 + $0x88] sm:$0xff]
  %v3943 = vld [vmem:[#allocation2 + $0x90] sm:$0xff]
  %v3944 = vld [vmem:[#allocation2 + $0x98] sm:$0xff]
  %v3945 = vld [vmem:[#allocation2 + $0xa0] sm:$0xff]
  %v3946 = vld [vmem:[#allocation2 + $0xa8] sm:$0xff]
  %v3947 = vld [vmem:[#allocation2 + $0xb0] sm:$0xff]
  %v3948 = vld [vmem:[#allocation2 + $0xb8] sm:$0xff]
  %v3949 = vld [vmem:[#allocation2 + $0xc0] sm:$0xff]
  %v3950 = vld [vmem:[#allocation2 + $0xc8] sm:$0xff]
  %v3951 = vld [vmem:[#allocation2 + $0xd0] sm:$0xff]
  %v3952 = vld [vmem:[#allocation2 + $0xd8] sm:$0xff]
  %v3953 = vld [vmem:[#allocation2 + $0xe0] sm:$0xff]
  %v3954 = vld [vmem:[#allocation2 + $0xe8] sm:$0xff]
  %v3955 = vld [vmem:[#allocation2 + $0xf0] sm:$0xff]
  %v3956 = vld [vmem:[#allocation2 + $0xf8] sm:$0xff]
  %v3957 = vld [vmem:[#allocation2 + $0x100] sm:$0xff]
  %v3958 = vld [vmem:[#allocation2 + $0x108] sm:$0xff]
  %v3959 = vld [vmem:[#allocation2 + $0x110] sm:$0xff]
  %v3960 = vld [vmem:[#allocation2 + $0x118] sm:$0xff]
  %v3961 = vld [vmem:[#allocation2 + $0x120] sm:$0xff]
  %v3962 = vld [vmem:[#allocation2 + $0x128] sm:$0xff]
  %v3963 = vld [vmem:[#allocation2 + $0x130] sm:$0xff]
  %v3964 = vld [vmem:[#allocation2 + $0x138] sm:$0xff]
  %v3965 = vld [vmem:[#allocation2 + $0x140] sm:$0xff]
  %v3966 = vld [vmem:[#allocation2 + $0x148] sm:$0xff]
  %v3967 = vld [vmem:[#allocation2 + $0x150] sm:$0xff]
  %v3968 = vld [vmem:[#allocation2 + $0x158] sm:$0xff]
  %v3969 = vld [vmem:[#allocation2 + $0x160] sm:$0xff]
  %v3970 = vld [vmem:[#allocation2 + $0x168] sm:$0xff]
  %v3971 = vld [vmem:[#allocation2 + $0x170] sm:$0xff]
  %v3972 = vld [vmem:[#allocation2 + $0x178] sm:$0xff]
  %v3973 = vld [vmem:[#allocation2 + $0x180] sm:$0xff]
  %v3974 = vld [vmem:[#allocation2 + $0x188] sm:$0xff]
  %v3975 = vld [vmem:[#allocation2 + $0x190] sm:$0xff]
  %v3976 = vld [vmem:[#allocation2 + $0x198] sm:$0xff]
  %v3977 = vld [vmem:[#allocation2 + $0x1a0] sm:$0xff]
  %v3978 = vld [vmem:[#allocation2 + $0x1a8] sm:$0xff]
  %v3979 = vld [vmem:[#allocation2 + $0x1b0] sm:$0xff]
  %v3980 = vld [vmem:[#allocation2 + $0x1b8] sm:$0xff]
  %v3981 = vld [vmem:[#allocation2 + $0x1c0] sm:$0xff]
  %v3982 = vld [vmem:[#allocation2 + $0x1c8] sm:$0xff]
  %v3983 = vld [vmem:[#allocation2 + $0x1d0] sm:$0xff]
  %v3984 = vld [vmem:[#allocation2 + $0x1d8] sm:$0xff]
  %v3985 = vld [vmem:[#allocation2 + $0x1e0] sm:$0xff]
  %v3986 = vld [vmem:[#allocation2 + $0x1e8] sm:$0xff]
  %v3987 = vld [vmem:[#allocation2 + $0x1f0] sm:$0xff]
  %v3988 = vld [vmem:[#allocation2 + $0x1f8] sm:$0xff]
  %v3989 = vld [vmem:[%s8] sm:$0xff]
  %v3990 = vld [vmem:[%s8 + $0x8] sm:$0xff]
  %v3991 = vld [vmem:[%s8 + $0x10] sm:$0xff]
  %v3992 = vld [vmem:[%s8 + $0x18] sm:$0xff]
  %v3993 = vld [vmem:[%s8 + $0x20] sm:$0xff]
  %v3994 = vld [vmem:[%s8 + $0x28] sm:$0xff]
  %v3995 = vld [vmem:[%s8 + $0x30] sm:$0xff]
  %v3996 = vld [vmem:[%s8 + $0x38] sm:$0xff]
  %v3997 = vld [vmem:[%s8 + $0x40] sm:$0xff]
  %v3998 = vld [vmem:[%s8 + $0x48] sm:$0xff]
  %v3999 = vld [vmem:[%s8 + $0x50] sm:$0xff]
  %v4000 = vld [vmem:[%s8 + $0x58] sm:$0xff]
  %v4001 = vld [vmem:[%s8 + $0x60] sm:$0xff]
  %v4002 = vld [vmem:[%s8 + $0x68] sm:$0xff]
  %v4003 = vld [vmem:[%s8 + $0x70] sm:$0xff]
  %v4004 = vld [vmem:[%s8 + $0x78] sm:$0xff]
  %v4005 = vld [vmem:[%s9] sm:$0x1]
  %v4007 = vlaneseq
  %v4008 = vshrl.u32 %v4007, 7
  %v4009 = vsub.s32 0, %v4008
  %v4010 = vrot.slane %v4005, %v4009
  %4012 = vmatprep.subr.mxu0 0.0
  %4013 = vmatpush1.msra.mxu0 %v3989
  %4014 = vmatprep.subr.mxu0 0.0
  %4015 = vmatpush1.msra.mxu0 %v3990
  %4016 = vmatprep.subr.mxu0 0.0
  %4017 = vmatpush1.msra.mxu0 %v3991
  %4018 = vmatprep.subr.mxu0 0.0
  %4019 = vmatpush1.msra.mxu0 %v3992
  %4020 = vmatprep.subr.mxu0 0.0
  %4021 = vmatpush1.msra.mxu0 %v3993
  %4022 = vmatprep.subr.mxu0 0.0
  %4023 = vmatpush1.msra.mxu0 %v3994
  %4024 = vmatprep.subr.mxu0 0.0
  %4025 = vmatpush1.msra.mxu0 %v3995
  %4026 = vmatprep.subr.mxu0 0.0
  %4027 = vmatpush1.msra.mxu0 %v3996
  %4028 = vmatprep.subr.mxu0 0.0
  %4029 = vmatpush1.msra.mxu0 %v3997
  %4030 = vmatprep.subr.mxu0 0.0
  %4031 = vmatpush1.msra.mxu0 %v3998
  %4032 = vmatprep.subr.mxu0 0.0
  %4033 = vmatpush1.msra.mxu0 %v3999
  %4034 = vmatprep.subr.mxu0 0.0
  %4035 = vmatpush1.msra.mxu0 %v4000
  %4036 = vmatprep.subr.mxu0 0.0
  %4037 = vmatpush1.msra.mxu0 %v4001
  %4038 = vmatprep.subr.mxu0 0.0
  %4039 = vmatpush1.msra.mxu0 %v4002
  %4040 = vmatprep.subr.mxu0 0.0
  %4041 = vmatpush1.msra.mxu0 %v4003
  %4042 = vmatprep.subr.mxu0 0.0
  %4043 = vmatpush1.msra.mxu0 %v4004
  %4044 = vmatprep.subr.mxu0 0.0
  %4045 = vmatpush1.msra.mxu0 0.0
  %4046 = vmatprep.subr.mxu0 0.0
  %4047 = vmatpush1.msra.mxu0 0.0
  %4048 = vmatprep.subr.mxu0 0.0
  %4049 = vmatpush1.msra.mxu0 0.0
  %4050 = vmatprep.subr.mxu0 0.0
  %4051 = vmatpush1.msra.mxu0 0.0
  %4052 = vmatprep.subr.mxu0 0.0
  %4053 = vmatpush1.msra.mxu0 0.0
  %4054 = vmatprep.subr.mxu0 0.0
  %4055 = vmatpush1.msra.mxu0 0.0
  %4056 = vmatprep.subr.mxu0 0.0
  %4057 = vmatpush1.msra.mxu0 0.0
  %4058 = vmatprep.subr.mxu0 0.0
  %4059 = vmatpush1.msra.mxu0 0.0
  %4060 = vmatprep.subr.mxu0 0.0
  %4061 = vmatpush1.msra.mxu0 0.0
  %4062 = vmatprep.subr.mxu0 0.0
  %4063 = vmatpush1.msra.mxu0 0.0
  %4064 = vmatprep.subr.mxu0 0.0
  %4065 = vmatpush1.msra.mxu0 0.0
  %4066 = vmatprep.subr.mxu0 0.0
  %4067 = vmatpush1.msra.mxu0 0.0
  %4068 = vmatprep.subr.mxu0 0.0
  %4069 = vmatpush1.msra.mxu0 0.0
  %4070 = vmatprep.subr.mxu0 0.0
  %4071 = vmatpush1.msra.mxu0 0.0
  %4072 = vmatprep.subr.mxu0 0.0
  %4073 = vmatpush1.msra.mxu0 0.0
  %4074 = vmatprep.subr.mxu0 0.0
  %4075 = vmatpush1.msra.mxu0 0.0
  %4076 = vmatprep.mubr.f32.mxu0 0.0
  %4077 = vmatmul.mubr.f32.gmra.mrb[0].mxu0 %v3925
  %v4078 = vpop.f32.mrb[0].mxu0
  %v4079 = vadd.f32 %v4010, %v4078
  %v4080 = vpop.f32.mrb[0].mxu0
  %4081 = vmatprep.mubr.f32.mxu0 0.0
  %4082 = vmatmul.mubr.f32.gmra.mrb[0].mxu0 %v3926
  %v4083 = vpop.f32.mrb[0].mxu0
  %v4084 = vadd.f32 %v4010, %v4083
  %v4085 = vpop.f32.mrb[0].mxu0
  %4086 = vmatprep.mubr.f32.mxu0 0.0
  %4087 = vmatmul.mubr.f32.gmra.mrb[0].mxu0 %v3927
  %v4088 = vpop.f32.mrb[0].mxu0
  %v4089 = vadd.f32 %v4010, %v4088
  %v4090 = vpop.f32.mrb[0].mxu0
  %4091 = vmatprep.mubr.f32.mxu0 0.0
  %4092 = vmatmul.mubr.f32.gmra.mrb[0].mxu0 %v3928
  %v4093 = vpop.f32.mrb[0].mxu0
  %v4094 = vadd.f32 %v4010, %v4093
  %v4095 = vpop.f32.mrb[0].mxu0
  %4096 = vmatprep.mubr.f32.mxu0 0.0
  %4097 = vmatmul.mubr.f32.gmra.mrb[0].mxu0 %v3929
  %v4098 = vpop.f32.mrb[0].mxu0
  %v4099 = vadd.f32 %v4010, %v4098
  %v4100 = vpop.f32.mrb[0].mxu0
  %4101 = vmatprep.mubr.f32.mxu0 0.0
  %4102 = vmatmul.mubr.f32.gmra.mrb[0].mxu0 %v3930
  %v4103 = vpop.f32.mrb[0].mxu0
  %v4104 = vadd.f32 %v4010, %v4103
  %v4105 = vpop.f32.mrb[0].mxu0
  %4106 = vmatprep.mubr.f32.mxu0 0.0
  %4107 = vmatmul.mubr.f32.gmra.mrb[0].mxu0 %v3931
  %v4108 = vpop.f32.mrb[0].mxu0
  %v4109 = vadd.f32 %v4010, %v4108
  %v4110 = vpop.f32.mrb[0].mxu0
  %4111 = vmatprep.mubr.f32.mxu0 0.0
  %4112 = vmatmul.mubr.f32.gmra.mrb[0].mxu0 %v3932
  %v4113 = vpop.f32.mrb[0].mxu0
  %v4114 = vadd.f32 %v4010, %v4113
  %v4115 = vpop.f32.mrb[0].mxu0
  %4116 = vmatprep.mubr.f32.mxu0 0.0
  %4117 = vmatmul.mubr.f32.gmra.mrb[0].mxu0 %v3933
  %v4118 = vpop.f32.mrb[0].mxu0
  %v4119 = vadd.f32 %v4010, %v4118
  %v4120 = vpop.f32.mrb[0].mxu0
  %4121 = vmatprep.mubr.f32.mxu0 0.0
  %4122 = vmatmul.mubr.f32.gmra.mrb[0].mxu0 %v3934
  %v4123 = vpop.f32.mrb[0].mxu0
  %v4124 = vadd.f32 %v4010, %v4123
  %v4125 = vpop.f32.mrb[0].mxu0
  %4126 = vmatprep.mubr.f32.mxu0 0.0
  %4127 = vmatmul.mubr.f32.gmra.mrb[0].mxu0 %v3935
  %v4128 = vpop.f32.mrb[0].mxu0
  %v4129 = vadd.f32 %v4010, %v4128
  %v4130 = vpop.f32.mrb[0].mxu0
  %4131 = vmatprep.mubr.f32.mxu0 0.0
  %4132 = vmatmul.mubr.f32.gmra.mrb[0].mxu0 %v3936
  %v4133 = vpop.f32.mrb[0].mxu0
  %v4134 = vadd.f32 %v4010, %v4133
  %v4135 = vpop.f32.mrb[0].mxu0
  %4136 = vmatprep.mubr.f32.mxu0 0.0
  %4137 = vmatmul.mubr.f32.gmra.mrb[0].mxu0 %v3937
  %v4138 = vpop.f32.mrb[0].mxu0
  %v4139 = vadd.f32 %v4010, %v4138
  %v4140 = vpop.f32.mrb[0].mxu0
  %4141 = vmatprep.mubr.f32.mxu0 0.0
  %4142 = vmatmul.mubr.f32.gmra.mrb[0].mxu0 %v3938
  %v4143 = vpop.f32.mrb[0].mxu0
  %v4144 = vadd.f32 %v4010, %v4143
  %v4145 = vpop.f32.mrb[0].mxu0
  %4146 = vmatprep.mubr.f32.mxu0 0.0
  %4147 = vmatmul.mubr.f32.gmra.mrb[0].mxu0 %v3939
  %v4148 = vpop.f32.mrb[0].mxu0
  %v4149 = vadd.f32 %v4010, %v4148
  %v4150 = vpop.f32.mrb[0].mxu0
  %4151 = vmatprep.mubr.f32.mxu0 0.0
  %4152 = vmatmul.mubr.f32.gmra.mrb[0].mxu0 %v3940
  %v4153 = vpop.f32.mrb[0].mxu0
  %v4154 = vadd.f32 %v4010, %v4153
  %v4155 = vpop.f32.mrb[0].mxu0
  %4156 = vmatprep.mubr.f32.mxu0 0.0
  %4157 = vmatmul.mubr.f32.gmra.mrb[0].mxu0 %v3941
  %v4158 = vpop.f32.mrb[0].mxu0
  %v4159 = vadd.f32 %v4010, %v4158
  %v4160 = vpop.f32.mrb[0].mxu0
  %4161 = vmatprep.mubr.f32.mxu0 0.0
  %4162 = vmatmul.mubr.f32.gmra.mrb[0].mxu0 %v3942
  %v4163 = vpop.f32.mrb[0].mxu0
  %v4164 = vadd.f32 %v4010, %v4163
  %v4165 = vpop.f32.mrb[0].mxu0
  %4166 = vmatprep.mubr.f32.mxu0 0.0
  %4167 = vmatmul.mubr.f32.gmra.mrb[0].mxu0 %v3943
  %v4168 = vpop.f32.mrb[0].mxu0
  %v4169 = vadd.f32 %v4010, %v4168
  %v4170 = vpop.f32.mrb[0].mxu0
  %4171 = vmatprep.mubr.f32.mxu0 0.0
  %4172 = vmatmul.mubr.f32.gmra.mrb[0].mxu0 %v3944
  %v4173 = vpop.f32.mrb[0].mxu0
  %v4174 = vadd.f32 %v4010, %v4173
  %v4175 = vpop.f32.mrb[0].mxu0
  %4176 = vmatprep.mubr.f32.mxu0 0.0
  %4177 = vmatmul.mubr.f32.gmra.mrb[0].mxu0 %v3945
  %v4178 = vpop.f32.mrb[0].mxu0
  %v4179 = vadd.f32 %v4010, %v4178
  %v4180 = vpop.f32.mrb[0].mxu0
  %4181 = vmatprep.mubr.f32.mxu0 0.0
  %4182 = vmatmul.mubr.f32.gmra.mrb[0].mxu0 %v3946
  %v4183 = vpop.f32.mrb[0].mxu0
  %v4184 = vadd.f32 %v4010, %v4183
  %v4185 = vpop.f32.mrb[0].mxu0
  %4186 = vmatprep.mubr.f32.mxu0 0.0
  %4187 = vmatmul.mubr.f32.gmra.mrb[0].mxu0 %v3947
  %v4188 = vpop.f32.mrb[0].mxu0
  %v4189 = vadd.f32 %v4010, %v4188
  %v4190 = vpop.f32.mrb[0].mxu0
  %4191 = vmatprep.mubr.f32.mxu0 0.0
  %4192 = vmatmul.mubr.f32.gmra.mrb[0].mxu0 %v3948
  %v4193 = vpop.f32.mrb[0].mxu0
  %v4194 = vadd.f32 %v4010, %v4193
  %v4195 = vpop.f32.mrb[0].mxu0
  %4196 = vmatprep.mubr.f32.mxu0 0.0
  %4197 = vmatmul.mubr.f32.gmra.mrb[0].mxu0 %v3949
  %v4198 = vpop.f32.mrb[0].mxu0
  %v4199 = vadd.f32 %v4010, %v4198
  %v4200 = vpop.f32.mrb[0].mxu0
  %4201 = vmatprep.mubr.f32.mxu0 0.0
  %4202 = vmatmul.mubr.f32.gmra.mrb[0].mxu0 %v3950
  %v4203 = vpop.f32.mrb[0].mxu0
  %v4204 = vadd.f32 %v4010, %v4203
  %v4205 = vpop.f32.mrb[0].mxu0
  %4206 = vmatprep.mubr.f32.mxu0 0.0
  %4207 = vmatmul.mubr.f32.gmra.mrb[0].mxu0 %v3951
  %v4208 = vpop.f32.mrb[0].mxu0
  %v4209 = vadd.f32 %v4010, %v4208
  %v4210 = vpop.f32.mrb[0].mxu0
  %4211 = vmatprep.mubr.f32.mxu0 0.0
  %4212 = vmatmul.mubr.f32.gmra.mrb[0].mxu0 %v3952
  %v4213 = vpop.f32.mrb[0].mxu0
  %v4214 = vadd.f32 %v4010, %v4213
  %v4215 = vpop.f32.mrb[0].mxu0
  %4216 = vmatprep.mubr.f32.mxu0 0.0
  %4217 = vmatmul.mubr.f32.gmra.mrb[0].mxu0 %v3953
  %v4218 = vpop.f32.mrb[0].mxu0
  %v4219 = vadd.f32 %v4010, %v4218
  %v4220 = vpop.f32.mrb[0].mxu0
  %4221 = vmatprep.mubr.f32.mxu0 0.0
  %4222 = vmatmul.mubr.f32.gmra.mrb[0].mxu0 %v3954
  %v4223 = vpop.f32.mrb[0].mxu0
  %v4224 = vadd.f32 %v4010, %v4223
  %v4225 = vpop.f32.mrb[0].mxu0
  %4226 = vmatprep.mubr.f32.mxu0 0.0
  %4227 = vmatmul.mubr.f32.gmra.mrb[0].mxu0 %v3955
  %v4228 = vpop.f32.mrb[0].mxu0
  %v4229 = vadd.f32 %v4010, %v4228
  %v4230 = vpop.f32.mrb[0].mxu0
  %4231 = vmatprep.mubr.f32.mxu0 0.0
  %4232 = vmatmul.mubr.f32.gmra.mrb[0].mxu0 %v3956
  %v4233 = vpop.f32.mrb[0].mxu0
  %v4234 = vadd.f32 %v4010, %v4233
  %v4235 = vpop.f32.mrb[0].mxu0
  %4236 = vmatprep.mubr.f32.mxu0 0.0
  %4237 = vmatmul.mubr.f32.gmra.mrb[0].mxu0 %v3957
  %v4238 = vpop.f32.mrb[0].mxu0
  %v4239 = vadd.f32 %v4010, %v4238
  %v4240 = vpop.f32.mrb[0].mxu0
  %4241 = vmatprep.mubr.f32.mxu0 0.0
  %4242 = vmatmul.mubr.f32.gmra.mrb[0].mxu0 %v3958
  %v4243 = vpop.f32.mrb[0].mxu0
  %v4244 = vadd.f32 %v4010, %v4243
  %v4245 = vpop.f32.mrb[0].mxu0
  %4246 = vmatprep.mubr.f32.mxu0 0.0
  %4247 = vmatmul.mubr.f32.gmra.mrb[0].mxu0 %v3959
  %v4248 = vpop.f32.mrb[0].mxu0
  %v4249 = vadd.f32 %v4010, %v4248
  %v4250 = vpop.f32.mrb[0].mxu0
  %4251 = vmatprep.mubr.f32.mxu0 0.0
  %4252 = vmatmul.mubr.f32.gmra.mrb[0].mxu0 %v3960
  %v4253 = vpop.f32.mrb[0].mxu0
  %v4254 = vadd.f32 %v4010, %v4253
  %v4255 = vpop.f32.mrb[0].mxu0
  %4256 = vmatprep.mubr.f32.mxu0 0.0
  %4257 = vmatmul.mubr.f32.gmra.mrb[0].mxu0 %v3961
  %v4258 = vpop.f32.mrb[0].mxu0
  %v4259 = vadd.f32 %v4010, %v4258
  %v4260 = vpop.f32.mrb[0].mxu0
  %4261 = vmatprep.mubr.f32.mxu0 0.0
  %4262 = vmatmul.mubr.f32.gmra.mrb[0].mxu0 %v3962
  %v4263 = vpop.f32.mrb[0].mxu0
  %v4264 = vadd.f32 %v4010, %v4263
  %v4265 = vpop.f32.mrb[0].mxu0
  %4266 = vmatprep.mubr.f32.mxu0 0.0
  %4267 = vmatmul.mubr.f32.gmra.mrb[0].mxu0 %v3963
  %v4268 = vpop.f32.mrb[0].mxu0
  %v4269 = vadd.f32 %v4010, %v4268
  %v4270 = vpop.f32.mrb[0].mxu0
  %4271 = vmatprep.mubr.f32.mxu0 0.0
  %4272 = vmatmul.mubr.f32.gmra.mrb[0].mxu0 %v3964
  %v4273 = vpop.f32.mrb[0].mxu0
  %v4274 = vadd.f32 %v4010, %v4273
  %v4275 = vpop.f32.mrb[0].mxu0
  %4276 = vmatprep.mubr.f32.mxu0 0.0
  %4277 = vmatmul.mubr.f32.gmra.mrb[0].mxu0 %v3965
  %v4278 = vpop.f32.mrb[0].mxu0
  %v4279 = vadd.f32 %v4010, %v4278
  %v4280 = vpop.f32.mrb[0].mxu0
  %4281 = vmatprep.mubr.f32.mxu0 0.0
  %4282 = vmatmul.mubr.f32.gmra.mrb[0].mxu0 %v3966
  %v4283 = vpop.f32.mrb[0].mxu0
  %v4284 = vadd.f32 %v4010, %v4283
  %v4285 = vpop.f32.mrb[0].mxu0
  %4286 = vmatprep.mubr.f32.mxu0 0.0
  %4287 = vmatmul.mubr.f32.gmra.mrb[0].mxu0 %v3967
  %v4288 = vpop.f32.mrb[0].mxu0
  %v4289 = vadd.f32 %v4010, %v4288
  %v4290 = vpop.f32.mrb[0].mxu0
  %4291 = vmatprep.mubr.f32.mxu0 0.0
  %4292 = vmatmul.mubr.f32.gmra.mrb[0].mxu0 %v3968
  %v4293 = vpop.f32.mrb[0].mxu0
  %v4294 = vadd.f32 %v4010, %v4293
  %v4295 = vpop.f32.mrb[0].mxu0
  %4296 = vmatprep.mubr.f32.mxu0 0.0
  %4297 = vmatmul.mubr.f32.gmra.mrb[0].mxu0 %v3969
  %v4298 = vpop.f32.mrb[0].mxu0
  %v4299 = vadd.f32 %v4010, %v4298
  %v4300 = vpop.f32.mrb[0].mxu0
  %4301 = vmatprep.mubr.f32.mxu0 0.0
  %4302 = vmatmul.mubr.f32.gmra.mrb[0].mxu0 %v3970
  %v4303 = vpop.f32.mrb[0].mxu0
  %v4304 = vadd.f32 %v4010, %v4303
  %v4305 = vpop.f32.mrb[0].mxu0
  %4306 = vmatprep.mubr.f32.mxu0 0.0
  %4307 = vmatmul.mubr.f32.gmra.mrb[0].mxu0 %v3971
  %v4308 = vpop.f32.mrb[0].mxu0
  %v4309 = vadd.f32 %v4010, %v4308
  %v4310 = vpop.f32.mrb[0].mxu0
  %4311 = vmatprep.mubr.f32.mxu0 0.0
  %4312 = vmatmul.mubr.f32.gmra.mrb[0].mxu0 %v3972
  %v4313 = vpop.f32.mrb[0].mxu0
  %v4314 = vadd.f32 %v4010, %v4313
  %v4315 = vpop.f32.mrb[0].mxu0
  %4316 = vmatprep.mubr.f32.mxu0 0.0
  %4317 = vmatmul.mubr.f32.gmra.mrb[0].mxu0 %v3973
  %v4318 = vpop.f32.mrb[0].mxu0
  %v4319 = vadd.f32 %v4010, %v4318
  %v4320 = vpop.f32.mrb[0].mxu0
  %4321 = vmatprep.mubr.f32.mxu0 0.0
  %4322 = vmatmul.mubr.f32.gmra.mrb[0].mxu0 %v3974
  %v4323 = vpop.f32.mrb[0].mxu0
  %v4324 = vadd.f32 %v4010, %v4323
  %v4325 = vpop.f32.mrb[0].mxu0
  %4326 = vmatprep.mubr.f32.mxu0 0.0
  %4327 = vmatmul.mubr.f32.gmra.mrb[0].mxu0 %v3975
  %v4328 = vpop.f32.mrb[0].mxu0
  %v4329 = vadd.f32 %v4010, %v4328
  %v4330 = vpop.f32.mrb[0].mxu0
  %4331 = vmatprep.mubr.f32.mxu0 0.0
  %4332 = vmatmul.mubr.f32.gmra.mrb[0].mxu0 %v3976
  %v4333 = vpop.f32.mrb[0].mxu0
  %v4334 = vadd.f32 %v4010, %v4333
  %v4335 = vpop.f32.mrb[0].mxu0
  %4336 = vmatprep.mubr.f32.mxu0 0.0
  %4337 = vmatmul.mubr.f32.gmra.mrb[0].mxu0 %v3977
  %v4338 = vpop.f32.mrb[0].mxu0
  %v4339 = vadd.f32 %v4010, %v4338
  %v4340 = vpop.f32.mrb[0].mxu0
  %4341 = vmatprep.mubr.f32.mxu0 0.0
  %4342 = vmatmul.mubr.f32.gmra.mrb[0].mxu0 %v3978
  %v4343 = vpop.f32.mrb[0].mxu0
  %v4344 = vadd.f32 %v4010, %v4343
  %v4345 = vpop.f32.mrb[0].mxu0
  %4346 = vmatprep.mubr.f32.mxu0 0.0
  %4347 = vmatmul.mubr.f32.gmra.mrb[0].mxu0 %v3979
  %v4348 = vpop.f32.mrb[0].mxu0
  %v4349 = vadd.f32 %v4010, %v4348
  %v4350 = vpop.f32.mrb[0].mxu0
  %4351 = vmatprep.mubr.f32.mxu0 0.0
  %4352 = vmatmul.mubr.f32.gmra.mrb[0].mxu0 %v3980
  %v4353 = vpop.f32.mrb[0].mxu0
  %v4354 = vadd.f32 %v4010, %v4353
  %v4355 = vpop.f32.mrb[0].mxu0
  %4356 = vmatprep.mubr.f32.mxu0 0.0
  %4357 = vmatmul.mubr.f32.gmra.mrb[0].mxu0 %v3981
  %v4358 = vpop.f32.mrb[0].mxu0
  %v4359 = vadd.f32 %v4010, %v4358
  %v4360 = vpop.f32.mrb[0].mxu0
  %4361 = vmatprep.mubr.f32.mxu0 0.0
  %4362 = vmatmul.mubr.f32.gmra.mrb[0].mxu0 %v3982
  %v4363 = vpop.f32.mrb[0].mxu0
  %v4364 = vadd.f32 %v4010, %v4363
  %v4365 = vpop.f32.mrb[0].mxu0
  %4366 = vmatprep.mubr.f32.mxu0 0.0
  %4367 = vmatmul.mubr.f32.gmra.mrb[0].mxu0 %v3983
  %v4368 = vpop.f32.mrb[0].mxu0
  %v4369 = vadd.f32 %v4010, %v4368
  %v4370 = vpop.f32.mrb[0].mxu0
  %4371 = vmatprep.mubr.f32.mxu0 0.0
  %4372 = vmatmul.mubr.f32.gmra.mrb[0].mxu0 %v3984
  %v4373 = vpop.f32.mrb[0].mxu0
  %v4374 = vadd.f32 %v4010, %v4373
  %v4375 = vpop.f32.mrb[0].mxu0
  %4376 = vmatprep.mubr.f32.mxu0 0.0
  %4377 = vmatmul.mubr.f32.gmra.mrb[0].mxu0 %v3985
  %v4378 = vpop.f32.mrb[0].mxu0
  %v4379 = vadd.f32 %v4010, %v4378
  %v4380 = vpop.f32.mrb[0].mxu0
  %4381 = vmatprep.mubr.f32.mxu0 0.0
  %4382 = vmatmul.mubr.f32.gmra.mrb[0].mxu0 %v3986
  %v4383 = vpop.f32.mrb[0].mxu0
  %v4384 = vadd.f32 %v4010, %v4383
  %v4385 = vpop.f32.mrb[0].mxu0
  %4386 = vmatprep.mubr.f32.mxu0 0.0
  %4387 = vmatmul.mubr.f32.gmra.mrb[0].mxu0 %v3987
  %v4388 = vpop.f32.mrb[0].mxu0
  %v4389 = vadd.f32 %v4010, %v4388
  %v4390 = vpop.f32.mrb[0].mxu0
  %4391 = vmatprep.mubr.f32.mxu0 0.0
  %4392 = vmatmul.mubr.f32.gmra.mrb[0].mxu0 %v3988
  %v4393 = vpop.f32.mrb[0].mxu0
  %v4394 = vadd.f32 %v4010, %v4393
  %v4395 = vpop.f32.mrb[0].mxu0
  %4396 = vdwg.mxu0
  %4397 = vst [vmem:[%s10] sm:$0xff] %v4079
  %4398 = vst [vmem:[%s10 + $0x8] sm:$0xff] %v4084
  %4399 = vst [vmem:[%s10 + $0x10] sm:$0xff] %v4089
  %4400 = vst [vmem:[%s10 + $0x18] sm:$0xff] %v4094
  %4401 = vst [vmem:[%s10 + $0x20] sm:$0xff] %v4099
  %4402 = vst [vmem:[%s10 + $0x28] sm:$0xff] %v4104
  %4403 = vst [vmem:[%s10 + $0x30] sm:$0xff] %v4109
  %4404 = vst [vmem:[%s10 + $0x38] sm:$0xff] %v4114
  %4405 = vst [vmem:[%s10 + $0x40] sm:$0xff] %v4119
  %4406 = vst [vmem:[%s10 + $0x48] sm:$0xff] %v4124
  %4407 = vst [vmem:[%s10 + $0x50] sm:$0xff] %v4129
  %4408 = vst [vmem:[%s10 + $0x58] sm:$0xff] %v4134
  %4409 = vst [vmem:[%s10 + $0x60] sm:$0xff] %v4139
  %4410 = vst [vmem:[%s10 + $0x68] sm:$0xff] %v4144
  %4411 = vst [vmem:[%s10 + $0x70] sm:$0xff] %v4149
  %4412 = vst [vmem:[%s10 + $0x78] sm:$0xff] %v4154
  %4413 = vst [vmem:[%s10 + $0x80] sm:$0xff] %v4159
  %4414 = vst [vmem:[%s10 + $0x88] sm:$0xff] %v4164
  %4415 = vst [vmem:[%s10 + $0x90] sm:$0xff] %v4169
  %4416 = vst [vmem:[%s10 + $0x98] sm:$0xff] %v4174
  %4417 = vst [vmem:[%s10 + $0xa0] sm:$0xff] %v4179
  %4418 = vst [vmem:[%s10 + $0xa8] sm:$0xff] %v4184
  %4419 = vst [vmem:[%s10 + $0xb0] sm:$0xff] %v4189
  %4420 = vst [vmem:[%s10 + $0xb8] sm:$0xff] %v4194
  %4421 = vst [vmem:[%s10 + $0xc0] sm:$0xff] %v4199
  %4422 = vst [vmem:[%s10 + $0xc8] sm:$0xff] %v4204
  %4423 = vst [vmem:[%s10 + $0xd0] sm:$0xff] %v4209
  %4424 = vst [vmem:[%s10 + $0xd8] sm:$0xff] %v4214
  %4425 = vst [vmem:[%s10 + $0xe0] sm:$0xff] %v4219
  %4426 = vst [vmem:[%s10 + $0xe8] sm:$0xff] %v4224
  %4427 = vst [vmem:[%s10 + $0xf0] sm:$0xff] %v4229
  %4428 = vst [vmem:[%s10 + $0xf8] sm:$0xff] %v4234
  %4429 = vst [vmem:[%s10 + $0x100] sm:$0xff] %v4239
  %4430 = vst [vmem:[%s10 + $0x108] sm:$0xff] %v4244
  %4431 = vst [vmem:[%s10 + $0x110] sm:$0xff] %v4249
  %4432 = vst [vmem:[%s10 + $0x118] sm:$0xff] %v4254
  %4433 = vst [vmem:[%s10 + $0x120] sm:$0xff] %v4259
  %4434 = vst [vmem:[%s10 + $0x128] sm:$0xff] %v4264
  %4435 = vst [vmem:[%s10 + $0x130] sm:$0xff] %v4269
  %4436 = vst [vmem:[%s10 + $0x138] sm:$0xff] %v4274
  %4437 = vst [vmem:[%s10 + $0x140] sm:$0xff] %v4279
  %4438 = vst [vmem:[%s10 + $0x148] sm:$0xff] %v4284
  %4439 = vst [vmem:[%s10 + $0x150] sm:$0xff] %v4289
  %4440 = vst [vmem:[%s10 + $0x158] sm:$0xff] %v4294
  %4441 = vst [vmem:[%s10 + $0x160] sm:$0xff] %v4299
  %4442 = vst [vmem:[%s10 + $0x168] sm:$0xff] %v4304
  %4443 = vst [vmem:[%s10 + $0x170] sm:$0xff] %v4309
  %4444 = vst [vmem:[%s10 + $0x178] sm:$0xff] %v4314
  %4445 = vst [vmem:[%s10 + $0x180] sm:$0xff] %v4319
  %4446 = vst [vmem:[%s10 + $0x188] sm:$0xff] %v4324
  %4447 = vst [vmem:[%s10 + $0x190] sm:$0xff] %v4329
  %4448 = vst [vmem:[%s10 + $0x198] sm:$0xff] %v4334
  %4449 = vst [vmem:[%s10 + $0x1a0] sm:$0xff] %v4339
  %4450 = vst [vmem:[%s10 + $0x1a8] sm:$0xff] %v4344
  %4451 = vst [vmem:[%s10 + $0x1b0] sm:$0xff] %v4349
  %4452 = vst [vmem:[%s10 + $0x1b8] sm:$0xff] %v4354
  %4453 = vst [vmem:[%s10 + $0x1c0] sm:$0xff] %v4359
  %4454 = vst [vmem:[%s10 + $0x1c8] sm:$0xff] %v4364
  %4455 = vst [vmem:[%s10 + $0x1d0] sm:$0xff] %v4369
  %4456 = vst [vmem:[%s10 + $0x1d8] sm:$0xff] %v4374
  %4457 = vst [vmem:[%s10 + $0x1e0] sm:$0xff] %v4379
  %4458 = vst [vmem:[%s10 + $0x1e8] sm:$0xff] %v4384
  %4459 = vst [vmem:[%s10 + $0x1f0] sm:$0xff] %v4389
  %4460 = vst [vmem:[%s10 + $0x1f8] sm:$0xff] %v4394
  // Predicated region
  $region49: #{graphcon_gcn_forward.1} parent=0 // pred_check
    _
  $region50: #{graphcon_gcn_forward.1} parent=0 // pred_check_branch
    %4462 = sbr.rel (0) target = $region52
  $region51: #{graphcon_gcn_forward.1} parent=0 // pred_region
    _
  $region52: #{graphcon_gcn_forward.1} parent=0 // pred_fallthru
    _
  // Predicated region
  $region53: #{graphcon_gcn_forward.1} parent=0 // pred_check
    _
  $region54: #{graphcon_gcn_forward.1} parent=0 // pred_check_branch
    %4464 = sbr.rel (0) target = $region56
  $region55: #{graphcon_gcn_forward.1} parent=0 // pred_region
    _
  $region56: #{graphcon_gcn_forward.1} parent=0 // pred_fallthru
    _

</llo_original>
